<compile_context>
chip_gen: v7x
topology: tpu7x:2x2x1
jax: 0.10.0
libtpu: 0.0.40
codegen_flags: <defaults>
</compile_context>

<pallas_src>
import functools

import jax
import jax.numpy as jnp
from jax.experimental import pallas as pl
from jax.experimental.pallas import tpu as pltpu

LRELU_SLOPE = 0.2
BN_EPS = 1e-5
LANE = 128


# ----------------------------- Pallas kernels --------------------------------
def _conv_lrelu_kernel(x_ref, w_ref, b_ref, o_ref):
    # x: (tm, K) bf16 im2col patches, w: (K, N) bf16 (VMEM-resident across the
    # grid: constant block index), b: (1, N) f32.  MXU matmul, f32 accumulate,
    # fused bias + LeakyReLU(0.2).
    acc = jnp.dot(x_ref[...], w_ref[...], preferred_element_type=jnp.float32)
    acc = acc + b_ref[...]
    o_ref[...] = jnp.where(acc >= 0, acc, LRELU_SLOPE * acc).astype(o_ref.dtype)


def _conv_stats_kernel(x_ref, w_ref, b_ref, y_ref, s_ref, ss_ref):
    # BN pass 1: y = x @ w + b; per-channel sum / sum-of-squares accumulated
    # directly into the (1, N) output blocks, which stay VMEM-resident across
    # the "arbitrary" M grid axis (same block index every step), so they are
    # written back to HBM only once at the end.
    i = pl.program_id(0)
    acc = jnp.dot(x_ref[...], w_ref[...], preferred_element_type=jnp.float32)
    acc = acc + b_ref[...]
    y_ref[...] = acc

    @pl.when(i == 0)
    def _init():
        s_ref[...] = jnp.zeros_like(s_ref)
        ss_ref[...] = jnp.zeros_like(ss_ref)

    s_ref[...] += jnp.sum(acc, axis=0, keepdims=True)
    ss_ref[...] += jnp.sum(acc * acc, axis=0, keepdims=True)


def _bn_lrelu_kernel(y_ref, s_ref, ss_ref, o_ref, *, inv_count):
    # BN pass 2: training-mode BatchNorm2d with batch statistics (biased
    # variance, default affine gamma=1 / beta=0), then LeakyReLU(0.2).
    # rsqrt goes to the EUP slot (free next to the VPU work).
    y = y_ref[...]
    mean = s_ref[...] * inv_count
    var = jnp.maximum(ss_ref[...] * inv_count - mean * mean, 0.0)
    yc = (y - mean) * jax.lax.rsqrt(var + BN_EPS)
    o_ref[...] = jnp.where(yc >= 0, yc, LRELU_SLOPE * yc).astype(o_ref.dtype)


# ----------------------------- pallas_call wrappers ---------------------------
def _pick_tile_m(M, target):
    """Largest tile <= target that divides M and is a multiple of 8, else M."""
    if M <= target:
        return M
    t = (target // 8) * 8
    while t >= 8:
        if M % t == 0:
            return t
        t -= 8
    return M


def _mm_cost(M, K, N):
    return pl.CostEstimate(
        flops=2 * M * K * N,
        transcendentals=0,
        bytes_accessed=M * K * 2 + K * N * 2 + N * 4 + M * N * 4,
    )


def conv_matmul_lrelu(x, w, b, tile_m):
    """Fused (patches @ W + b) -> LeakyReLU, M-tiled, 'parallel' grid."""
    M, K = x.shape
    N = w.shape[1]
    tm = _pick_tile_m(M, tile_m)
    return pl.pallas_call(
        _conv_lrelu_kernel,
        out_shape=jax.ShapeDtypeStruct((M, N), jnp.float32),
        grid=(M // tm,),
        in_specs=[
            pl.BlockSpec((tm, K), lambda i: (i, 0)),
            pl.BlockSpec((K, N), lambda i: (0, 0)),
            pl.BlockSpec((1, N), lambda i: (0, 0)),
        ],
        out_specs=pl.BlockSpec((tm, N), lambda i: (i, 0)),
        compiler_params=pltpu.CompilerParams(
            dimension_semantics=("parallel",)),
        cost_estimate=_mm_cost(M, K, N),
    )(x, w, b)


def conv_matmul_stats(x, w, b, tile_m):
    """BN pass 1: y = patches @ W + b plus per-channel sum / sum-of-squares."""
    M, K = x.shape
    N = w.shape[1]
    tm = _pick_tile_m(M, tile_m)
    return pl.pallas_call(
        _conv_stats_kernel,
        out_shape=(
            jax.ShapeDtypeStruct((M, N), jnp.float32),
            jax.ShapeDtypeStruct((1, N), jnp.float32),
            jax.ShapeDtypeStruct((1, N), jnp.float32),
        ),
        grid=(M // tm,),
        in_specs=[
            pl.BlockSpec((tm, K), lambda i: (i, 0)),
            pl.BlockSpec((K, N), lambda i: (0, 0)),
            pl.BlockSpec((1, N), lambda i: (0, 0)),
        ],
        out_specs=(
            pl.BlockSpec((tm, N), lambda i: (i, 0)),
            pl.BlockSpec((1, N), lambda i: (0, 0)),
            pl.BlockSpec((1, N), lambda i: (0, 0)),
        ),
        compiler_params=pltpu.CompilerParams(
            dimension_semantics=("arbitrary",)),
        cost_estimate=_mm_cost(M, K, N),
    )(x, w, b)


def bn_lrelu(y, s, ss, count, tile_m):
    """BN pass 2: normalize with batch stats, then LeakyReLU, M-tiled."""
    M, N = y.shape
    tm = _pick_tile_m(M, tile_m)
    kern = functools.partial(_bn_lrelu_kernel, inv_count=1.0 / float(count))
    return pl.pallas_call(
        kern,
        out_shape=jax.ShapeDtypeStruct((M, N), jnp.float32),
        grid=(M // tm,),
        in_specs=[
            pl.BlockSpec((tm, N), lambda i: (i, 0)),
            pl.BlockSpec((1, N), lambda i: (0, 0)),
            pl.BlockSpec((1, N), lambda i: (0, 0)),
        ],
        out_specs=pl.BlockSpec((tm, N), lambda i: (i, 0)),
        compiler_params=pltpu.CompilerParams(
            dimension_semantics=("parallel",)),
        cost_estimate=pl.CostEstimate(
            flops=7 * M * N, transcendentals=N,
            bytes_accessed=2 * M * N * 4 + 2 * N * 4),
    )(y, s, ss)


# ----------------------------- JAX glue ---------------------------------------
def im2col(x_nhwc, k, stride, pad):
    """Extract (k x k) patches -> (B*Ho*Wo, k*k*C), ordering (dh, dw, cin)."""
    B, H, W, C = x_nhwc.shape
    xp = jnp.pad(x_nhwc, ((0, 0), (pad, pad), (pad, pad), (0, 0)))
    Ho = (H + 2 * pad - k) // stride + 1
    Wo = (W + 2 * pad - k) // stride + 1
    taps = []
    for dh in range(k):
        for dw in range(k):
            taps.append(
                xp[:, dh:dh + stride * Ho:stride, dw:dw + stride * Wo:stride, :]
            )  # (B, Ho, Wo, C)
    col = jnp.stack(taps, axis=3)                 # (B, Ho, Wo, k*k, C)
    return col.reshape(B * Ho * Wo, k * k * C), Ho, Wo


def conv_weight_to_matrix(w_oihw):
    """PyTorch (Cout, Cin, kH, kW) -> (kH*kW*Cin, Cout) matching im2col order."""
    Cout, Cin, kH, kW = w_oihw.shape
    return jnp.transpose(w_oihw, (2, 3, 1, 0)).reshape(kH * kW * Cin, Cout)


def _pad_contraction(patches, wmat, mult=LANE):
    """Zero-pad the shared contraction dim K to a lane-aligned multiple of 128."""
    K = patches.shape[1]
    Kp = ((K + mult - 1) // mult) * mult
    if Kp != K:
        patches = jnp.pad(patches, ((0, 0), (0, Kp - K)))
        wmat = jnp.pad(wmat, ((0, Kp - K), (0, 0)))
    return patches, wmat


def conv_block(x_nhwc, w_oihw, b, stride, pad, mode, tile_m=256):
    B = x_nhwc.shape[0]
    Cout = w_oihw.shape[0]
    k = w_oihw.shape[2]
    patches, Ho, Wo = im2col(x_nhwc, k, stride, pad)
    wmat = conv_weight_to_matrix(w_oihw)
    patches, wmat = _pad_contraction(patches, wmat)
    # bf16 matmul operands (f32 accumulation in-kernel): full MXU rate and
    # half the HBM->VMEM DMA bytes for the patch matrix.
    xb = patches.astype(jnp.bfloat16)
    wb = wmat.astype(jnp.bfloat16)
    bb = b.reshape(1, Cout).astype(jnp.float32)
    M = patches.shape[0]
    if mode == "bn_lrelu":
        y, s, ss = conv_matmul_stats(xb, wb, bb, tile_m)
        out = bn_lrelu(y, s, ss, M, tile_m)
    else:
        out = conv_matmul_lrelu(xb, wb, bb, tile_m)
    return out.reshape(B, Ho, Wo, Cout)


def head_pixel00_sigmoid(x_nhwc, w_oihw, b):
    """Final Conv2d(256,1,5,pad=2,stride=1) evaluated only at spatial (0,0).

    The reference does View(-1, 4*4*1) then [:, 0]: only the sigmoid of the
    final conv's pixel (0,0) survives, so the full 16-position, N=1 GEMM is
    skipped and replaced by a per-image dot product + sigmoid (tiny; plain JAX).
    """
    B, H, W, C = x_nhwc.shape
    k = w_oihw.shape[2]
    pad = 2
    patch = jnp.zeros((B, k, k, C), jnp.float32)
    patch = patch.at[:, pad:, pad:, :].set(x_nhwc[:, :k - pad, :k - pad, :])
    wmat = conv_weight_to_matrix(w_oihw)          # (k*k*C, 1)
    logit = patch.reshape(B, -1) @ wmat[:, 0] + b[0]
    return jax.nn.sigmoid(logit)


# ----------------------------- Model D ----------------------------------------
def init_params(key):
    """Deterministic synthetic weights, PyTorch Conv2d shapes (Cout,Cin,kH,kW)."""
    shapes = [
        ((64, 3, 5, 5), (64,)),
        ((128, 64, 5, 5), (128,)),
        ((256, 128, 5, 5), (256,)),
        ((1, 256, 5, 5), (1,)),
    ]
    params = []
    for i, (ws, bs) in enumerate(shapes):
        kw, kb = jax.random.split(jax.random.fold_in(key, i))
        fan_in = ws[1] * ws[2] * ws[3]
        w = jax.random.normal(kw, ws, jnp.float32) * (1.0 / jnp.sqrt(fan_in))
        b = jax.random.normal(kb, bs, jnp.float32) * 0.01
        params.append((w, b))
    return params


def d_forward(params, x_nchw):
    """Forward pass of D. Input NCHW (B,3,32,32); output (B,)."""
    x = jnp.transpose(x_nchw, (0, 2, 3, 1)).astype(jnp.float32)   # -> NHWC
    (w1, b1), (w2, b2), (w3, b3), (w4, b4) = params

    x = conv_block(x, w1, b1, stride=2, pad=2, mode="lrelu")      # (B,16,16, 64)
    x = conv_block(x, w2, b2, stride=2, pad=2, mode="bn_lrelu")   # (B, 8, 8,128)
    x = conv_block(x, w3, b3, stride=2, pad=2, mode="bn_lrelu")   # (B, 4, 4,256)
    return head_pixel00_sigmoid(x, w4, b4)                        # (B,)


if __name__ == "__main__":
    key = jax.random.PRNGKey(0)
    kp, kx = jax.random.split(key)
    params = init_params(kp)
    # 32x32 input is required by the architecture (3 stride-2 convs -> 4x4).
    x = jax.random.normal(kx, (2, 3, 32, 32), jnp.float32)

    out = jax.jit(d_forward)(params, x)
    out = jax.block_until_ready(out)
    assert out.shape == (2,), out.shape
    assert bool(jnp.all(jnp.isfinite(out)))
    print("KERNEL_OK")
</pallas_src>

<mosaic_0001>
module attributes {stable_mosaic.version = 11 : i64} {
  func.func @_conv_lrelu_kernel(%arg0: i32, %arg1: memref<256x128xbf16, #tpu.memory_space<vmem>>, %arg2: memref<128x64xbf16, #tpu.memory_space<vmem>>, %arg3: memref<1x64xf32, #tpu.memory_space<vmem>>, %arg4: memref<256x64xf32, #tpu.memory_space<vmem>>) attributes {dimension_semantics = [#tpu.dimension_semantics<parallel>], iteration_bounds = array<i64: 2>, scalar_prefetch = 0 : i64, scratch_operands = 0 : i64, tpu.core_type = #tpu.core_type<tc>, window_params = [{transform_indices = @transform_0, window_bounds = array<i64: 256, 128>}, {pipeline_mode = #tpu.pipeline_mode<synchronous>, transform_indices = @transform_1, window_bounds = array<i64: 128, 64>}, {pipeline_mode = #tpu.pipeline_mode<synchronous>, transform_indices = @transform_2, window_bounds = array<i64: 1, 64>}, {transform_indices = @transform_3, window_bounds = array<i64: 256, 64>}]} {
    %c0 = arith.constant 0 : index
    %c0_0 = arith.constant 0 : index
    %0 = vector.load %arg1[%c0, %c0_0] : memref<256x128xbf16, #tpu.memory_space<vmem>>, vector<256x128xbf16>
    %c0_1 = arith.constant 0 : index
    %c0_2 = arith.constant 0 : index
    %1 = vector.load %arg2[%c0_1, %c0_2] : memref<128x64xbf16, #tpu.memory_space<vmem>>, vector<128x64xbf16>
    %cst = arith.constant dense<0.000000e+00> : vector<256x64xf32>
    %2 = tpu.matmul %0, %1, %cst {dimension_numbers = #tpu.dot_dimension_numbers<[1], [0], [0], [1], [0, 0, 1, 1], [], []>} : vector<256x128xbf16>, vector<128x64xbf16>, vector<256x64xf32> -> vector<256x64xf32>
    %c0_3 = arith.constant 0 : index
    %c0_4 = arith.constant 0 : index
    %3 = vector.load %arg3[%c0_3, %c0_4] : memref<1x64xf32, #tpu.memory_space<vmem>>, vector<1x64xf32>
    %4 = vector.broadcast %3 : vector<1x64xf32> to vector<256x64xf32>
    %5 = arith.addf %2, %4 : vector<256x64xf32>
    %cst_5 = arith.constant 0.000000e+00 : f32
    %6 = vector.broadcast %cst_5 : f32 to vector<256x64xf32>
    %7 = arith.cmpf oge, %5, %6 : vector<256x64xf32>
    %cst_6 = arith.constant 2.000000e-01 : f32
    %8 = vector.broadcast %cst_6 : f32 to vector<256x64xf32>
    %9 = arith.mulf %8, %5 : vector<256x64xf32>
    %10 = arith.select %7, %5, %9 : vector<256x64xi1>, vector<256x64xf32>
    %c0_7 = arith.constant 0 : index
    %c0_8 = arith.constant 0 : index
    %11 = vector.load %arg4[%c0_7, %c0_8] : memref<256x64xf32, #tpu.memory_space<vmem>>, vector<256x64xf32>
    tpu.vector_store %arg4[%c0_7, %c0_8], %10 {strides = array<i32>} : memref<256x64xf32, #tpu.memory_space<vmem>>, vector<256x64xf32>,
    return
  }
  func.func @transform_0(%arg0: i32) -> (i32, i32) {
    %c0_i32 = arith.constant 0 : i32
    %c0_i32_0 = arith.constant 0 : i32
    return %arg0, %c0_i32 : i32, i32
  }
  func.func @transform_1(%arg0: i32) -> (i32, i32) {
    %c0_i32 = arith.constant 0 : i32
    %c0_i32_0 = arith.constant 0 : i32
    %c0_i32_1 = arith.constant 0 : i32
    return %c0_i32, %c0_i32_0 : i32, i32
  }
  func.func @transform_2(%arg0: i32) -> (i32, i32) {
    %c0_i32 = arith.constant 0 : i32
    %c0_i32_0 = arith.constant 0 : i32
    %c0_i32_1 = arith.constant 0 : i32
    return %c0_i32, %c0_i32_0 : i32, i32
  }
  func.func @transform_3(%arg0: i32) -> (i32, i32) {
    %c0_i32 = arith.constant 0 : i32
    %c0_i32_0 = arith.constant 0 : i32
    return %arg0, %c0_i32 : i32, i32
  }
}

module attributes {stable_mosaic.version = 11 : i64} {
  func.func @_conv_stats_kernel(%arg0: i32, %arg1: memref<128x1664xbf16, #tpu.memory_space<vmem>>, %arg2: memref<1664x128xbf16, #tpu.memory_space<vmem>>, %arg3: memref<1x128xf32, #tpu.memory_space<vmem>>, %arg4: memref<128x128xf32, #tpu.memory_space<vmem>>, %arg5: memref<1x128xf32, #tpu.memory_space<vmem>>, %arg6: memref<1x128xf32, #tpu.memory_space<vmem>>) attributes {dimension_semantics = [#tpu.dimension_semantics<arbitrary>], iteration_bounds = array<i64: 1>, scalar_prefetch = 0 : i64, scratch_operands = 0 : i64, tpu.core_type = #tpu.core_type<tc>, window_params = [{transform_indices = @transform_0, window_bounds = array<i64: 128, 1664>}, {pipeline_mode = #tpu.pipeline_mode<synchronous>, transform_indices = @transform_1, window_bounds = array<i64: 1664, 128>}, {pipeline_mode = #tpu.pipeline_mode<synchronous>, transform_indices = @transform_2, window_bounds = array<i64: 1, 128>}, {transform_indices = @transform_3, window_bounds = array<i64: 128, 128>}, {pipeline_mode = #tpu.pipeline_mode<synchronous>, transform_indices = @transform_4, window_bounds = array<i64: 1, 128>}, {pipeline_mode = #tpu.pipeline_mode<synchronous>, transform_indices = @transform_5, window_bounds = array<i64: 1, 128>}]} {
    %c0 = arith.constant 0 : index
    %c0_0 = arith.constant 0 : index
    %0 = vector.load %arg1[%c0, %c0_0] : memref<128x1664xbf16, #tpu.memory_space<vmem>>, vector<128x1664xbf16>
    %c0_1 = arith.constant 0 : index
    %c0_2 = arith.constant 0 : index
    %1 = vector.load %arg2[%c0_1, %c0_2] : memref<1664x128xbf16, #tpu.memory_space<vmem>>, vector<1664x128xbf16>
    %cst = arith.constant dense<0.000000e+00> : vector<128x128xf32>
    %2 = tpu.matmul %0, %1, %cst {dimension_numbers = #tpu.dot_dimension_numbers<[1], [0], [0], [1], [0, 0, 1, 1], [], []>} : vector<128x1664xbf16>, vector<1664x128xbf16>, vector<128x128xf32> -> vector<128x128xf32>
    %c0_3 = arith.constant 0 : index
    %c0_4 = arith.constant 0 : index
    %3 = vector.load %arg3[%c0_3, %c0_4] : memref<1x128xf32, #tpu.memory_space<vmem>>, vector<1x128xf32>
    %4 = vector.broadcast %3 : vector<1x128xf32> to vector<128x128xf32>
    %5 = arith.addf %2, %4 : vector<128x128xf32>
    %c0_5 = arith.constant 0 : index
    %c0_6 = arith.constant 0 : index
    %6 = vector.load %arg4[%c0_5, %c0_6] : memref<128x128xf32, #tpu.memory_space<vmem>>, vector<128x128xf32>
    tpu.vector_store %arg4[%c0_5, %c0_6], %5 {strides = array<i32>} : memref<128x128xf32, #tpu.memory_space<vmem>>, vector<128x128xf32>,
    %c0_i32 = arith.constant 0 : i32
    %7 = arith.cmpi eq, %arg0, %c0_i32 : i32
    %8 = arith.extui %7 : i1 to i32
    %c0_i32_7 = arith.constant 0 : i32
    %9 = arith.cmpi ne, %8, %c0_i32_7 : i32
    scf.if %9 {
      %cst_18 = arith.constant 0.000000e+00 : f32
      %21 = vector.broadcast %cst_18 : f32 to vector<1x128xf32>
      %c0_19 = arith.constant 0 : index
      %c0_20 = arith.constant 0 : index
      %22 = vector.load %arg5[%c0_19, %c0_20] : memref<1x128xf32, #tpu.memory_space<vmem>>, vector<1x128xf32>
      tpu.vector_store %arg5[%c0_19, %c0_20], %21 {strides = array<i32>} : memref<1x128xf32, #tpu.memory_space<vmem>>, vector<1x128xf32>,
      %cst_21 = arith.constant 0.000000e+00 : f32
      %23 = vector.broadcast %cst_21 : f32 to vector<1x128xf32>
      %c0_22 = arith.constant 0 : index
      %c0_23 = arith.constant 0 : index
      %24 = vector.load %arg6[%c0_22, %c0_23] : memref<1x128xf32, #tpu.memory_space<vmem>>, vector<1x128xf32>
      tpu.vector_store %arg6[%c0_22, %c0_23], %23 {strides = array<i32>} : memref<1x128xf32, #tpu.memory_space<vmem>>, vector<1x128xf32>,
    } else {
    }
    %c0_8 = arith.constant 0 : index
    %c0_9 = arith.constant 0 : index
    %10 = vector.load %arg5[%c0_8, %c0_9] : memref<1x128xf32, #tpu.memory_space<vmem>>, vector<1x128xf32>
    %cst_10 = arith.constant dense<0.000000e+00> : vector<128xf32>
    %11 = vector.multi_reduction <add>, %5, %cst_10 [0] : vector<128x128xf32> to vector<128xf32>
    %12 = vector.shape_cast %11 : vector<128xf32> to vector<1x128xf32>
    %13 = arith.addf %10, %12 : vector<1x128xf32>
    %c0_11 = arith.constant 0 : index
    %c0_12 = arith.constant 0 : index
    %14 = vector.load %arg5[%c0_11, %c0_12] : memref<1x128xf32, #tpu.memory_space<vmem>>, vector<1x128xf32>
    tpu.vector_store %arg5[%c0_11, %c0_12], %13 {strides = array<i32>} : memref<1x128xf32, #tpu.memory_space<vmem>>, vector<1x128xf32>,
    %c0_13 = arith.constant 0 : index
    %c0_14 = arith.constant 0 : index
    %15 = vector.load %arg6[%c0_13, %c0_14] : memref<1x128xf32, #tpu.memory_space<vmem>>, vector<1x128xf32>
    %16 = arith.mulf %5, %5 : vector<128x128xf32>
    %cst_15 = arith.constant dense<0.000000e+00> : vector<128xf32>
    %17 = vector.multi_reduction <add>, %16, %cst_15 [0] : vector<128x128xf32> to vector<128xf32>
    %18 = vector.shape_cast %17 : vector<128xf32> to vector<1x128xf32>
    %19 = arith.addf %15, %18 : vector<1x128xf32>
    %c0_16 = arith.constant 0 : index
    %c0_17 = arith.constant 0 : index
    %20 = vector.load %arg6[%c0_16, %c0_17] : memref<1x128xf32, #tpu.memory_space<vmem>>, vector<1x128xf32>
    tpu.vector_store %arg6[%c0_16, %c0_17], %19 {strides = array<i32>} : memref<1x128xf32, #tpu.memory_space<vmem>>, vector<1x128xf32>,
    return
  }
  func.func @transform_0(%arg0: i32) -> (i32, i32) {
    %c0_i32 = arith.constant 0 : i32
    %c0_i32_0 = arith.constant 0 : i32
    return %arg0, %c0_i32 : i32, i32
  }
  func.func @transform_1(%arg0: i32) -> (i32, i32) {
    %c0_i32 = arith.constant 0 : i32
    %c0_i32_0 = arith.constant 0 : i32
    %c0_i32_1 = arith.constant 0 : i32
    return %c0_i32, %c0_i32_0 : i32, i32
  }
  func.func @transform_2(%arg0: i32) -> (i32, i32) {
    %c0_i32 = arith.constant 0 : i32
    %c0_i32_0 = arith.constant 0 : i32
    %c0_i32_1 = arith.constant 0 : i32
    return %c0_i32, %c0_i32_0 : i32, i32
  }
  func.func @transform_3(%arg0: i32) -> (i32, i32) {
    %c0_i32 = arith.constant 0 : i32
    %c0_i32_0 = arith.constant 0 : i32
    return %arg0, %c0_i32 : i32, i32
  }
  func.func @transform_4(%arg0: i32) -> (i32, i32) {
    %c0_i32 = arith.constant 0 : i32
    %c0_i32_0 = arith.constant 0 : i32
    %c0_i32_1 = arith.constant 0 : i32
    return %c0_i32, %c0_i32_0 : i32, i32
  }
  func.func @transform_5(%arg0: i32) -> (i32, i32) {
    %c0_i32 = arith.constant 0 : i32
    %c0_i32_0 = arith.constant 0 : i32
    %c0_i32_1 = arith.constant 0 : i32
    return %c0_i32, %c0_i32_0 : i32, i32
  }
}

module attributes {stable_mosaic.version = 11 : i64} {
  func.func @_bn_lrelu_kernel(%arg0: i32, %arg1: memref<128x128xf32, #tpu.memory_space<vmem>>, %arg2: memref<1x128xf32, #tpu.memory_space<vmem>>, %arg3: memref<1x128xf32, #tpu.memory_space<vmem>>, %arg4: memref<128x128xf32, #tpu.memory_space<vmem>>) attributes {dimension_semantics = [#tpu.dimension_semantics<parallel>], iteration_bounds = array<i64: 1>, scalar_prefetch = 0 : i64, scratch_operands = 0 : i64, tpu.core_type = #tpu.core_type<tc>, window_params = [{transform_indices = @transform_0, window_bounds = array<i64: 128, 128>}, {pipeline_mode = #tpu.pipeline_mode<synchronous>, transform_indices = @transform_1, window_bounds = array<i64: 1, 128>}, {pipeline_mode = #tpu.pipeline_mode<synchronous>, transform_indices = @transform_2, window_bounds = array<i64: 1, 128>}, {transform_indices = @transform_3, window_bounds = array<i64: 128, 128>}]} {
    %c0 = arith.constant 0 : index
    %c0_0 = arith.constant 0 : index
    %0 = vector.load %arg1[%c0, %c0_0] : memref<128x128xf32, #tpu.memory_space<vmem>>, vector<128x128xf32>
    %c0_1 = arith.constant 0 : index
    %c0_2 = arith.constant 0 : index
    %1 = vector.load %arg2[%c0_1, %c0_2] : memref<1x128xf32, #tpu.memory_space<vmem>>, vector<1x128xf32>
    %cst = arith.constant 7.812500e-03 : f32
    %2 = vector.broadcast %cst : f32 to vector<1x128xf32>
    %3 = arith.mulf %1, %2 : vector<1x128xf32>
    %c0_3 = arith.constant 0 : index
    %c0_4 = arith.constant 0 : index
    %4 = vector.load %arg3[%c0_3, %c0_4] : memref<1x128xf32, #tpu.memory_space<vmem>>, vector<1x128xf32>
    %cst_5 = arith.constant 7.812500e-03 : f32
    %5 = vector.broadcast %cst_5 : f32 to vector<1x128xf32>
    %6 = arith.mulf %4, %5 : vector<1x128xf32>
    %7 = arith.mulf %3, %3 : vector<1x128xf32>
    %8 = arith.subf %6, %7 : vector<1x128xf32>
    %cst_6 = arith.constant 0.000000e+00 : f32
    %9 = vector.broadcast %cst_6 : f32 to vector<1x128xf32>
    %10 = arith.maximumf %8, %9 : vector<1x128xf32>
    %11 = vector.broadcast %3 : vector<1x128xf32> to vector<128x128xf32>
    %12 = arith.subf %0, %11 : vector<128x128xf32>
    %cst_7 = arith.constant 9.99999974E-6 : f32
    %13 = vector.broadcast %cst_7 : f32 to vector<1x128xf32>
    %14 = arith.addf %10, %13 : vector<1x128xf32>
    %15 = math.rsqrt %14 : vector<1x128xf32>
    %16 = vector.broadcast %15 : vector<1x128xf32> to vector<128x128xf32>
    %17 = arith.mulf %12, %16 : vector<128x128xf32>
    %cst_8 = arith.constant 0.000000e+00 : f32
    %18 = vector.broadcast %cst_8 : f32 to vector<128x128xf32>
    %19 = arith.cmpf oge, %17, %18 : vector<128x128xf32>
    %cst_9 = arith.constant 2.000000e-01 : f32
    %20 = vector.broadcast %cst_9 : f32 to vector<128x128xf32>
    %21 = arith.mulf %20, %17 : vector<128x128xf32>
    %22 = arith.select %19, %17, %21 : vector<128x128xi1>, vector<128x128xf32>
    %c0_10 = arith.constant 0 : index
    %c0_11 = arith.constant 0 : index
    %23 = vector.load %arg4[%c0_10, %c0_11] : memref<128x128xf32, #tpu.memory_space<vmem>>, vector<128x128xf32>
    tpu.vector_store %arg4[%c0_10, %c0_11], %22 {strides = array<i32>} : memref<128x128xf32, #tpu.memory_space<vmem>>, vector<128x128xf32>,
    return
  }
  func.func @transform_0(%arg0: i32) -> (i32, i32) {
    %c0_i32 = arith.constant 0 : i32
    %c0_i32_0 = arith.constant 0 : i32
    return %arg0, %c0_i32 : i32, i32
  }
  func.func @transform_1(%arg0: i32) -> (i32, i32) {
    %c0_i32 = arith.constant 0 : i32
    %c0_i32_0 = arith.constant 0 : i32
    %c0_i32_1 = arith.constant 0 : i32
    return %c0_i32, %c0_i32_0 : i32, i32
  }
  func.func @transform_2(%arg0: i32) -> (i32, i32) {
    %c0_i32 = arith.constant 0 : i32
    %c0_i32_0 = arith.constant 0 : i32
    %c0_i32_1 = arith.constant 0 : i32
    return %c0_i32, %c0_i32_0 : i32, i32
  }
  func.func @transform_3(%arg0: i32) -> (i32, i32) {
    %c0_i32 = arith.constant 0 : i32
    %c0_i32_0 = arith.constant 0 : i32
    return %arg0, %c0_i32 : i32, i32
  }
}

module attributes {stable_mosaic.version = 11 : i64} {
  func.func @_bn_lrelu_kernel(%arg0: i32, %arg1: memref<32x256xf32, #tpu.memory_space<vmem>>, %arg2: memref<1x256xf32, #tpu.memory_space<vmem>>, %arg3: memref<1x256xf32, #tpu.memory_space<vmem>>, %arg4: memref<32x256xf32, #tpu.memory_space<vmem>>) attributes {dimension_semantics = [#tpu.dimension_semantics<parallel>], iteration_bounds = array<i64: 1>, scalar_prefetch = 0 : i64, scratch_operands = 0 : i64, tpu.core_type = #tpu.core_type<tc>, window_params = [{transform_indices = @transform_0, window_bounds = array<i64: 32, 256>}, {pipeline_mode = #tpu.pipeline_mode<synchronous>, transform_indices = @transform_1, window_bounds = array<i64: 1, 256>}, {pipeline_mode = #tpu.pipeline_mode<synchronous>, transform_indices = @transform_2, window_bounds = array<i64: 1, 256>}, {transform_indices = @transform_3, window_bounds = array<i64: 32, 256>}]} {
    %c0 = arith.constant 0 : index
    %c0_0 = arith.constant 0 : index
    %0 = vector.load %arg1[%c0, %c0_0] : memref<32x256xf32, #tpu.memory_space<vmem>>, vector<32x256xf32>
    %c0_1 = arith.constant 0 : index
    %c0_2 = arith.constant 0 : index
    %1 = vector.load %arg2[%c0_1, %c0_2] : memref<1x256xf32, #tpu.memory_space<vmem>>, vector<1x256xf32>
    %cst = arith.constant 3.125000e-02 : f32
    %2 = vector.broadcast %cst : f32 to vector<1x256xf32>
    %3 = arith.mulf %1, %2 : vector<1x256xf32>
    %c0_3 = arith.constant 0 : index
    %c0_4 = arith.constant 0 : index
    %4 = vector.load %arg3[%c0_3, %c0_4] : memref<1x256xf32, #tpu.memory_space<vmem>>, vector<1x256xf32>
    %cst_5 = arith.constant 3.125000e-02 : f32
    %5 = vector.broadcast %cst_5 : f32 to vector<1x256xf32>
    %6 = arith.mulf %4, %5 : vector<1x256xf32>
    %7 = arith.mulf %3, %3 : vector<1x256xf32>
    %8 = arith.subf %6, %7 : vector<1x256xf32>
    %cst_6 = arith.constant 0.000000e+00 : f32
    %9 = vector.broadcast %cst_6 : f32 to vector<1x256xf32>
    %10 = arith.maximumf %8, %9 : vector<1x256xf32>
    %11 = vector.broadcast %3 : vector<1x256xf32> to vector<32x256xf32>
    %12 = arith.subf %0, %11 : vector<32x256xf32>
    %cst_7 = arith.constant 9.99999974E-6 : f32
    %13 = vector.broadcast %cst_7 : f32 to vector<1x256xf32>
    %14 = arith.addf %10, %13 : vector<1x256xf32>
    %15 = math.rsqrt %14 : vector<1x256xf32>
    %16 = vector.broadcast %15 : vector<1x256xf32> to vector<32x256xf32>
    %17 = arith.mulf %12, %16 : vector<32x256xf32>
    %cst_8 = arith.constant 0.000000e+00 : f32
    %18 = vector.broadcast %cst_8 : f32 to vector<32x256xf32>
    %19 = arith.cmpf oge, %17, %18 : vector<32x256xf32>
    %cst_9 = arith.constant 2.000000e-01 : f32
    %20 = vector.broadcast %cst_9 : f32 to vector<32x256xf32>
    %21 = arith.mulf %20, %17 : vector<32x256xf32>
    %22 = arith.select %19, %17, %21 : vector<32x256xi1>, vector<32x256xf32>
    %c0_10 = arith.constant 0 : index
    %c0_11 = arith.constant 0 : index
    %23 = vector.load %arg4[%c0_10, %c0_11] : memref<32x256xf32, #tpu.memory_space<vmem>>, vector<32x256xf32>
    tpu.vector_store %arg4[%c0_10, %c0_11], %22 {strides = array<i32>} : memref<32x256xf32, #tpu.memory_space<vmem>>, vector<32x256xf32>,
    return
  }
  func.func @transform_0(%arg0: i32) -> (i32, i32) {
    %c0_i32 = arith.constant 0 : i32
    %c0_i32_0 = arith.constant 0 : i32
    return %arg0, %c0_i32 : i32, i32
  }
  func.func @transform_1(%arg0: i32) -> (i32, i32) {
    %c0_i32 = arith.constant 0 : i32
    %c0_i32_0 = arith.constant 0 : i32
    %c0_i32_1 = arith.constant 0 : i32
    return %c0_i32, %c0_i32_0 : i32, i32
  }
  func.func @transform_2(%arg0: i32) -> (i32, i32) {
    %c0_i32 = arith.constant 0 : i32
    %c0_i32_0 = arith.constant 0 : i32
    %c0_i32_1 = arith.constant 0 : i32
    return %c0_i32, %c0_i32_0 : i32, i32
  }
  func.func @transform_3(%arg0: i32) -> (i32, i32) {
    %c0_i32 = arith.constant 0 : i32
    %c0_i32_0 = arith.constant 0 : i32
    return %arg0, %c0_i32 : i32, i32
  }
}

module attributes {stable_mosaic.version = 11 : i64} {
  func.func @_conv_stats_kernel(%arg0: i32, %arg1: memref<32x3200xbf16, #tpu.memory_space<vmem>>, %arg2: memref<3200x256xbf16, #tpu.memory_space<vmem>>, %arg3: memref<1x256xf32, #tpu.memory_space<vmem>>, %arg4: memref<32x256xf32, #tpu.memory_space<vmem>>, %arg5: memref<1x256xf32, #tpu.memory_space<vmem>>, %arg6: memref<1x256xf32, #tpu.memory_space<vmem>>) attributes {dimension_semantics = [#tpu.dimension_semantics<arbitrary>], iteration_bounds = array<i64: 1>, scalar_prefetch = 0 : i64, scratch_operands = 0 : i64, tpu.core_type = #tpu.core_type<tc>, window_params = [{transform_indices = @transform_0, window_bounds = array<i64: 32, 3200>}, {pipeline_mode = #tpu.pipeline_mode<synchronous>, transform_indices = @transform_1, window_bounds = array<i64: 3200, 256>}, {pipeline_mode = #tpu.pipeline_mode<synchronous>, transform_indices = @transform_2, window_bounds = array<i64: 1, 256>}, {transform_indices = @transform_3, window_bounds = array<i64: 32, 256>}, {pipeline_mode = #tpu.pipeline_mode<synchronous>, transform_indices = @transform_4, window_bounds = array<i64: 1, 256>}, {pipeline_mode = #tpu.pipeline_mode<synchronous>, transform_indices = @transform_5, window_bounds = array<i64: 1, 256>}]} {
    %c0 = arith.constant 0 : index
    %c0_0 = arith.constant 0 : index
    %0 = vector.load %arg1[%c0, %c0_0] : memref<32x3200xbf16, #tpu.memory_space<vmem>>, vector<32x3200xbf16>
    %c0_1 = arith.constant 0 : index
    %c0_2 = arith.constant 0 : index
    %1 = vector.load %arg2[%c0_1, %c0_2] : memref<3200x256xbf16, #tpu.memory_space<vmem>>, vector<3200x256xbf16>
    %cst = arith.constant dense<0.000000e+00> : vector<32x256xf32>
    %2 = tpu.matmul %0, %1, %cst {dimension_numbers = #tpu.dot_dimension_numbers<[1], [0], [0], [1], [0, 0, 1, 1], [], []>} : vector<32x3200xbf16>, vector<3200x256xbf16>, vector<32x256xf32> -> vector<32x256xf32>
    %c0_3 = arith.constant 0 : index
    %c0_4 = arith.constant 0 : index
    %3 = vector.load %arg3[%c0_3, %c0_4] : memref<1x256xf32, #tpu.memory_space<vmem>>, vector<1x256xf32>
    %4 = vector.broadcast %3 : vector<1x256xf32> to vector<32x256xf32>
    %5 = arith.addf %2, %4 : vector<32x256xf32>
    %c0_5 = arith.constant 0 : index
    %c0_6 = arith.constant 0 : index
    %6 = vector.load %arg4[%c0_5, %c0_6] : memref<32x256xf32, #tpu.memory_space<vmem>>, vector<32x256xf32>
    tpu.vector_store %arg4[%c0_5, %c0_6], %5 {strides = array<i32>} : memref<32x256xf32, #tpu.memory_space<vmem>>, vector<32x256xf32>,
    %c0_i32 = arith.constant 0 : i32
    %7 = arith.cmpi eq, %arg0, %c0_i32 : i32
    %8 = arith.extui %7 : i1 to i32
    %c0_i32_7 = arith.constant 0 : i32
    %9 = arith.cmpi ne, %8, %c0_i32_7 : i32
    scf.if %9 {
      %cst_18 = arith.constant 0.000000e+00 : f32
      %21 = vector.broadcast %cst_18 : f32 to vector<1x256xf32>
      %c0_19 = arith.constant 0 : index
      %c0_20 = arith.constant 0 : index
      %22 = vector.load %arg5[%c0_19, %c0_20] : memref<1x256xf32, #tpu.memory_space<vmem>>, vector<1x256xf32>
      tpu.vector_store %arg5[%c0_19, %c0_20], %21 {strides = array<i32>} : memref<1x256xf32, #tpu.memory_space<vmem>>, vector<1x256xf32>,
      %cst_21 = arith.constant 0.000000e+00 : f32
      %23 = vector.broadcast %cst_21 : f32 to vector<1x256xf32>
      %c0_22 = arith.constant 0 : index
      %c0_23 = arith.constant 0 : index
      %24 = vector.load %arg6[%c0_22, %c0_23] : memref<1x256xf32, #tpu.memory_space<vmem>>, vector<1x256xf32>
      tpu.vector_store %arg6[%c0_22, %c0_23], %23 {strides = array<i32>} : memref<1x256xf32, #tpu.memory_space<vmem>>, vector<1x256xf32>,
    } else {
    }
    %c0_8 = arith.constant 0 : index
    %c0_9 = arith.constant 0 : index
    %10 = vector.load %arg5[%c0_8, %c0_9] : memref<1x256xf32, #tpu.memory_space<vmem>>, vector<1x256xf32>
    %cst_10 = arith.constant dense<0.000000e+00> : vector<256xf32>
    %11 = vector.multi_reduction <add>, %5, %cst_10 [0] : vector<32x256xf32> to vector<256xf32>
    %12 = vector.shape_cast %11 : vector<256xf32> to vector<1x256xf32>
    %13 = arith.addf %10, %12 : vector<1x256xf32>
    %c0_11 = arith.constant 0 : index
    %c0_12 = arith.constant 0 : index
    %14 = vector.load %arg5[%c0_11, %c0_12] : memref<1x256xf32, #tpu.memory_space<vmem>>, vector<1x256xf32>
    tpu.vector_store %arg5[%c0_11, %c0_12], %13 {strides = array<i32>} : memref<1x256xf32, #tpu.memory_space<vmem>>, vector<1x256xf32>,
    %c0_13 = arith.constant 0 : index
    %c0_14 = arith.constant 0 : index
    %15 = vector.load %arg6[%c0_13, %c0_14] : memref<1x256xf32, #tpu.memory_space<vmem>>, vector<1x256xf32>
    %16 = arith.mulf %5, %5 : vector<32x256xf32>
    %cst_15 = arith.constant dense<0.000000e+00> : vector<256xf32>
    %17 = vector.multi_reduction <add>, %16, %cst_15 [0] : vector<32x256xf32> to vector<256xf32>
    %18 = vector.shape_cast %17 : vector<256xf32> to vector<1x256xf32>
    %19 = arith.addf %15, %18 : vector<1x256xf32>
    %c0_16 = arith.constant 0 : index
    %c0_17 = arith.constant 0 : index
    %20 = vector.load %arg6[%c0_16, %c0_17] : memref<1x256xf32, #tpu.memory_space<vmem>>, vector<1x256xf32>
    tpu.vector_store %arg6[%c0_16, %c0_17], %19 {strides = array<i32>} : memref<1x256xf32, #tpu.memory_space<vmem>>, vector<1x256xf32>,
    return
  }
  func.func @transform_0(%arg0: i32) -> (i32, i32) {
    %c0_i32 = arith.constant 0 : i32
    %c0_i32_0 = arith.constant 0 : i32
    return %arg0, %c0_i32 : i32, i32
  }
  func.func @transform_1(%arg0: i32) -> (i32, i32) {
    %c0_i32 = arith.constant 0 : i32
    %c0_i32_0 = arith.constant 0 : i32
    %c0_i32_1 = arith.constant 0 : i32
    return %c0_i32, %c0_i32_0 : i32, i32
  }
  func.func @transform_2(%arg0: i32) -> (i32, i32) {
    %c0_i32 = arith.constant 0 : i32
    %c0_i32_0 = arith.constant 0 : i32
    %c0_i32_1 = arith.constant 0 : i32
    return %c0_i32, %c0_i32_0 : i32, i32
  }
  func.func @transform_3(%arg0: i32) -> (i32, i32) {
    %c0_i32 = arith.constant 0 : i32
    %c0_i32_0 = arith.constant 0 : i32
    return %arg0, %c0_i32 : i32, i32
  }
  func.func @transform_4(%arg0: i32) -> (i32, i32) {
    %c0_i32 = arith.constant 0 : i32
    %c0_i32_0 = arith.constant 0 : i32
    %c0_i32_1 = arith.constant 0 : i32
    return %c0_i32, %c0_i32_0 : i32, i32
  }
  func.func @transform_5(%arg0: i32) -> (i32, i32) {
    %c0_i32 = arith.constant 0 : i32
    %c0_i32_0 = arith.constant 0 : i32
    %c0_i32_1 = arith.constant 0 : i32
    return %c0_i32, %c0_i32_0 : i32, i32
  }
}

</mosaic_0001>

<llo_original>
// kernel: d_forward.5
$region0: #{d_forward.5}
  #allocation0 [shape = 'u32[]', space=smem, size = 0x4, offset = 0x4, fixed_abs, tag = 'smem constant byte address 0x4 - core index']
  #allocation1 [shape = 'u32[144,128]{1,0:T(1,128)}', space=vmem, size = 0x12000, scoped, tag = 'internal scratch']
  %s0 = inlined_call_operand.vmem [shape: bf16[512,128], index: 0, kind: input, shape index: {}]
  %s1 = inlined_call_operand.vmem [shape: bf16[128,64], index: 1, kind: input, shape index: {}]
  %s2 = inlined_call_operand.vmem [shape: f32[1,64], index: 2, kind: input, shape index: {}]
  %s3 = inlined_call_operand.vmem [shape: f32[512,64], index: 3, kind: output, shape index: {}]
  %s4 = sld [smem:[#allocation0]]
  $region45: #{d_forward.5} parent=0
    _
  %s6 = ssub.s32 1, %s4
  %s7 = scalar_select 0, %s6, %s4
  loop: start=0, step=1, limit=4
  $region2: #{d_forward.5} parent=0 // loop_pre_header
    _
  $region3: #{d_forward.5} parent=0 // loop_header
    %s9 = sphi 0, %s13
    %p10 = scmp.ge.s32.totalorder %s9, 4
    %s19 = sphi 0, %s21
    %s22 = sphi 0, %s19
    %s23 = sphi 0, %s22
    %s39 = sphi 0, %s23
    %s43 = sphi 0, %s43
    %s45 = sphi 0, %s43
    %s46 = sphi 0, %s45
    %s60 = sphi 0, %s46
    %s64 = sphi 0, %s64
    %s66 = sphi 0, %s64
    %s67 = sphi 0, %s66
    %s81 = sphi 0, %s67
    %s87 = sphi 0, %s89
    %s90 = sphi 0, %s87
    %s91 = sphi 0, %s90
    %s107 = sphi 0, %s91
  $region4: #{d_forward.5} parent=0 // loop_header_branch
    %12 = sbr.rel (%p10) target = $region8
  $region5: #{d_forward.5} parent=0 // loop_body
    %s14 = ssub.s32 %s9, 1
    %s15 = ssub.s32 %s9, 2
    %s16 = sadd.s32 %s9, 1
    %s17 = ssub.s32 %s9, %s16
    %p18 = scmp.eq.s32.totalorder %s17, 0
    %s20 = sadd.s32 %s19, 1
    %s21 = scalar_select %p18, %s19, %s20
    %p24 = pneg %p18
    %p25 = scmp.eq.s32.totalorder %s9, 1
    %p26 = por %p24, %p25
    %p27 = scmp.ne.s32.totalorder %s19, %s22
    %p28 = scmp.eq.s32.totalorder %s9, 0
    %p29 = por %p27, %p28
    %p30 = scmp.ne.s32.totalorder %s19, %s22
    %p31 = scmp.eq.s32.totalorder %s14, 1
    %p32 = por %p30, %p31
    %p33 = scmp.ne.s32.totalorder %s22, %s23
    %p34 = scmp.eq.s32.totalorder %s14, 0
    %p35 = por %p33, %p34
    %p36 = scmp.ne.s32.totalorder %s22, %s23
    %p37 = scmp.eq.s32.totalorder %s15, 1
    %p38 = por %p36, %p37
    %p40 = scmp.ne.s32.totalorder %s23, %s39
    %p41 = scmp.eq.s32.totalorder %s15, 0
    %p42 = por %p40, %p41
    %s44 = sadd.s32 %s43, 1
    %p47 = scmp.eq.s32.totalorder %s9, 1
    %p48 = scmp.ne.s32.totalorder %s43, %s45
    %p49 = scmp.eq.s32.totalorder %s9, 0
    %p50 = por %p48, %p49
    %p51 = scmp.ne.s32.totalorder %s43, %s45
    %p52 = scmp.eq.s32.totalorder %s14, 1
    %p53 = por %p51, %p52
    %p54 = scmp.ne.s32.totalorder %s45, %s46
    %p55 = scmp.eq.s32.totalorder %s14, 0
    %p56 = por %p54, %p55
    %p57 = scmp.ne.s32.totalorder %s45, %s46
    %p58 = scmp.eq.s32.totalorder %s15, 1
    %p59 = por %p57, %p58
    %p61 = scmp.ne.s32.totalorder %s46, %s60
    %p62 = scmp.eq.s32.totalorder %s15, 0
    %p63 = por %p61, %p62
    %s65 = sadd.s32 %s64, 1
    %p68 = scmp.eq.s32.totalorder %s9, 1
    %p69 = scmp.ne.s32.totalorder %s64, %s66
    %p70 = scmp.eq.s32.totalorder %s9, 0
    %p71 = por %p69, %p70
    %p72 = scmp.ne.s32.totalorder %s64, %s66
    %p73 = scmp.eq.s32.totalorder %s14, 1
    %p74 = por %p72, %p73
    %p75 = scmp.ne.s32.totalorder %s66, %s67
    %p76 = scmp.eq.s32.totalorder %s14, 0
    %p77 = por %p75, %p76
    %p78 = scmp.ne.s32.totalorder %s66, %s67
    %p79 = scmp.eq.s32.totalorder %s15, 1
    %p80 = por %p78, %p79
    %p82 = scmp.ne.s32.totalorder %s67, %s81
    %p83 = scmp.eq.s32.totalorder %s15, 0
    %p84 = por %p82, %p83
    %s85 = ssub.s32 %s9, %s16
    %p86 = scmp.eq.s32.totalorder %s85, 0
    %s88 = sadd.s32 %s87, 1
    %s89 = scalar_select %p86, %s87, %s88
    %p92 = pneg %p86
    %p93 = scmp.eq.s32.totalorder %s9, 1
    %p94 = por %p92, %p93
    %p95 = scmp.ne.s32.totalorder %s87, %s90
    %p96 = scmp.eq.s32.totalorder %s9, 0
    %p97 = por %p95, %p96
    %p98 = scmp.ne.s32.totalorder %s87, %s90
    %p99 = scmp.eq.s32.totalorder %s14, 1
    %p100 = por %p98, %p99
    %p101 = scmp.ne.s32.totalorder %s90, %s91
    %p102 = scmp.eq.s32.totalorder %s14, 0
    %p103 = por %p101, %p102
    %p104 = scmp.ne.s32.totalorder %s90, %s91
    %p105 = scmp.eq.s32.totalorder %s15, 1
    %p106 = por %p104, %p105
    %p108 = scmp.ne.s32.totalorder %s91, %s107
    %p109 = scmp.eq.s32.totalorder %s15, 0
    %p110 = por %p108, %p109
    %p111 = scmp.le.s32.totalorder 1, %s9
    %p112 = scmp.lt.s32.totalorder %s9, 3
    %p113 = pnand %p111, %p112
    %p114 = pneg %p113
    // Predicated region
    $region9: #{d_forward.5} parent=5 // pred_check
      _
    $region10: #{d_forward.5} parent=5 // pred_check_branch
      %116 = sbr.rel (%p113) target = $region12
    $region11: #{d_forward.5} parent=5 // pred_region
      %s117 = ssub.s32 %s9, 1
      // Predicated region
      $region13: #{d_forward.5} parent=11 // pred_check
        %p118 = pneg %p56
      $region14: #{d_forward.5} parent=11 // pred_check_branch
        %120 = sbr.rel (%p118) target = $region16
      $region15: #{d_forward.5} parent=11 // pred_region
        _
      $region16: #{d_forward.5} parent=11 // pred_fallthru
        _
      // Predicated region
      $region17: #{d_forward.5} parent=11 // pred_check
        %p121 = pneg %p77
      $region18: #{d_forward.5} parent=11 // pred_check_branch
        %123 = sbr.rel (%p121) target = $region20
      $region19: #{d_forward.5} parent=11 // pred_region
        _
      $region20: #{d_forward.5} parent=11 // pred_fallthru
        _
    $region12: #{d_forward.5} parent=5 // pred_fallthru
      _
    %p124 = scmp.lt.s32.totalorder %s9, 2
    // Predicated region
    $region21: #{d_forward.5} parent=5 // pred_check
      %p125 = pneg %p124
    $region22: #{d_forward.5} parent=5 // pred_check_branch
      %127 = sbr.rel (%p125) target = $region24
    $region23: #{d_forward.5} parent=5 // pred_region
      // Predicated region
      $region25: #{d_forward.5} parent=23 // pred_check
        %p128 = pneg %p29
      $region26: #{d_forward.5} parent=23 // pred_check_branch
        %130 = sbr.rel (%p128) target = $region28
      $region27: #{d_forward.5} parent=23 // pred_region
        %s131 = smul.u32 32, %s9
        %p132 = scmp.lt.s32.totalorder %s131, 63
        %s133 = scalar_select %p132, %s131, 63
        %s134 = smul.addr %s133, 4
        %s135 = scalar_lea.vmem %s0, %s134
        %s136 = smul.u32 32, %s9
      $region28: #{d_forward.5} parent=23 // pred_fallthru
        _
    $region24: #{d_forward.5} parent=5 // pred_fallthru
      _
    %p137 = scmp.le.s32.totalorder 1, %s9
    %p138 = scmp.lt.s32.totalorder %s9, 3
    %p139 = pnand %p137, %p138
    %p140 = pneg %p139
    // Predicated region
    $region29: #{d_forward.5} parent=5 // pred_check
      _
    $region30: #{d_forward.5} parent=5 // pred_check_branch
      %142 = sbr.rel (%p139) target = $region32
    $region31: #{d_forward.5} parent=5 // pred_region
      %s143 = ssub.s32 %s9, 1
      %s144 = smul.u32 32, %s14
      %p145 = scmp.lt.s32.totalorder %s144, 63
      %s146 = scalar_select %p145, %s144, 63
      %s147 = smul.addr %s146, 4
      %s148 = scalar_lea.vmem %s0, %s147
      %p149 = pneg %p35
      %p150 = pneg %p32
      %p151 = pneg %p56
      %p152 = pneg %p53
      %p153 = pneg %p77
      %p154 = pneg %p74
      %p155 = pneg %p103
      %p156 = pneg %p100
      %s157 = smul.u32 32, %s14
      %p158 = scmp.lt.s32.totalorder %s157, 63
      %s159 = scalar_select %p158, %s157, 63
      %s160 = smul.addr %s159, 8
      %s161 = scalar_lea.vmem %s3, %s160
      %s162 = smul.u32 32, %s14
      %p163 = scmp.lt.s32.totalorder %s162, 63
      %s164 = scalar_select %p163, %s162, 63
      %s165 = smul.addr %s164, 4
      %s166 = scalar_lea.vmem %s0, %s165
      %s167 = smul.u32 32, %s14
      %s168 = smul.u32 32, %s14
      %p169 = scmp.lt.s32.totalorder %s168, 63
      %s170 = scalar_select %p169, %s168, 63
      %s171 = smul.addr %s170, 8
      %s172 = scalar_lea.vmem %s3, %s171
      %s173 = smul.u32 32, %s14
      %v175 = vld [vmem:[%s166] sm:$0xf]
      %v176 = vld [vmem:[%s166 + $0x4] sm:$0xf]
      %v177 = vld [vmem:[%s166 + $0x8] sm:$0xf]
      %v178 = vld [vmem:[%s166 + $0xc] sm:$0xf]
      %v179 = vld [vmem:[%s166 + $0x10] sm:$0xf]
      %v180 = vld [vmem:[%s166 + $0x14] sm:$0xf]
      %v181 = vld [vmem:[%s166 + $0x18] sm:$0xf]
      %v182 = vld [vmem:[%s166 + $0x1c] sm:$0xf]
      %v183 = vld [vmem:[%s166 + $0x20] sm:$0xf]
      %v184 = vld [vmem:[%s166 + $0x24] sm:$0xf]
      %v185 = vld [vmem:[%s166 + $0x28] sm:$0xf]
      %v186 = vld [vmem:[%s166 + $0x2c] sm:$0xf]
      %v187 = vld [vmem:[%s166 + $0x30] sm:$0xf]
      %v188 = vld [vmem:[%s166 + $0x34] sm:$0xf]
      %v189 = vld [vmem:[%s166 + $0x38] sm:$0xf]
      %v190 = vld [vmem:[%s166 + $0x3c] sm:$0xf]
      %v191 = vld [vmem:[%s166 + $0x40] sm:$0xf]
      %v192 = vld [vmem:[%s166 + $0x44] sm:$0xf]
      %v193 = vld [vmem:[%s166 + $0x48] sm:$0xf]
      %v194 = vld [vmem:[%s166 + $0x4c] sm:$0xf]
      %v195 = vld [vmem:[%s166 + $0x50] sm:$0xf]
      %v196 = vld [vmem:[%s166 + $0x54] sm:$0xf]
      %v197 = vld [vmem:[%s166 + $0x58] sm:$0xf]
      %v198 = vld [vmem:[%s166 + $0x5c] sm:$0xf]
      %v199 = vld [vmem:[%s166 + $0x60] sm:$0xf]
      %v200 = vld [vmem:[%s166 + $0x64] sm:$0xf]
      %v201 = vld [vmem:[%s166 + $0x68] sm:$0xf]
      %v202 = vld [vmem:[%s166 + $0x6c] sm:$0xf]
      %v203 = vld [vmem:[%s166 + $0x70] sm:$0xf]
      %v204 = vld [vmem:[%s166 + $0x74] sm:$0xf]
      %v205 = vld [vmem:[%s166 + $0x78] sm:$0xf]
      %v206 = vld [vmem:[%s166 + $0x7c] sm:$0xf]
      %v207 = vld [vmem:[%s1] sm:$0xf]
      %v208 = vld [vmem:[%s1 + $0x4] sm:$0xf]
      %v209 = vld [vmem:[%s1 + $0x8] sm:$0xf]
      %v210 = vld [vmem:[%s1 + $0xc] sm:$0xf]
      %v211 = vld [vmem:[%s1 + $0x10] sm:$0xf]
      %v212 = vld [vmem:[%s1 + $0x14] sm:$0xf]
      %v213 = vld [vmem:[%s1 + $0x18] sm:$0xf]
      %v214 = vld [vmem:[%s1 + $0x1c] sm:$0xf]
      %v215 = vld [vmem:[%s1 + $0x20] sm:$0xf]
      %v216 = vld [vmem:[%s1 + $0x24] sm:$0xf]
      %v217 = vld [vmem:[%s1 + $0x28] sm:$0xf]
      %v218 = vld [vmem:[%s1 + $0x2c] sm:$0xf]
      %v219 = vld [vmem:[%s1 + $0x30] sm:$0xf]
      %v220 = vld [vmem:[%s1 + $0x34] sm:$0xf]
      %v221 = vld [vmem:[%s1 + $0x38] sm:$0xf]
      %v222 = vld [vmem:[%s1 + $0x3c] sm:$0xf]
      %v223 = vld [vmem:[%s2] sm:$0x1]
      %v225 = vlaneseq
      %v226 = vshrl.u32 %v225, 7
      %v227 = vsub.s32 0, %v226
      %v228 = vrot.slane %v223, %v227
      %v262 = vunpack.c.l.b16 %v175
      %v263 = vunpack.c.l.b16 %v176
      %v264 = vunpack.c.l.b16 %v177
      %v265 = vunpack.c.l.b16 %v178
      %v266 = vunpack.c.l.b16 %v179
      %v267 = vunpack.c.l.b16 %v180
      %v268 = vunpack.c.l.b16 %v181
      %v269 = vunpack.c.l.b16 %v182
      %v270 = vunpack.c.l.b16 %v183
      %v271 = vunpack.c.l.b16 %v184
      %v272 = vunpack.c.l.b16 %v185
      %v273 = vunpack.c.l.b16 %v186
      %v274 = vunpack.c.l.b16 %v187
      %v275 = vunpack.c.l.b16 %v188
      %v276 = vunpack.c.l.b16 %v189
      %v277 = vunpack.c.l.b16 %v190
      %v278 = vunpack.c.l.b16 %v191
      %v279 = vunpack.c.l.b16 %v192
      %v280 = vunpack.c.l.b16 %v193
      %v281 = vunpack.c.l.b16 %v194
      %v282 = vunpack.c.l.b16 %v195
      %v283 = vunpack.c.l.b16 %v196
      %v284 = vunpack.c.l.b16 %v197
      %v285 = vunpack.c.l.b16 %v198
      %v286 = vunpack.c.l.b16 %v199
      %v287 = vunpack.c.l.b16 %v200
      %v288 = vunpack.c.l.b16 %v201
      %v289 = vunpack.c.l.b16 %v202
      %v290 = vunpack.c.l.b16 %v203
      %v291 = vunpack.c.l.b16 %v204
      %v292 = vunpack.c.l.b16 %v205
      %v293 = vunpack.c.l.b16 %v206
      %v294 = vpack.c.b16 %v263, %v262
      %v295 = vpack.c.b16 %v265, %v264
      %v296 = vpack.c.b16 %v267, %v266
      %v297 = vpack.c.b16 %v269, %v268
      %v298 = vpack.c.b16 %v271, %v270
      %v299 = vpack.c.b16 %v273, %v272
      %v300 = vpack.c.b16 %v275, %v274
      %v301 = vpack.c.b16 %v277, %v276
      %v302 = vpack.c.b16 %v279, %v278
      %v303 = vpack.c.b16 %v281, %v280
      %v304 = vpack.c.b16 %v283, %v282
      %v305 = vpack.c.b16 %v285, %v284
      %v306 = vpack.c.b16 %v287, %v286
      %v307 = vpack.c.b16 %v289, %v288
      %v308 = vpack.c.b16 %v291, %v290
      %v309 = vpack.c.b16 %v293, %v292
      %v342 = vunpack.c.l.b16 %v207
      %v343 = vunpack.c.l.b16 %v208
      %v344 = vunpack.c.l.b16 %v209
      %v345 = vunpack.c.l.b16 %v210
      %v346 = vunpack.c.l.b16 %v211
      %v347 = vunpack.c.l.b16 %v212
      %v348 = vunpack.c.l.b16 %v213
      %v349 = vunpack.c.l.b16 %v214
      %v350 = vunpack.c.l.b16 %v215
      %v351 = vunpack.c.l.b16 %v216
      %v352 = vunpack.c.l.b16 %v217
      %v353 = vunpack.c.l.b16 %v218
      %v354 = vunpack.c.l.b16 %v219
      %v355 = vunpack.c.l.b16 %v220
      %v356 = vunpack.c.l.b16 %v221
      %v357 = vunpack.c.l.b16 %v222
      %v358 = vpack.c.b16 %v343, %v342
      %v359 = vpack.c.b16 %v345, %v344
      %v360 = vpack.c.b16 %v347, %v346
      %v361 = vpack.c.b16 %v349, %v348
      %v362 = vpack.c.b16 %v351, %v350
      %v363 = vpack.c.b16 %v353, %v352
      %v364 = vpack.c.b16 %v355, %v354
      %v365 = vpack.c.b16 %v357, %v356
      %374 = vmatprep.subr.bf16.mxu0 0
      %375 = vmatpush1.bf16.msra.mxu0 %v358
      %376 = vmatprep.subr.bf16.mxu0 0
      %377 = vmatpush1.bf16.msra.mxu0 %v359
      %378 = vmatprep.subr.bf16.mxu0 0
      %379 = vmatpush1.bf16.msra.mxu0 %v360
      %380 = vmatprep.subr.bf16.mxu0 0
      %381 = vmatpush1.bf16.msra.mxu0 %v361
      %382 = vmatprep.subr.bf16.mxu0 0
      %383 = vmatpush1.bf16.msra.mxu0 %v362
      %384 = vmatprep.subr.bf16.mxu0 0
      %385 = vmatpush1.bf16.msra.mxu0 %v363
      %386 = vmatprep.subr.bf16.mxu0 0
      %387 = vmatpush1.bf16.msra.mxu0 %v364
      %388 = vmatprep.subr.bf16.mxu0 0
      %389 = vmatpush1.bf16.msra.mxu0 %v365
      %390 = vmatprep.subr.bf16.mxu0 0
      %391 = vmatpush1.bf16.msra.mxu0 0
      %392 = vmatprep.subr.bf16.mxu0 0
      %393 = vmatpush1.bf16.msra.mxu0 0
      %394 = vmatprep.subr.bf16.mxu0 0
      %395 = vmatpush1.bf16.msra.mxu0 0
      %396 = vmatprep.subr.bf16.mxu0 0
      %397 = vmatpush1.bf16.msra.mxu0 0
      %398 = vmatprep.subr.bf16.mxu0 0
      %399 = vmatpush1.bf16.msra.mxu0 0
      %400 = vmatprep.subr.bf16.mxu0 0
      %401 = vmatpush1.bf16.msra.mxu0 0
      %402 = vmatprep.subr.bf16.mxu0 0
      %403 = vmatpush1.bf16.msra.mxu0 0
      %404 = vmatprep.subr.bf16.mxu0 0
      %405 = vmatpush1.bf16.msra.mxu0 0
      %406 = vmatprep.mubr.bf16.mxu0 0
      %407 = vmatmul.mubr.bf16.gmra.mrb[0].mxu0 %v294
      %v408 = vpop.f32.mrb[0].mxu0
      %v409 = vadd.f32 %v228, %v408
      %v410 = vpop.f32.mrb[0].mxu0
      %v411 = vpop.f32.mrb[0].mxu0
      %v412 = vadd.f32 %v228, %v411
      %v413 = vpop.f32.mrb[0].mxu0
      %414 = vmatprep.mubr.bf16.mxu0 0
      %415 = vmatmul.mubr.bf16.gmra.mrb[0].mxu0 %v295
      %v416 = vpop.f32.mrb[0].mxu0
      %v417 = vadd.f32 %v228, %v416
      %v418 = vpop.f32.mrb[0].mxu0
      %v419 = vpop.f32.mrb[0].mxu0
      %v420 = vadd.f32 %v228, %v419
      %v421 = vpop.f32.mrb[0].mxu0
      %422 = vmatprep.mubr.bf16.mxu0 0
      %423 = vmatmul.mubr.bf16.gmra.mrb[0].mxu0 %v296
      %v424 = vpop.f32.mrb[0].mxu0
      %v425 = vadd.f32 %v228, %v424
      %v426 = vpop.f32.mrb[0].mxu0
      %v427 = vpop.f32.mrb[0].mxu0
      %v428 = vadd.f32 %v228, %v427
      %v429 = vpop.f32.mrb[0].mxu0
      %430 = vmatprep.mubr.bf16.mxu0 0
      %431 = vmatmul.mubr.bf16.gmra.mrb[0].mxu0 %v297
      %v432 = vpop.f32.mrb[0].mxu0
      %v433 = vadd.f32 %v228, %v432
      %v434 = vpop.f32.mrb[0].mxu0
      %v435 = vpop.f32.mrb[0].mxu0
      %v436 = vadd.f32 %v228, %v435
      %v437 = vpop.f32.mrb[0].mxu0
      %438 = vmatprep.mubr.bf16.mxu0 0
      %439 = vmatmul.mubr.bf16.gmra.mrb[0].mxu0 %v298
      %v440 = vpop.f32.mrb[0].mxu0
      %v441 = vadd.f32 %v228, %v440
      %v442 = vpop.f32.mrb[0].mxu0
      %v443 = vpop.f32.mrb[0].mxu0
      %v444 = vadd.f32 %v228, %v443
      %v445 = vpop.f32.mrb[0].mxu0
      %446 = vmatprep.mubr.bf16.mxu0 0
      %447 = vmatmul.mubr.bf16.gmra.mrb[0].mxu0 %v299
      %v448 = vpop.f32.mrb[0].mxu0
      %v449 = vadd.f32 %v228, %v448
      %v450 = vpop.f32.mrb[0].mxu0
      %v451 = vpop.f32.mrb[0].mxu0
      %v452 = vadd.f32 %v228, %v451
      %v453 = vpop.f32.mrb[0].mxu0
      %454 = vmatprep.mubr.bf16.mxu0 0
      %455 = vmatmul.mubr.bf16.gmra.mrb[0].mxu0 %v300
      %v456 = vpop.f32.mrb[0].mxu0
      %v457 = vadd.f32 %v228, %v456
      %v458 = vpop.f32.mrb[0].mxu0
      %v459 = vpop.f32.mrb[0].mxu0
      %v460 = vadd.f32 %v228, %v459
      %v461 = vpop.f32.mrb[0].mxu0
      %462 = vmatprep.mubr.bf16.mxu0 0
      %463 = vmatmul.mubr.bf16.gmra.mrb[0].mxu0 %v301
      %v464 = vpop.f32.mrb[0].mxu0
      %v465 = vadd.f32 %v228, %v464
      %v466 = vpop.f32.mrb[0].mxu0
      %v467 = vpop.f32.mrb[0].mxu0
      %v468 = vadd.f32 %v228, %v467
      %v469 = vpop.f32.mrb[0].mxu0
      %470 = vmatprep.mubr.bf16.mxu0 0
      %471 = vmatmul.mubr.bf16.gmra.mrb[0].mxu0 %v302
      %v472 = vpop.f32.mrb[0].mxu0
      %v473 = vadd.f32 %v228, %v472
      %v474 = vpop.f32.mrb[0].mxu0
      %v475 = vpop.f32.mrb[0].mxu0
      %v476 = vadd.f32 %v228, %v475
      %v477 = vpop.f32.mrb[0].mxu0
      %478 = vmatprep.mubr.bf16.mxu0 0
      %479 = vmatmul.mubr.bf16.gmra.mrb[0].mxu0 %v303
      %v480 = vpop.f32.mrb[0].mxu0
      %v481 = vadd.f32 %v228, %v480
      %v482 = vpop.f32.mrb[0].mxu0
      %v483 = vpop.f32.mrb[0].mxu0
      %v484 = vadd.f32 %v228, %v483
      %v485 = vpop.f32.mrb[0].mxu0
      %486 = vmatprep.mubr.bf16.mxu0 0
      %487 = vmatmul.mubr.bf16.gmra.mrb[0].mxu0 %v304
      %v488 = vpop.f32.mrb[0].mxu0
      %v489 = vadd.f32 %v228, %v488
      %v490 = vpop.f32.mrb[0].mxu0
      %v491 = vpop.f32.mrb[0].mxu0
      %v492 = vadd.f32 %v228, %v491
      %v493 = vpop.f32.mrb[0].mxu0
      %494 = vmatprep.mubr.bf16.mxu0 0
      %495 = vmatmul.mubr.bf16.gmra.mrb[0].mxu0 %v305
      %v496 = vpop.f32.mrb[0].mxu0
      %v497 = vadd.f32 %v228, %v496
      %v498 = vpop.f32.mrb[0].mxu0
      %v499 = vpop.f32.mrb[0].mxu0
      %v500 = vadd.f32 %v228, %v499
      %v501 = vpop.f32.mrb[0].mxu0
      %502 = vmatprep.mubr.bf16.mxu0 0
      %503 = vmatmul.mubr.bf16.gmra.mrb[0].mxu0 %v306
      %v504 = vpop.f32.mrb[0].mxu0
      %v505 = vadd.f32 %v228, %v504
      %v506 = vpop.f32.mrb[0].mxu0
      %v507 = vpop.f32.mrb[0].mxu0
      %v508 = vadd.f32 %v228, %v507
      %v509 = vpop.f32.mrb[0].mxu0
      %510 = vmatprep.mubr.bf16.mxu0 0
      %511 = vmatmul.mubr.bf16.gmra.mrb[0].mxu0 %v307
      %v512 = vpop.f32.mrb[0].mxu0
      %v513 = vadd.f32 %v228, %v512
      %v514 = vpop.f32.mrb[0].mxu0
      %v515 = vpop.f32.mrb[0].mxu0
      %v516 = vadd.f32 %v228, %v515
      %v517 = vpop.f32.mrb[0].mxu0
      %518 = vmatprep.mubr.bf16.mxu0 0
      %519 = vmatmul.mubr.bf16.gmra.mrb[0].mxu0 %v308
      %v520 = vpop.f32.mrb[0].mxu0
      %v521 = vadd.f32 %v228, %v520
      %v522 = vpop.f32.mrb[0].mxu0
      %v523 = vpop.f32.mrb[0].mxu0
      %v524 = vadd.f32 %v228, %v523
      %v525 = vpop.f32.mrb[0].mxu0
      %526 = vmatprep.mubr.bf16.mxu0 0
      %527 = vmatmul.mubr.bf16.gmra.mrb[0].mxu0 %v309
      %v528 = vpop.f32.mrb[0].mxu0
      %v529 = vadd.f32 %v228, %v528
      %v530 = vpop.f32.mrb[0].mxu0
      %v531 = vpop.f32.mrb[0].mxu0
      %v532 = vadd.f32 %v228, %v531
      %v533 = vpop.f32.mrb[0].mxu0
      %534 = vdwg.mxu0
      %vm535 = vcmp.ge.f32.partialorder %v409, 0.0
      %vm536 = vcmp.ge.f32.partialorder %v412, 0.0
      %vm537 = vcmp.ge.f32.partialorder %v417, 0.0
      %vm538 = vcmp.ge.f32.partialorder %v420, 0.0
      %vm539 = vcmp.ge.f32.partialorder %v425, 0.0
      %vm540 = vcmp.ge.f32.partialorder %v428, 0.0
      %vm541 = vcmp.ge.f32.partialorder %v433, 0.0
      %vm542 = vcmp.ge.f32.partialorder %v436, 0.0
      %vm543 = vcmp.ge.f32.partialorder %v441, 0.0
      %vm544 = vcmp.ge.f32.partialorder %v444, 0.0
      %vm545 = vcmp.ge.f32.partialorder %v449, 0.0
      %vm546 = vcmp.ge.f32.partialorder %v452, 0.0
      %vm547 = vcmp.ge.f32.partialorder %v457, 0.0
      %vm548 = vcmp.ge.f32.partialorder %v460, 0.0
      %vm549 = vcmp.ge.f32.partialorder %v465, 0.0
      %vm550 = vcmp.ge.f32.partialorder %v468, 0.0
      %vm551 = vcmp.ge.f32.partialorder %v473, 0.0
      %vm552 = vcmp.ge.f32.partialorder %v476, 0.0
      %vm553 = vcmp.ge.f32.partialorder %v481, 0.0
      %vm554 = vcmp.ge.f32.partialorder %v484, 0.0
      %vm555 = vcmp.ge.f32.partialorder %v489, 0.0
      %vm556 = vcmp.ge.f32.partialorder %v492, 0.0
      %vm557 = vcmp.ge.f32.partialorder %v497, 0.0
      %vm558 = vcmp.ge.f32.partialorder %v500, 0.0
      %vm559 = vcmp.ge.f32.partialorder %v505, 0.0
      %vm560 = vcmp.ge.f32.partialorder %v508, 0.0
      %vm561 = vcmp.ge.f32.partialorder %v513, 0.0
      %vm562 = vcmp.ge.f32.partialorder %v516, 0.0
      %vm563 = vcmp.ge.f32.partialorder %v521, 0.0
      %vm564 = vcmp.ge.f32.partialorder %v524, 0.0
      %vm565 = vcmp.ge.f32.partialorder %v529, 0.0
      %vm566 = vcmp.ge.f32.partialorder %v532, 0.0
      %v567 = vmul.f32 %v409, 0.2
      %v568 = vmul.f32 %v412, 0.2
      %v569 = vmul.f32 %v417, 0.2
      %v570 = vmul.f32 %v420, 0.2
      %v571 = vmul.f32 %v425, 0.2
      %v572 = vmul.f32 %v428, 0.2
      %v573 = vmul.f32 %v433, 0.2
      %v574 = vmul.f32 %v436, 0.2
      %v575 = vmul.f32 %v441, 0.2
      %v576 = vmul.f32 %v444, 0.2
      %v577 = vmul.f32 %v449, 0.2
      %v578 = vmul.f32 %v452, 0.2
      %v579 = vmul.f32 %v457, 0.2
      %v580 = vmul.f32 %v460, 0.2
      %v581 = vmul.f32 %v465, 0.2
      %v582 = vmul.f32 %v468, 0.2
      %v583 = vmul.f32 %v473, 0.2
      %v584 = vmul.f32 %v476, 0.2
      %v585 = vmul.f32 %v481, 0.2
      %v586 = vmul.f32 %v484, 0.2
      %v587 = vmul.f32 %v489, 0.2
      %v588 = vmul.f32 %v492, 0.2
      %v589 = vmul.f32 %v497, 0.2
      %v590 = vmul.f32 %v500, 0.2
      %v591 = vmul.f32 %v505, 0.2
      %v592 = vmul.f32 %v508, 0.2
      %v593 = vmul.f32 %v513, 0.2
      %v594 = vmul.f32 %v516, 0.2
      %v595 = vmul.f32 %v521, 0.2
      %v596 = vmul.f32 %v524, 0.2
      %v597 = vmul.f32 %v529, 0.2
      %v598 = vmul.f32 %v532, 0.2
      %v599 = vsel %vm535, %v409, %v567
      %v600 = vsel %vm536, %v412, %v568
      %v601 = vsel %vm537, %v417, %v569
      %v602 = vsel %vm538, %v420, %v570
      %v603 = vsel %vm539, %v425, %v571
      %v604 = vsel %vm540, %v428, %v572
      %v605 = vsel %vm541, %v433, %v573
      %v606 = vsel %vm542, %v436, %v574
      %v607 = vsel %vm543, %v441, %v575
      %v608 = vsel %vm544, %v444, %v576
      %v609 = vsel %vm545, %v449, %v577
      %v610 = vsel %vm546, %v452, %v578
      %v611 = vsel %vm547, %v457, %v579
      %v612 = vsel %vm548, %v460, %v580
      %v613 = vsel %vm549, %v465, %v581
      %v614 = vsel %vm550, %v468, %v582
      %v615 = vsel %vm551, %v473, %v583
      %v616 = vsel %vm552, %v476, %v584
      %v617 = vsel %vm553, %v481, %v585
      %v618 = vsel %vm554, %v484, %v586
      %v619 = vsel %vm555, %v489, %v587
      %v620 = vsel %vm556, %v492, %v588
      %v621 = vsel %vm557, %v497, %v589
      %v622 = vsel %vm558, %v500, %v590
      %v623 = vsel %vm559, %v505, %v591
      %v624 = vsel %vm560, %v508, %v592
      %v625 = vsel %vm561, %v513, %v593
      %v626 = vsel %vm562, %v516, %v594
      %v627 = vsel %vm563, %v521, %v595
      %v628 = vsel %vm564, %v524, %v596
      %v629 = vsel %vm565, %v529, %v597
      %v630 = vsel %vm566, %v532, %v598
      %vm631 = vcmask 523264
      %632 = vst.msk [vmem:[%s172] sm:$0xff] %vm631, %v599
      %633 = vst.msk [vmem:[%s172 + $0x8] sm:$0xff] %vm631, %v600
      %634 = vst.msk [vmem:[%s172 + $0x10] sm:$0xff] %vm631, %v601
      %635 = vst.msk [vmem:[%s172 + $0x18] sm:$0xff] %vm631, %v602
      %636 = vst.msk [vmem:[%s172 + $0x20] sm:$0xff] %vm631, %v603
      %637 = vst.msk [vmem:[%s172 + $0x28] sm:$0xff] %vm631, %v604
      %638 = vst.msk [vmem:[%s172 + $0x30] sm:$0xff] %vm631, %v605
      %639 = vst.msk [vmem:[%s172 + $0x38] sm:$0xff] %vm631, %v606
      %640 = vst.msk [vmem:[%s172 + $0x40] sm:$0xff] %vm631, %v607
      %641 = vst.msk [vmem:[%s172 + $0x48] sm:$0xff] %vm631, %v608
      %642 = vst.msk [vmem:[%s172 + $0x50] sm:$0xff] %vm631, %v609
      %643 = vst.msk [vmem:[%s172 + $0x58] sm:$0xff] %vm631, %v610
      %644 = vst.msk [vmem:[%s172 + $0x60] sm:$0xff] %vm631, %v611
      %645 = vst.msk [vmem:[%s172 + $0x68] sm:$0xff] %vm631, %v612
      %646 = vst.msk [vmem:[%s172 + $0x70] sm:$0xff] %vm631, %v613
      %647 = vst.msk [vmem:[%s172 + $0x78] sm:$0xff] %vm631, %v614
      %648 = vst.msk [vmem:[%s172 + $0x80] sm:$0xff] %vm631, %v615
      %649 = vst.msk [vmem:[%s172 + $0x88] sm:$0xff] %vm631, %v616
      %650 = vst.msk [vmem:[%s172 + $0x90] sm:$0xff] %vm631, %v617
      %651 = vst.msk [vmem:[%s172 + $0x98] sm:$0xff] %vm631, %v618
      %652 = vst.msk [vmem:[%s172 + $0xa0] sm:$0xff] %vm631, %v619
      %653 = vst.msk [vmem:[%s172 + $0xa8] sm:$0xff] %vm631, %v620
      %654 = vst.msk [vmem:[%s172 + $0xb0] sm:$0xff] %vm631, %v621
      %655 = vst.msk [vmem:[%s172 + $0xb8] sm:$0xff] %vm631, %v622
      %656 = vst.msk [vmem:[%s172 + $0xc0] sm:$0xff] %vm631, %v623
      %657 = vst.msk [vmem:[%s172 + $0xc8] sm:$0xff] %vm631, %v624
      %658 = vst.msk [vmem:[%s172 + $0xd0] sm:$0xff] %vm631, %v625
      %659 = vst.msk [vmem:[%s172 + $0xd8] sm:$0xff] %vm631, %v626
      %660 = vst.msk [vmem:[%s172 + $0xe0] sm:$0xff] %vm631, %v627
      %661 = vst.msk [vmem:[%s172 + $0xe8] sm:$0xff] %vm631, %v628
      %662 = vst.msk [vmem:[%s172 + $0xf0] sm:$0xff] %vm631, %v629
      %663 = vst.msk [vmem:[%s172 + $0xf8] sm:$0xff] %vm631, %v630
      %s664 = smul.u32 32, %s14
      %p665 = scmp.lt.s32.totalorder %s664, 63
      %s666 = scalar_select %p665, %s664, 63
      %s667 = smul.addr %s666, 8
      %s668 = scalar_lea.vmem %s3, %s667
      // Predicated region
      $region33: #{d_forward.5} parent=31 // pred_check
        %p669 = pneg %p100
      $region34: #{d_forward.5} parent=31 // pred_check_branch
        %671 = sbr.rel (%p669) target = $region36
      $region35: #{d_forward.5} parent=31 // pred_region
        %s672 = smul.u32 32, %s14
      $region36: #{d_forward.5} parent=31 // pred_fallthru
        _
    $region32: #{d_forward.5} parent=5 // pred_fallthru
      _
    %p673 = scmp.le.s32.totalorder 2, %s9
    // Predicated region
    $region37: #{d_forward.5} parent=5 // pred_check
      %p674 = pneg %p673
    $region38: #{d_forward.5} parent=5 // pred_check_branch
      %676 = sbr.rel (%p674) target = $region40
    $region39: #{d_forward.5} parent=5 // pred_region
      %s677 = ssub.s32 %s9, 2
      // Predicated region
      $region41: #{d_forward.5} parent=39 // pred_check
        %p678 = pneg %p106
      $region42: #{d_forward.5} parent=39 // pred_check_branch
        %680 = sbr.rel (%p678) target = $region44
      $region43: #{d_forward.5} parent=39 // pred_region
        %s681 = smul.u32 32, %s15
        %p682 = scmp.lt.s32.totalorder %s681, 63
        %s683 = scalar_select %p682, %s681, 63
        %s684 = smul.addr %s683, 8
        %s685 = scalar_lea.vmem %s3, %s684
      $region44: #{d_forward.5} parent=39 // pred_fallthru
        _
    $region40: #{d_forward.5} parent=5 // pred_fallthru
      _
  $region6: #{d_forward.5} parent=0 // loop_footer
    %s13 = sadd.s32 1, %s9
  $region7: #{d_forward.5} parent=0 // loop_footer_branch
    %8 = sbr.rel target = $region3
  $region8: #{d_forward.5} parent=0 // loop_exit
    _

// kernel: d_forward.6
$region0: #{d_forward.6}
  #allocation0 [shape = 'u32[]', space=smem, size = 0x4, offset = 0x4, fixed_abs, tag = 'smem constant byte address 0x4 - core index']
  #allocation1 [shape = 'u32[144,128]{1,0:T(1,128)}', space=vmem, size = 0x12000, scoped, tag = 'internal scratch']
  %s0 = inlined_call_operand.vmem [shape: bf16[128,1664], index: 0, kind: input, shape index: {}]
  %s1 = inlined_call_operand.vmem [shape: bf16[1664,128], index: 1, kind: input, shape index: {}]
  %s2 = inlined_call_operand.vmem [shape: f32[1,128], index: 2, kind: input, shape index: {}]
  %s3 = inlined_call_operand.vmem [shape: f32[128,128], index: 3, kind: output, shape index: {0}]
  %s4 = inlined_call_operand.vmem [shape: f32[1,128], index: 4, kind: output, shape index: {1}]
  %s5 = inlined_call_operand.vmem [shape: f32[1,128], index: 5, kind: output, shape index: {2}]
  %6 = xla_tuple %s3, %s4, %s5
  %s7 = sld [smem:[#allocation0]]
  $region42: #{d_forward.6} parent=0
    _
  %s9 = ssub.s32 1, %s7
  %s10 = scalar_select 0, %s9, %s7
  // Predicated region
  $region2: #{d_forward.6} parent=0 // pred_check
    _
  $region3: #{d_forward.6} parent=0 // pred_check_branch
    %12 = sbr.rel (0) target = $region5
  $region4: #{d_forward.6} parent=0 // pred_region
    _
  $region5: #{d_forward.6} parent=0 // pred_fallthru
    _
  // Predicated region
  $region6: #{d_forward.6} parent=0 // pred_check
    _
  $region7: #{d_forward.6} parent=0 // pred_check_branch
    %14 = sbr.rel (0) target = $region9
  $region8: #{d_forward.6} parent=0 // pred_region
    _
  $region9: #{d_forward.6} parent=0 // pred_fallthru
    _
  // Predicated region
  $region10: #{d_forward.6} parent=0 // pred_check
    _
  $region11: #{d_forward.6} parent=0 // pred_check_branch
    %16 = sbr.rel (0) target = $region13
  $region12: #{d_forward.6} parent=0 // pred_region
    _
  $region13: #{d_forward.6} parent=0 // pred_fallthru
    _
  %v18 = vld [vmem:[%s0] sm:$0xff]
  %v19 = vld [vmem:[%s0 + $0x8] sm:$0xff]
  %v20 = vld [vmem:[%s0 + $0x10] sm:$0xff]
  %v21 = vld [vmem:[%s0 + $0x18] sm:$0xff]
  %v22 = vld [vmem:[%s0 + $0x20] sm:$0xff]
  %v23 = vld [vmem:[%s0 + $0x28] sm:$0xff]
  %v24 = vld [vmem:[%s0 + $0x30] sm:$0xf]
  %v25 = vld [vmem:[%s0 + $0x34] sm:$0xff]
  %v26 = vld [vmem:[%s0 + $0x3c] sm:$0xff]
  %v27 = vld [vmem:[%s0 + $0x44] sm:$0xff]
  %v28 = vld [vmem:[%s0 + $0x4c] sm:$0xff]
  %v29 = vld [vmem:[%s0 + $0x54] sm:$0xff]
  %v30 = vld [vmem:[%s0 + $0x5c] sm:$0xff]
  %v31 = vld [vmem:[%s0 + $0x64] sm:$0xf]
  %v32 = vld [vmem:[%s0 + $0x68] sm:$0xff]
  %v33 = vld [vmem:[%s0 + $0x70] sm:$0xff]
  %v34 = vld [vmem:[%s0 + $0x78] sm:$0xff]
  %v35 = vld [vmem:[%s0 + $0x80] sm:$0xff]
  %v36 = vld [vmem:[%s0 + $0x88] sm:$0xff]
  %v37 = vld [vmem:[%s0 + $0x90] sm:$0xff]
  %v38 = vld [vmem:[%s0 + $0x98] sm:$0xf]
  %v39 = vld [vmem:[%s0 + $0x9c] sm:$0xff]
  %v40 = vld [vmem:[%s0 + $0xa4] sm:$0xff]
  %v41 = vld [vmem:[%s0 + $0xac] sm:$0xff]
  %v42 = vld [vmem:[%s0 + $0xb4] sm:$0xff]
  %v43 = vld [vmem:[%s0 + $0xbc] sm:$0xff]
  %v44 = vld [vmem:[%s0 + $0xc4] sm:$0xff]
  %v45 = vld [vmem:[%s0 + $0xcc] sm:$0xf]
  %v46 = vld [vmem:[%s0 + $0xd0] sm:$0xff]
  %v47 = vld [vmem:[%s0 + $0xd8] sm:$0xff]
  %v48 = vld [vmem:[%s0 + $0xe0] sm:$0xff]
  %v49 = vld [vmem:[%s0 + $0xe8] sm:$0xff]
  %v50 = vld [vmem:[%s0 + $0xf0] sm:$0xff]
  %v51 = vld [vmem:[%s0 + $0xf8] sm:$0xff]
  %v52 = vld [vmem:[%s0 + $0x100] sm:$0xf]
  %v53 = vld [vmem:[%s0 + $0x104] sm:$0xff]
  %v54 = vld [vmem:[%s0 + $0x10c] sm:$0xff]
  %v55 = vld [vmem:[%s0 + $0x114] sm:$0xff]
  %v56 = vld [vmem:[%s0 + $0x11c] sm:$0xff]
  %v57 = vld [vmem:[%s0 + $0x124] sm:$0xff]
  %v58 = vld [vmem:[%s0 + $0x12c] sm:$0xff]
  %v59 = vld [vmem:[%s0 + $0x134] sm:$0xf]
  %v60 = vld [vmem:[%s0 + $0x138] sm:$0xff]
  %v61 = vld [vmem:[%s0 + $0x140] sm:$0xff]
  %v62 = vld [vmem:[%s0 + $0x148] sm:$0xff]
  %v63 = vld [vmem:[%s0 + $0x150] sm:$0xff]
  %v64 = vld [vmem:[%s0 + $0x158] sm:$0xff]
  %v65 = vld [vmem:[%s0 + $0x160] sm:$0xff]
  %v66 = vld [vmem:[%s0 + $0x168] sm:$0xf]
  %v67 = vld [vmem:[%s0 + $0x16c] sm:$0xff]
  %v68 = vld [vmem:[%s0 + $0x174] sm:$0xff]
  %v69 = vld [vmem:[%s0 + $0x17c] sm:$0xff]
  %v70 = vld [vmem:[%s0 + $0x184] sm:$0xff]
  %v71 = vld [vmem:[%s0 + $0x18c] sm:$0xff]
  %v72 = vld [vmem:[%s0 + $0x194] sm:$0xff]
  %v73 = vld [vmem:[%s0 + $0x19c] sm:$0xf]
  %v74 = vld [vmem:[%s0 + $0x1a0] sm:$0xff]
  %v75 = vld [vmem:[%s0 + $0x1a8] sm:$0xff]
  %v76 = vld [vmem:[%s0 + $0x1b0] sm:$0xff]
  %v77 = vld [vmem:[%s0 + $0x1b8] sm:$0xff]
  %v78 = vld [vmem:[%s0 + $0x1c0] sm:$0xff]
  %v79 = vld [vmem:[%s0 + $0x1c8] sm:$0xff]
  %v80 = vld [vmem:[%s0 + $0x1d0] sm:$0xf]
  %v81 = vld [vmem:[%s0 + $0x1d4] sm:$0xff]
  %v82 = vld [vmem:[%s0 + $0x1dc] sm:$0xff]
  %v83 = vld [vmem:[%s0 + $0x1e4] sm:$0xff]
  %v84 = vld [vmem:[%s0 + $0x1ec] sm:$0xff]
  %v85 = vld [vmem:[%s0 + $0x1f4] sm:$0xff]
  %v86 = vld [vmem:[%s0 + $0x1fc] sm:$0xff]
  %v87 = vld [vmem:[%s0 + $0x204] sm:$0xf]
  %v88 = vld [vmem:[%s0 + $0x208] sm:$0xff]
  %v89 = vld [vmem:[%s0 + $0x210] sm:$0xff]
  %v90 = vld [vmem:[%s0 + $0x218] sm:$0xff]
  %v91 = vld [vmem:[%s0 + $0x220] sm:$0xff]
  %v92 = vld [vmem:[%s0 + $0x228] sm:$0xff]
  %v93 = vld [vmem:[%s0 + $0x230] sm:$0xff]
  %v94 = vld [vmem:[%s0 + $0x238] sm:$0xf]
  %v95 = vld [vmem:[%s0 + $0x23c] sm:$0xff]
  %v96 = vld [vmem:[%s0 + $0x244] sm:$0xff]
  %v97 = vld [vmem:[%s0 + $0x24c] sm:$0xff]
  %v98 = vld [vmem:[%s0 + $0x254] sm:$0xff]
  %v99 = vld [vmem:[%s0 + $0x25c] sm:$0xff]
  %v100 = vld [vmem:[%s0 + $0x264] sm:$0xff]
  %v101 = vld [vmem:[%s0 + $0x26c] sm:$0xf]
  %v102 = vld [vmem:[%s0 + $0x270] sm:$0xff]
  %v103 = vld [vmem:[%s0 + $0x278] sm:$0xff]
  %v104 = vld [vmem:[%s0 + $0x280] sm:$0xff]
  %v105 = vld [vmem:[%s0 + $0x288] sm:$0xff]
  %v106 = vld [vmem:[%s0 + $0x290] sm:$0xff]
  %v107 = vld [vmem:[%s0 + $0x298] sm:$0xff]
  %v108 = vld [vmem:[%s0 + $0x2a0] sm:$0xf]
  %v109 = vld [vmem:[%s0 + $0x2a4] sm:$0xff]
  %v110 = vld [vmem:[%s0 + $0x2ac] sm:$0xff]
  %v111 = vld [vmem:[%s0 + $0x2b4] sm:$0xff]
  %v112 = vld [vmem:[%s0 + $0x2bc] sm:$0xff]
  %v113 = vld [vmem:[%s0 + $0x2c4] sm:$0xff]
  %v114 = vld [vmem:[%s0 + $0x2cc] sm:$0xff]
  %v115 = vld [vmem:[%s0 + $0x2d4] sm:$0xf]
  %v116 = vld [vmem:[%s0 + $0x2d8] sm:$0xff]
  %v117 = vld [vmem:[%s0 + $0x2e0] sm:$0xff]
  %v118 = vld [vmem:[%s0 + $0x2e8] sm:$0xff]
  %v119 = vld [vmem:[%s0 + $0x2f0] sm:$0xff]
  %v120 = vld [vmem:[%s0 + $0x2f8] sm:$0xff]
  %v121 = vld [vmem:[%s0 + $0x300] sm:$0xff]
  %v122 = vld [vmem:[%s0 + $0x308] sm:$0xf]
  %v123 = vld [vmem:[%s0 + $0x30c] sm:$0xff]
  %v124 = vld [vmem:[%s0 + $0x314] sm:$0xff]
  %v125 = vld [vmem:[%s0 + $0x31c] sm:$0xff]
  %v126 = vld [vmem:[%s0 + $0x324] sm:$0xff]
  %v127 = vld [vmem:[%s0 + $0x32c] sm:$0xff]
  %v128 = vld [vmem:[%s0 + $0x334] sm:$0xff]
  %v129 = vld [vmem:[%s0 + $0x33c] sm:$0xf]
  %v130 = vld [vmem:[%s1] sm:$0xf]
  %v131 = vld [vmem:[%s1 + $0x4] sm:$0xf]
  %v132 = vld [vmem:[%s1 + $0x8] sm:$0xf]
  %v133 = vld [vmem:[%s1 + $0xc] sm:$0xf]
  %v134 = vld [vmem:[%s1 + $0x10] sm:$0xf]
  %v135 = vld [vmem:[%s1 + $0x14] sm:$0xf]
  %v136 = vld [vmem:[%s1 + $0x18] sm:$0xf]
  %v137 = vld [vmem:[%s1 + $0x1c] sm:$0xf]
  %v138 = vld [vmem:[%s1 + $0x20] sm:$0xf]
  %v139 = vld [vmem:[%s1 + $0x24] sm:$0xf]
  %v140 = vld [vmem:[%s1 + $0x28] sm:$0xf]
  %v141 = vld [vmem:[%s1 + $0x2c] sm:$0xf]
  %v142 = vld [vmem:[%s1 + $0x30] sm:$0xf]
  %v143 = vld [vmem:[%s1 + $0x34] sm:$0xf]
  %v144 = vld [vmem:[%s1 + $0x38] sm:$0xf]
  %v145 = vld [vmem:[%s1 + $0x3c] sm:$0xf]
  %v146 = vld [vmem:[%s1 + $0x40] sm:$0xf]
  %v147 = vld [vmem:[%s1 + $0x44] sm:$0xf]
  %v148 = vld [vmem:[%s1 + $0x48] sm:$0xf]
  %v149 = vld [vmem:[%s1 + $0x4c] sm:$0xf]
  %v150 = vld [vmem:[%s1 + $0x50] sm:$0xf]
  %v151 = vld [vmem:[%s1 + $0x54] sm:$0xf]
  %v152 = vld [vmem:[%s1 + $0x58] sm:$0xf]
  %v153 = vld [vmem:[%s1 + $0x5c] sm:$0xf]
  %v154 = vld [vmem:[%s1 + $0x60] sm:$0xf]
  %v155 = vld [vmem:[%s1 + $0x64] sm:$0xf]
  %v156 = vld [vmem:[%s1 + $0x68] sm:$0xf]
  %v157 = vld [vmem:[%s1 + $0x6c] sm:$0xf]
  %v158 = vld [vmem:[%s1 + $0x70] sm:$0xf]
  %v159 = vld [vmem:[%s1 + $0x74] sm:$0xf]
  %v160 = vld [vmem:[%s1 + $0x78] sm:$0xf]
  %v161 = vld [vmem:[%s1 + $0x7c] sm:$0xf]
  %v162 = vld [vmem:[%s1 + $0x80] sm:$0xf]
  %v163 = vld [vmem:[%s1 + $0x84] sm:$0xf]
  %v164 = vld [vmem:[%s1 + $0x88] sm:$0xf]
  %v165 = vld [vmem:[%s1 + $0x8c] sm:$0xf]
  %v166 = vld [vmem:[%s1 + $0x90] sm:$0xf]
  %v167 = vld [vmem:[%s1 + $0x94] sm:$0xf]
  %v168 = vld [vmem:[%s1 + $0x98] sm:$0xf]
  %v169 = vld [vmem:[%s1 + $0x9c] sm:$0xf]
  %v170 = vld [vmem:[%s1 + $0xa0] sm:$0xf]
  %v171 = vld [vmem:[%s1 + $0xa4] sm:$0xf]
  %v172 = vld [vmem:[%s1 + $0xa8] sm:$0xf]
  %v173 = vld [vmem:[%s1 + $0xac] sm:$0xf]
  %v174 = vld [vmem:[%s1 + $0xb0] sm:$0xf]
  %v175 = vld [vmem:[%s1 + $0xb4] sm:$0xf]
  %v176 = vld [vmem:[%s1 + $0xb8] sm:$0xf]
  %v177 = vld [vmem:[%s1 + $0xbc] sm:$0xf]
  %v178 = vld [vmem:[%s1 + $0xc0] sm:$0xf]
  %v179 = vld [vmem:[%s1 + $0xc4] sm:$0xf]
  %v180 = vld [vmem:[%s1 + $0xc8] sm:$0xf]
  %v181 = vld [vmem:[%s1 + $0xcc] sm:$0xf]
  %v182 = vld [vmem:[%s1 + $0xd0] sm:$0xf]
  %v183 = vld [vmem:[%s1 + $0xd4] sm:$0xf]
  %v184 = vld [vmem:[%s1 + $0xd8] sm:$0xf]
  %v185 = vld [vmem:[%s1 + $0xdc] sm:$0xf]
  %v186 = vld [vmem:[%s1 + $0xe0] sm:$0xf]
  %v187 = vld [vmem:[%s1 + $0xe4] sm:$0xf]
  %v188 = vld [vmem:[%s1 + $0xe8] sm:$0xf]
  %v189 = vld [vmem:[%s1 + $0xec] sm:$0xf]
  %v190 = vld [vmem:[%s1 + $0xf0] sm:$0xf]
  %v191 = vld [vmem:[%s1 + $0xf4] sm:$0xf]
  %v192 = vld [vmem:[%s1 + $0xf8] sm:$0xf]
  %v193 = vld [vmem:[%s1 + $0xfc] sm:$0xf]
  %v194 = vld [vmem:[%s1 + $0x100] sm:$0xf]
  %v195 = vld [vmem:[%s1 + $0x104] sm:$0xf]
  %v196 = vld [vmem:[%s1 + $0x108] sm:$0xf]
  %v197 = vld [vmem:[%s1 + $0x10c] sm:$0xf]
  %v198 = vld [vmem:[%s1 + $0x110] sm:$0xf]
  %v199 = vld [vmem:[%s1 + $0x114] sm:$0xf]
  %v200 = vld [vmem:[%s1 + $0x118] sm:$0xf]
  %v201 = vld [vmem:[%s1 + $0x11c] sm:$0xf]
  %v202 = vld [vmem:[%s1 + $0x120] sm:$0xf]
  %v203 = vld [vmem:[%s1 + $0x124] sm:$0xf]
  %v204 = vld [vmem:[%s1 + $0x128] sm:$0xf]
  %v205 = vld [vmem:[%s1 + $0x12c] sm:$0xf]
  %v206 = vld [vmem:[%s1 + $0x130] sm:$0xf]
  %v207 = vld [vmem:[%s1 + $0x134] sm:$0xf]
  %v208 = vld [vmem:[%s1 + $0x138] sm:$0xf]
  %v209 = vld [vmem:[%s1 + $0x13c] sm:$0xf]
  %v210 = vld [vmem:[%s1 + $0x140] sm:$0xf]
  %v211 = vld [vmem:[%s1 + $0x144] sm:$0xf]
  %v212 = vld [vmem:[%s1 + $0x148] sm:$0xf]
  %v213 = vld [vmem:[%s1 + $0x14c] sm:$0xf]
  %v214 = vld [vmem:[%s1 + $0x150] sm:$0xf]
  %v215 = vld [vmem:[%s1 + $0x154] sm:$0xf]
  %v216 = vld [vmem:[%s1 + $0x158] sm:$0xf]
  %v217 = vld [vmem:[%s1 + $0x15c] sm:$0xf]
  %v218 = vld [vmem:[%s1 + $0x160] sm:$0xf]
  %v219 = vld [vmem:[%s1 + $0x164] sm:$0xf]
  %v220 = vld [vmem:[%s1 + $0x168] sm:$0xf]
  %v221 = vld [vmem:[%s1 + $0x16c] sm:$0xf]
  %v222 = vld [vmem:[%s1 + $0x170] sm:$0xf]
  %v223 = vld [vmem:[%s1 + $0x174] sm:$0xf]
  %v224 = vld [vmem:[%s1 + $0x178] sm:$0xf]
  %v225 = vld [vmem:[%s1 + $0x17c] sm:$0xf]
  %v226 = vld [vmem:[%s1 + $0x180] sm:$0xf]
  %v227 = vld [vmem:[%s1 + $0x184] sm:$0xf]
  %v228 = vld [vmem:[%s1 + $0x188] sm:$0xf]
  %v229 = vld [vmem:[%s1 + $0x18c] sm:$0xf]
  %v230 = vld [vmem:[%s1 + $0x190] sm:$0xf]
  %v231 = vld [vmem:[%s1 + $0x194] sm:$0xf]
  %v232 = vld [vmem:[%s1 + $0x198] sm:$0xf]
  %v233 = vld [vmem:[%s1 + $0x19c] sm:$0xf]
  %v234 = vld [vmem:[%s1 + $0x1a0] sm:$0xf]
  %v235 = vld [vmem:[%s1 + $0x1a4] sm:$0xf]
  %v236 = vld [vmem:[%s1 + $0x1a8] sm:$0xf]
  %v237 = vld [vmem:[%s1 + $0x1ac] sm:$0xf]
  %v238 = vld [vmem:[%s1 + $0x1b0] sm:$0xf]
  %v239 = vld [vmem:[%s1 + $0x1b4] sm:$0xf]
  %v240 = vld [vmem:[%s1 + $0x1b8] sm:$0xf]
  %v241 = vld [vmem:[%s1 + $0x1bc] sm:$0xf]
  %v242 = vld [vmem:[%s1 + $0x1c0] sm:$0xf]
  %v243 = vld [vmem:[%s1 + $0x1c4] sm:$0xf]
  %v244 = vld [vmem:[%s1 + $0x1c8] sm:$0xf]
  %v245 = vld [vmem:[%s1 + $0x1cc] sm:$0xf]
  %v246 = vld [vmem:[%s1 + $0x1d0] sm:$0xf]
  %v247 = vld [vmem:[%s1 + $0x1d4] sm:$0xf]
  %v248 = vld [vmem:[%s1 + $0x1d8] sm:$0xf]
  %v249 = vld [vmem:[%s1 + $0x1dc] sm:$0xf]
  %v250 = vld [vmem:[%s1 + $0x1e0] sm:$0xf]
  %v251 = vld [vmem:[%s1 + $0x1e4] sm:$0xf]
  %v252 = vld [vmem:[%s1 + $0x1e8] sm:$0xf]
  %v253 = vld [vmem:[%s1 + $0x1ec] sm:$0xf]
  %v254 = vld [vmem:[%s1 + $0x1f0] sm:$0xf]
  %v255 = vld [vmem:[%s1 + $0x1f4] sm:$0xf]
  %v256 = vld [vmem:[%s1 + $0x1f8] sm:$0xf]
  %v257 = vld [vmem:[%s1 + $0x1fc] sm:$0xf]
  %v258 = vld [vmem:[%s1 + $0x200] sm:$0xf]
  %v259 = vld [vmem:[%s1 + $0x204] sm:$0xf]
  %v260 = vld [vmem:[%s1 + $0x208] sm:$0xf]
  %v261 = vld [vmem:[%s1 + $0x20c] sm:$0xf]
  %v262 = vld [vmem:[%s1 + $0x210] sm:$0xf]
  %v263 = vld [vmem:[%s1 + $0x214] sm:$0xf]
  %v264 = vld [vmem:[%s1 + $0x218] sm:$0xf]
  %v265 = vld [vmem:[%s1 + $0x21c] sm:$0xf]
  %v266 = vld [vmem:[%s1 + $0x220] sm:$0xf]
  %v267 = vld [vmem:[%s1 + $0x224] sm:$0xf]
  %v268 = vld [vmem:[%s1 + $0x228] sm:$0xf]
  %v269 = vld [vmem:[%s1 + $0x22c] sm:$0xf]
  %v270 = vld [vmem:[%s1 + $0x230] sm:$0xf]
  %v271 = vld [vmem:[%s1 + $0x234] sm:$0xf]
  %v272 = vld [vmem:[%s1 + $0x238] sm:$0xf]
  %v273 = vld [vmem:[%s1 + $0x23c] sm:$0xf]
  %v274 = vld [vmem:[%s1 + $0x240] sm:$0xf]
  %v275 = vld [vmem:[%s1 + $0x244] sm:$0xf]
  %v276 = vld [vmem:[%s1 + $0x248] sm:$0xf]
  %v277 = vld [vmem:[%s1 + $0x24c] sm:$0xf]
  %v278 = vld [vmem:[%s1 + $0x250] sm:$0xf]
  %v279 = vld [vmem:[%s1 + $0x254] sm:$0xf]
  %v280 = vld [vmem:[%s1 + $0x258] sm:$0xf]
  %v281 = vld [vmem:[%s1 + $0x25c] sm:$0xf]
  %v282 = vld [vmem:[%s1 + $0x260] sm:$0xf]
  %v283 = vld [vmem:[%s1 + $0x264] sm:$0xf]
  %v284 = vld [vmem:[%s1 + $0x268] sm:$0xf]
  %v285 = vld [vmem:[%s1 + $0x26c] sm:$0xf]
  %v286 = vld [vmem:[%s1 + $0x270] sm:$0xf]
  %v287 = vld [vmem:[%s1 + $0x274] sm:$0xf]
  %v288 = vld [vmem:[%s1 + $0x278] sm:$0xf]
  %v289 = vld [vmem:[%s1 + $0x27c] sm:$0xf]
  %v290 = vld [vmem:[%s1 + $0x280] sm:$0xf]
  %v291 = vld [vmem:[%s1 + $0x284] sm:$0xf]
  %v292 = vld [vmem:[%s1 + $0x288] sm:$0xf]
  %v293 = vld [vmem:[%s1 + $0x28c] sm:$0xf]
  %v294 = vld [vmem:[%s1 + $0x290] sm:$0xf]
  %v295 = vld [vmem:[%s1 + $0x294] sm:$0xf]
  %v296 = vld [vmem:[%s1 + $0x298] sm:$0xf]
  %v297 = vld [vmem:[%s1 + $0x29c] sm:$0xf]
  %v298 = vld [vmem:[%s1 + $0x2a0] sm:$0xf]
  %v299 = vld [vmem:[%s1 + $0x2a4] sm:$0xf]
  %v300 = vld [vmem:[%s1 + $0x2a8] sm:$0xf]
  %v301 = vld [vmem:[%s1 + $0x2ac] sm:$0xf]
  %v302 = vld [vmem:[%s1 + $0x2b0] sm:$0xf]
  %v303 = vld [vmem:[%s1 + $0x2b4] sm:$0xf]
  %v304 = vld [vmem:[%s1 + $0x2b8] sm:$0xf]
  %v305 = vld [vmem:[%s1 + $0x2bc] sm:$0xf]
  %v306 = vld [vmem:[%s1 + $0x2c0] sm:$0xf]
  %v307 = vld [vmem:[%s1 + $0x2c4] sm:$0xf]
  %v308 = vld [vmem:[%s1 + $0x2c8] sm:$0xf]
  %v309 = vld [vmem:[%s1 + $0x2cc] sm:$0xf]
  %v310 = vld [vmem:[%s1 + $0x2d0] sm:$0xf]
  %v311 = vld [vmem:[%s1 + $0x2d4] sm:$0xf]
  %v312 = vld [vmem:[%s1 + $0x2d8] sm:$0xf]
  %v313 = vld [vmem:[%s1 + $0x2dc] sm:$0xf]
  %v314 = vld [vmem:[%s1 + $0x2e0] sm:$0xf]
  %v315 = vld [vmem:[%s1 + $0x2e4] sm:$0xf]
  %v316 = vld [vmem:[%s1 + $0x2e8] sm:$0xf]
  %v317 = vld [vmem:[%s1 + $0x2ec] sm:$0xf]
  %v318 = vld [vmem:[%s1 + $0x2f0] sm:$0xf]
  %v319 = vld [vmem:[%s1 + $0x2f4] sm:$0xf]
  %v320 = vld [vmem:[%s1 + $0x2f8] sm:$0xf]
  %v321 = vld [vmem:[%s1 + $0x2fc] sm:$0xf]
  %v322 = vld [vmem:[%s1 + $0x300] sm:$0xf]
  %v323 = vld [vmem:[%s1 + $0x304] sm:$0xf]
  %v324 = vld [vmem:[%s1 + $0x308] sm:$0xf]
  %v325 = vld [vmem:[%s1 + $0x30c] sm:$0xf]
  %v326 = vld [vmem:[%s1 + $0x310] sm:$0xf]
  %v327 = vld [vmem:[%s1 + $0x314] sm:$0xf]
  %v328 = vld [vmem:[%s1 + $0x318] sm:$0xf]
  %v329 = vld [vmem:[%s1 + $0x31c] sm:$0xf]
  %v330 = vld [vmem:[%s1 + $0x320] sm:$0xf]
  %v331 = vld [vmem:[%s1 + $0x324] sm:$0xf]
  %v332 = vld [vmem:[%s1 + $0x328] sm:$0xf]
  %v333 = vld [vmem:[%s1 + $0x32c] sm:$0xf]
  %v334 = vld [vmem:[%s1 + $0x330] sm:$0xf]
  %v335 = vld [vmem:[%s1 + $0x334] sm:$0xf]
  %v336 = vld [vmem:[%s1 + $0x338] sm:$0xf]
  %v337 = vld [vmem:[%s1 + $0x33c] sm:$0xf]
  %v338 = vld [vmem:[%s2] sm:$0x1]
  %v340 = vlaneseq
  %v341 = vshrl.u32 %v340, 7
  %v342 = vsub.s32 0, %v341
  %v343 = vrot.slane %v338, %v342
  %v457 = vunpack.c.l.b16 %v18
  %v458 = vunpack.c.h.b16 %v18
  %v459 = vunpack.c.l.b16 %v19
  %v460 = vunpack.c.h.b16 %v19
  %v461 = vunpack.c.l.b16 %v20
  %v462 = vunpack.c.h.b16 %v20
  %v463 = vunpack.c.l.b16 %v21
  %v464 = vunpack.c.h.b16 %v21
  %v465 = vunpack.c.l.b16 %v22
  %v466 = vunpack.c.h.b16 %v22
  %v467 = vunpack.c.l.b16 %v23
  %v468 = vunpack.c.h.b16 %v23
  %v469 = vunpack.c.l.b16 %v24
  %v470 = vunpack.c.l.b16 %v25
  %v471 = vunpack.c.h.b16 %v25
  %v472 = vunpack.c.l.b16 %v26
  %v473 = vunpack.c.h.b16 %v26
  %v474 = vunpack.c.l.b16 %v27
  %v475 = vunpack.c.h.b16 %v27
  %v476 = vunpack.c.l.b16 %v28
  %v477 = vunpack.c.h.b16 %v28
  %v478 = vunpack.c.l.b16 %v29
  %v479 = vunpack.c.h.b16 %v29
  %v480 = vunpack.c.l.b16 %v30
  %v481 = vunpack.c.h.b16 %v30
  %v482 = vunpack.c.l.b16 %v31
  %v483 = vunpack.c.l.b16 %v32
  %v484 = vunpack.c.h.b16 %v32
  %v485 = vunpack.c.l.b16 %v33
  %v486 = vunpack.c.h.b16 %v33
  %v487 = vunpack.c.l.b16 %v34
  %v488 = vunpack.c.h.b16 %v34
  %v489 = vunpack.c.l.b16 %v35
  %v490 = vunpack.c.h.b16 %v35
  %v491 = vunpack.c.l.b16 %v36
  %v492 = vunpack.c.h.b16 %v36
  %v493 = vunpack.c.l.b16 %v37
  %v494 = vunpack.c.h.b16 %v37
  %v495 = vunpack.c.l.b16 %v38
  %v496 = vunpack.c.l.b16 %v39
  %v497 = vunpack.c.h.b16 %v39
  %v498 = vunpack.c.l.b16 %v40
  %v499 = vunpack.c.h.b16 %v40
  %v500 = vunpack.c.l.b16 %v41
  %v501 = vunpack.c.h.b16 %v41
  %v502 = vunpack.c.l.b16 %v42
  %v503 = vunpack.c.h.b16 %v42
  %v504 = vunpack.c.l.b16 %v43
  %v505 = vunpack.c.h.b16 %v43
  %v506 = vunpack.c.l.b16 %v44
  %v507 = vunpack.c.h.b16 %v44
  %v508 = vunpack.c.l.b16 %v45
  %v509 = vunpack.c.l.b16 %v46
  %v510 = vunpack.c.h.b16 %v46
  %v511 = vunpack.c.l.b16 %v47
  %v512 = vunpack.c.h.b16 %v47
  %v513 = vunpack.c.l.b16 %v48
  %v514 = vunpack.c.h.b16 %v48
  %v515 = vunpack.c.l.b16 %v49
  %v516 = vunpack.c.h.b16 %v49
  %v517 = vunpack.c.l.b16 %v50
  %v518 = vunpack.c.h.b16 %v50
  %v519 = vunpack.c.l.b16 %v51
  %v520 = vunpack.c.h.b16 %v51
  %v521 = vunpack.c.l.b16 %v52
  %v522 = vunpack.c.l.b16 %v53
  %v523 = vunpack.c.h.b16 %v53
  %v524 = vunpack.c.l.b16 %v54
  %v525 = vunpack.c.h.b16 %v54
  %v526 = vunpack.c.l.b16 %v55
  %v527 = vunpack.c.h.b16 %v55
  %v528 = vunpack.c.l.b16 %v56
  %v529 = vunpack.c.h.b16 %v56
  %v530 = vunpack.c.l.b16 %v57
  %v531 = vunpack.c.h.b16 %v57
  %v532 = vunpack.c.l.b16 %v58
  %v533 = vunpack.c.h.b16 %v58
  %v534 = vunpack.c.l.b16 %v59
  %v535 = vunpack.c.l.b16 %v60
  %v536 = vunpack.c.h.b16 %v60
  %v537 = vunpack.c.l.b16 %v61
  %v538 = vunpack.c.h.b16 %v61
  %v539 = vunpack.c.l.b16 %v62
  %v540 = vunpack.c.h.b16 %v62
  %v541 = vunpack.c.l.b16 %v63
  %v542 = vunpack.c.h.b16 %v63
  %v543 = vunpack.c.l.b16 %v64
  %v544 = vunpack.c.h.b16 %v64
  %v545 = vunpack.c.l.b16 %v65
  %v546 = vunpack.c.h.b16 %v65
  %v547 = vunpack.c.l.b16 %v66
  %v548 = vunpack.c.l.b16 %v67
  %v549 = vunpack.c.h.b16 %v67
  %v550 = vunpack.c.l.b16 %v68
  %v551 = vunpack.c.h.b16 %v68
  %v552 = vunpack.c.l.b16 %v69
  %v553 = vunpack.c.h.b16 %v69
  %v554 = vunpack.c.l.b16 %v70
  %v555 = vunpack.c.h.b16 %v70
  %v556 = vunpack.c.l.b16 %v71
  %v557 = vunpack.c.h.b16 %v71
  %v558 = vunpack.c.l.b16 %v72
  %v559 = vunpack.c.h.b16 %v72
  %v560 = vunpack.c.l.b16 %v73
  %v561 = vunpack.c.l.b16 %v74
  %v562 = vunpack.c.h.b16 %v74
  %v563 = vunpack.c.l.b16 %v75
  %v564 = vunpack.c.h.b16 %v75
  %v565 = vunpack.c.l.b16 %v76
  %v566 = vunpack.c.h.b16 %v76
  %v567 = vunpack.c.l.b16 %v77
  %v568 = vunpack.c.h.b16 %v77
  %v569 = vunpack.c.l.b16 %v78
  %v570 = vunpack.c.h.b16 %v78
  %v571 = vunpack.c.l.b16 %v79
  %v572 = vunpack.c.h.b16 %v79
  %v573 = vunpack.c.l.b16 %v80
  %v574 = vunpack.c.l.b16 %v81
  %v575 = vunpack.c.h.b16 %v81
  %v576 = vunpack.c.l.b16 %v82
  %v577 = vunpack.c.h.b16 %v82
  %v578 = vunpack.c.l.b16 %v83
  %v579 = vunpack.c.h.b16 %v83
  %v580 = vunpack.c.l.b16 %v84
  %v581 = vunpack.c.h.b16 %v84
  %v582 = vunpack.c.l.b16 %v85
  %v583 = vunpack.c.h.b16 %v85
  %v584 = vunpack.c.l.b16 %v86
  %v585 = vunpack.c.h.b16 %v86
  %v586 = vunpack.c.l.b16 %v87
  %v587 = vunpack.c.l.b16 %v88
  %v588 = vunpack.c.h.b16 %v88
  %v589 = vunpack.c.l.b16 %v89
  %v590 = vunpack.c.h.b16 %v89
  %v591 = vunpack.c.l.b16 %v90
  %v592 = vunpack.c.h.b16 %v90
  %v593 = vunpack.c.l.b16 %v91
  %v594 = vunpack.c.h.b16 %v91
  %v595 = vunpack.c.l.b16 %v92
  %v596 = vunpack.c.h.b16 %v92
  %v597 = vunpack.c.l.b16 %v93
  %v598 = vunpack.c.h.b16 %v93
  %v599 = vunpack.c.l.b16 %v94
  %v600 = vunpack.c.l.b16 %v95
  %v601 = vunpack.c.h.b16 %v95
  %v602 = vunpack.c.l.b16 %v96
  %v603 = vunpack.c.h.b16 %v96
  %v604 = vunpack.c.l.b16 %v97
  %v605 = vunpack.c.h.b16 %v97
  %v606 = vunpack.c.l.b16 %v98
  %v607 = vunpack.c.h.b16 %v98
  %v608 = vunpack.c.l.b16 %v99
  %v609 = vunpack.c.h.b16 %v99
  %v610 = vunpack.c.l.b16 %v100
  %v611 = vunpack.c.h.b16 %v100
  %v612 = vunpack.c.l.b16 %v101
  %v613 = vunpack.c.l.b16 %v102
  %v614 = vunpack.c.h.b16 %v102
  %v615 = vunpack.c.l.b16 %v103
  %v616 = vunpack.c.h.b16 %v103
  %v617 = vunpack.c.l.b16 %v104
  %v618 = vunpack.c.h.b16 %v104
  %v619 = vunpack.c.l.b16 %v105
  %v620 = vunpack.c.h.b16 %v105
  %v621 = vunpack.c.l.b16 %v106
  %v622 = vunpack.c.h.b16 %v106
  %v623 = vunpack.c.l.b16 %v107
  %v624 = vunpack.c.h.b16 %v107
  %v625 = vunpack.c.l.b16 %v108
  %v626 = vunpack.c.l.b16 %v109
  %v627 = vunpack.c.h.b16 %v109
  %v628 = vunpack.c.l.b16 %v110
  %v629 = vunpack.c.h.b16 %v110
  %v630 = vunpack.c.l.b16 %v111
  %v631 = vunpack.c.h.b16 %v111
  %v632 = vunpack.c.l.b16 %v112
  %v633 = vunpack.c.h.b16 %v112
  %v634 = vunpack.c.l.b16 %v113
  %v635 = vunpack.c.h.b16 %v113
  %v636 = vunpack.c.l.b16 %v114
  %v637 = vunpack.c.h.b16 %v114
  %v638 = vunpack.c.l.b16 %v115
  %v639 = vunpack.c.l.b16 %v116
  %v640 = vunpack.c.h.b16 %v116
  %v641 = vunpack.c.l.b16 %v117
  %v642 = vunpack.c.h.b16 %v117
  %v643 = vunpack.c.l.b16 %v118
  %v644 = vunpack.c.h.b16 %v118
  %v645 = vunpack.c.l.b16 %v119
  %v646 = vunpack.c.h.b16 %v119
  %v647 = vunpack.c.l.b16 %v120
  %v648 = vunpack.c.h.b16 %v120
  %v649 = vunpack.c.l.b16 %v121
  %v650 = vunpack.c.h.b16 %v121
  %v651 = vunpack.c.l.b16 %v122
  %v652 = vunpack.c.l.b16 %v123
  %v653 = vunpack.c.h.b16 %v123
  %v654 = vunpack.c.l.b16 %v124
  %v655 = vunpack.c.h.b16 %v124
  %v656 = vunpack.c.l.b16 %v125
  %v657 = vunpack.c.h.b16 %v125
  %v658 = vunpack.c.l.b16 %v126
  %v659 = vunpack.c.h.b16 %v126
  %v660 = vunpack.c.l.b16 %v127
  %v661 = vunpack.c.h.b16 %v127
  %v662 = vunpack.c.l.b16 %v128
  %v663 = vunpack.c.h.b16 %v128
  %v664 = vunpack.c.l.b16 %v129
  %v665 = vpack.c.b16 %v470, %v457
  %v666 = vpack.c.b16 %v471, %v458
  %v667 = vpack.c.b16 %v472, %v459
  %v668 = vpack.c.b16 %v473, %v460
  %v669 = vpack.c.b16 %v474, %v461
  %v670 = vpack.c.b16 %v475, %v462
  %v671 = vpack.c.b16 %v476, %v463
  %v672 = vpack.c.b16 %v477, %v464
  %v673 = vpack.c.b16 %v478, %v465
  %v674 = vpack.c.b16 %v479, %v466
  %v675 = vpack.c.b16 %v480, %v467
  %v676 = vpack.c.b16 %v481, %v468
  %v677 = vpack.c.b16 %v482, %v469
  %v678 = vpack.c.b16 %v496, %v483
  %v679 = vpack.c.b16 %v497, %v484
  %v680 = vpack.c.b16 %v498, %v485
  %v681 = vpack.c.b16 %v499, %v486
  %v682 = vpack.c.b16 %v500, %v487
  %v683 = vpack.c.b16 %v501, %v488
  %v684 = vpack.c.b16 %v502, %v489
  %v685 = vpack.c.b16 %v503, %v490
  %v686 = vpack.c.b16 %v504, %v491
  %v687 = vpack.c.b16 %v505, %v492
  %v688 = vpack.c.b16 %v506, %v493
  %v689 = vpack.c.b16 %v507, %v494
  %v690 = vpack.c.b16 %v508, %v495
  %v691 = vpack.c.b16 %v522, %v509
  %v692 = vpack.c.b16 %v523, %v510
  %v693 = vpack.c.b16 %v524, %v511
  %v694 = vpack.c.b16 %v525, %v512
  %v695 = vpack.c.b16 %v526, %v513
  %v696 = vpack.c.b16 %v527, %v514
  %v697 = vpack.c.b16 %v528, %v515
  %v698 = vpack.c.b16 %v529, %v516
  %v699 = vpack.c.b16 %v530, %v517
  %v700 = vpack.c.b16 %v531, %v518
  %v701 = vpack.c.b16 %v532, %v519
  %v702 = vpack.c.b16 %v533, %v520
  %v703 = vpack.c.b16 %v534, %v521
  %v704 = vpack.c.b16 %v548, %v535
  %v705 = vpack.c.b16 %v549, %v536
  %v706 = vpack.c.b16 %v550, %v537
  %v707 = vpack.c.b16 %v551, %v538
  %v708 = vpack.c.b16 %v552, %v539
  %v709 = vpack.c.b16 %v553, %v540
  %v710 = vpack.c.b16 %v554, %v541
  %v711 = vpack.c.b16 %v555, %v542
  %v712 = vpack.c.b16 %v556, %v543
  %v713 = vpack.c.b16 %v557, %v544
  %v714 = vpack.c.b16 %v558, %v545
  %v715 = vpack.c.b16 %v559, %v546
  %v716 = vpack.c.b16 %v560, %v547
  %v717 = vpack.c.b16 %v574, %v561
  %v718 = vpack.c.b16 %v575, %v562
  %v719 = vpack.c.b16 %v576, %v563
  %v720 = vpack.c.b16 %v577, %v564
  %v721 = vpack.c.b16 %v578, %v565
  %v722 = vpack.c.b16 %v579, %v566
  %v723 = vpack.c.b16 %v580, %v567
  %v724 = vpack.c.b16 %v581, %v568
  %v725 = vpack.c.b16 %v582, %v569
  %v726 = vpack.c.b16 %v583, %v570
  %v727 = vpack.c.b16 %v584, %v571
  %v728 = vpack.c.b16 %v585, %v572
  %v729 = vpack.c.b16 %v586, %v573
  %v730 = vpack.c.b16 %v600, %v587
  %v731 = vpack.c.b16 %v601, %v588
  %v732 = vpack.c.b16 %v602, %v589
  %v733 = vpack.c.b16 %v603, %v590
  %v734 = vpack.c.b16 %v604, %v591
  %v735 = vpack.c.b16 %v605, %v592
  %v736 = vpack.c.b16 %v606, %v593
  %v737 = vpack.c.b16 %v607, %v594
  %v738 = vpack.c.b16 %v608, %v595
  %v739 = vpack.c.b16 %v609, %v596
  %v740 = vpack.c.b16 %v610, %v597
  %v741 = vpack.c.b16 %v611, %v598
  %v742 = vpack.c.b16 %v612, %v599
  %v743 = vpack.c.b16 %v626, %v613
  %v744 = vpack.c.b16 %v627, %v614
  %v745 = vpack.c.b16 %v628, %v615
  %v746 = vpack.c.b16 %v629, %v616
  %v747 = vpack.c.b16 %v630, %v617
  %v748 = vpack.c.b16 %v631, %v618
  %v749 = vpack.c.b16 %v632, %v619
  %v750 = vpack.c.b16 %v633, %v620
  %v751 = vpack.c.b16 %v634, %v621
  %v752 = vpack.c.b16 %v635, %v622
  %v753 = vpack.c.b16 %v636, %v623
  %v754 = vpack.c.b16 %v637, %v624
  %v755 = vpack.c.b16 %v638, %v625
  %v756 = vpack.c.b16 %v652, %v639
  %v757 = vpack.c.b16 %v653, %v640
  %v758 = vpack.c.b16 %v654, %v641
  %v759 = vpack.c.b16 %v655, %v642
  %v760 = vpack.c.b16 %v656, %v643
  %v761 = vpack.c.b16 %v657, %v644
  %v762 = vpack.c.b16 %v658, %v645
  %v763 = vpack.c.b16 %v659, %v646
  %v764 = vpack.c.b16 %v660, %v647
  %v765 = vpack.c.b16 %v661, %v648
  %v766 = vpack.c.b16 %v662, %v649
  %v767 = vpack.c.b16 %v663, %v650
  %v768 = vpack.c.b16 %v664, %v651
  %v1081 = vunpack.c.l.b16 %v130
  %v1082 = vunpack.c.l.b16 %v131
  %v1083 = vunpack.c.l.b16 %v132
  %v1084 = vunpack.c.l.b16 %v133
  %v1085 = vunpack.c.l.b16 %v134
  %v1086 = vunpack.c.l.b16 %v135
  %v1087 = vunpack.c.l.b16 %v136
  %v1088 = vunpack.c.l.b16 %v137
  %v1089 = vunpack.c.l.b16 %v138
  %v1090 = vunpack.c.l.b16 %v139
  %v1091 = vunpack.c.l.b16 %v140
  %v1092 = vunpack.c.l.b16 %v141
  %v1093 = vunpack.c.l.b16 %v142
  %v1094 = vunpack.c.l.b16 %v143
  %v1095 = vunpack.c.l.b16 %v144
  %v1096 = vunpack.c.l.b16 %v145
  %v1097 = vunpack.c.l.b16 %v146
  %v1098 = vunpack.c.l.b16 %v147
  %v1099 = vunpack.c.l.b16 %v148
  %v1100 = vunpack.c.l.b16 %v149
  %v1101 = vunpack.c.l.b16 %v150
  %v1102 = vunpack.c.l.b16 %v151
  %v1103 = vunpack.c.l.b16 %v152
  %v1104 = vunpack.c.l.b16 %v153
  %v1105 = vunpack.c.l.b16 %v154
  %v1106 = vunpack.c.l.b16 %v155
  %v1107 = vunpack.c.l.b16 %v156
  %v1108 = vunpack.c.l.b16 %v157
  %v1109 = vunpack.c.l.b16 %v158
  %v1110 = vunpack.c.l.b16 %v159
  %v1111 = vunpack.c.l.b16 %v160
  %v1112 = vunpack.c.l.b16 %v161
  %v1113 = vunpack.c.l.b16 %v162
  %v1114 = vunpack.c.l.b16 %v163
  %v1115 = vunpack.c.l.b16 %v164
  %v1116 = vunpack.c.l.b16 %v165
  %v1117 = vunpack.c.l.b16 %v166
  %v1118 = vunpack.c.l.b16 %v167
  %v1119 = vunpack.c.l.b16 %v168
  %v1120 = vunpack.c.l.b16 %v169
  %v1121 = vunpack.c.l.b16 %v170
  %v1122 = vunpack.c.l.b16 %v171
  %v1123 = vunpack.c.l.b16 %v172
  %v1124 = vunpack.c.l.b16 %v173
  %v1125 = vunpack.c.l.b16 %v174
  %v1126 = vunpack.c.l.b16 %v175
  %v1127 = vunpack.c.l.b16 %v176
  %v1128 = vunpack.c.l.b16 %v177
  %v1129 = vunpack.c.l.b16 %v178
  %v1130 = vunpack.c.l.b16 %v179
  %v1131 = vunpack.c.l.b16 %v180
  %v1132 = vunpack.c.l.b16 %v181
  %v1133 = vunpack.c.l.b16 %v182
  %v1134 = vunpack.c.l.b16 %v183
  %v1135 = vunpack.c.l.b16 %v184
  %v1136 = vunpack.c.l.b16 %v185
  %v1137 = vunpack.c.l.b16 %v186
  %v1138 = vunpack.c.l.b16 %v187
  %v1139 = vunpack.c.l.b16 %v188
  %v1140 = vunpack.c.l.b16 %v189
  %v1141 = vunpack.c.l.b16 %v190
  %v1142 = vunpack.c.l.b16 %v191
  %v1143 = vunpack.c.l.b16 %v192
  %v1144 = vunpack.c.l.b16 %v193
  %v1145 = vunpack.c.l.b16 %v194
  %v1146 = vunpack.c.l.b16 %v195
  %v1147 = vunpack.c.l.b16 %v196
  %v1148 = vunpack.c.l.b16 %v197
  %v1149 = vunpack.c.l.b16 %v198
  %v1150 = vunpack.c.l.b16 %v199
  %v1151 = vunpack.c.l.b16 %v200
  %v1152 = vunpack.c.l.b16 %v201
  %v1153 = vunpack.c.l.b16 %v202
  %v1154 = vunpack.c.l.b16 %v203
  %v1155 = vunpack.c.l.b16 %v204
  %v1156 = vunpack.c.l.b16 %v205
  %v1157 = vunpack.c.l.b16 %v206
  %v1158 = vunpack.c.l.b16 %v207
  %v1159 = vunpack.c.l.b16 %v208
  %v1160 = vunpack.c.l.b16 %v209
  %v1161 = vunpack.c.l.b16 %v210
  %v1162 = vunpack.c.l.b16 %v211
  %v1163 = vunpack.c.l.b16 %v212
  %v1164 = vunpack.c.l.b16 %v213
  %v1165 = vunpack.c.l.b16 %v214
  %v1166 = vunpack.c.l.b16 %v215
  %v1167 = vunpack.c.l.b16 %v216
  %v1168 = vunpack.c.l.b16 %v217
  %v1169 = vunpack.c.l.b16 %v218
  %v1170 = vunpack.c.l.b16 %v219
  %v1171 = vunpack.c.l.b16 %v220
  %v1172 = vunpack.c.l.b16 %v221
  %v1173 = vunpack.c.l.b16 %v222
  %v1174 = vunpack.c.l.b16 %v223
  %v1175 = vunpack.c.l.b16 %v224
  %v1176 = vunpack.c.l.b16 %v225
  %v1177 = vunpack.c.l.b16 %v226
  %v1178 = vunpack.c.l.b16 %v227
  %v1179 = vunpack.c.l.b16 %v228
  %v1180 = vunpack.c.l.b16 %v229
  %v1181 = vunpack.c.l.b16 %v230
  %v1182 = vunpack.c.l.b16 %v231
  %v1183 = vunpack.c.l.b16 %v232
  %v1184 = vunpack.c.l.b16 %v233
  %v1185 = vunpack.c.l.b16 %v234
  %v1186 = vunpack.c.l.b16 %v235
  %v1187 = vunpack.c.l.b16 %v236
  %v1188 = vunpack.c.l.b16 %v237
  %v1189 = vunpack.c.l.b16 %v238
  %v1190 = vunpack.c.l.b16 %v239
  %v1191 = vunpack.c.l.b16 %v240
  %v1192 = vunpack.c.l.b16 %v241
  %v1193 = vunpack.c.l.b16 %v242
  %v1194 = vunpack.c.l.b16 %v243
  %v1195 = vunpack.c.l.b16 %v244
  %v1196 = vunpack.c.l.b16 %v245
  %v1197 = vunpack.c.l.b16 %v246
  %v1198 = vunpack.c.l.b16 %v247
  %v1199 = vunpack.c.l.b16 %v248
  %v1200 = vunpack.c.l.b16 %v249
  %v1201 = vunpack.c.l.b16 %v250
  %v1202 = vunpack.c.l.b16 %v251
  %v1203 = vunpack.c.l.b16 %v252
  %v1204 = vunpack.c.l.b16 %v253
  %v1205 = vunpack.c.l.b16 %v254
  %v1206 = vunpack.c.l.b16 %v255
  %v1207 = vunpack.c.l.b16 %v256
  %v1208 = vunpack.c.l.b16 %v257
  %v1209 = vunpack.c.l.b16 %v258
  %v1210 = vunpack.c.l.b16 %v259
  %v1211 = vunpack.c.l.b16 %v260
  %v1212 = vunpack.c.l.b16 %v261
  %v1213 = vunpack.c.l.b16 %v262
  %v1214 = vunpack.c.l.b16 %v263
  %v1215 = vunpack.c.l.b16 %v264
  %v1216 = vunpack.c.l.b16 %v265
  %v1217 = vunpack.c.l.b16 %v266
  %v1218 = vunpack.c.l.b16 %v267
  %v1219 = vunpack.c.l.b16 %v268
  %v1220 = vunpack.c.l.b16 %v269
  %v1221 = vunpack.c.l.b16 %v270
  %v1222 = vunpack.c.l.b16 %v271
  %v1223 = vunpack.c.l.b16 %v272
  %v1224 = vunpack.c.l.b16 %v273
  %v1225 = vunpack.c.l.b16 %v274
  %v1226 = vunpack.c.l.b16 %v275
  %v1227 = vunpack.c.l.b16 %v276
  %v1228 = vunpack.c.l.b16 %v277
  %v1229 = vunpack.c.l.b16 %v278
  %v1230 = vunpack.c.l.b16 %v279
  %v1231 = vunpack.c.l.b16 %v280
  %v1232 = vunpack.c.l.b16 %v281
  %v1233 = vunpack.c.l.b16 %v282
  %v1234 = vunpack.c.l.b16 %v283
  %v1235 = vunpack.c.l.b16 %v284
  %v1236 = vunpack.c.l.b16 %v285
  %v1237 = vunpack.c.l.b16 %v286
  %v1238 = vunpack.c.l.b16 %v287
  %v1239 = vunpack.c.l.b16 %v288
  %v1240 = vunpack.c.l.b16 %v289
  %v1241 = vunpack.c.l.b16 %v290
  %v1242 = vunpack.c.l.b16 %v291
  %v1243 = vunpack.c.l.b16 %v292
  %v1244 = vunpack.c.l.b16 %v293
  %v1245 = vunpack.c.l.b16 %v294
  %v1246 = vunpack.c.l.b16 %v295
  %v1247 = vunpack.c.l.b16 %v296
  %v1248 = vunpack.c.l.b16 %v297
  %v1249 = vunpack.c.l.b16 %v298
  %v1250 = vunpack.c.l.b16 %v299
  %v1251 = vunpack.c.l.b16 %v300
  %v1252 = vunpack.c.l.b16 %v301
  %v1253 = vunpack.c.l.b16 %v302
  %v1254 = vunpack.c.l.b16 %v303
  %v1255 = vunpack.c.l.b16 %v304
  %v1256 = vunpack.c.l.b16 %v305
  %v1257 = vunpack.c.l.b16 %v306
  %v1258 = vunpack.c.l.b16 %v307
  %v1259 = vunpack.c.l.b16 %v308
  %v1260 = vunpack.c.l.b16 %v309
  %v1261 = vunpack.c.l.b16 %v310
  %v1262 = vunpack.c.l.b16 %v311
  %v1263 = vunpack.c.l.b16 %v312
  %v1264 = vunpack.c.l.b16 %v313
  %v1265 = vunpack.c.l.b16 %v314
  %v1266 = vunpack.c.l.b16 %v315
  %v1267 = vunpack.c.l.b16 %v316
  %v1268 = vunpack.c.l.b16 %v317
  %v1269 = vunpack.c.l.b16 %v318
  %v1270 = vunpack.c.l.b16 %v319
  %v1271 = vunpack.c.l.b16 %v320
  %v1272 = vunpack.c.l.b16 %v321
  %v1273 = vunpack.c.l.b16 %v322
  %v1274 = vunpack.c.l.b16 %v323
  %v1275 = vunpack.c.l.b16 %v324
  %v1276 = vunpack.c.l.b16 %v325
  %v1277 = vunpack.c.l.b16 %v326
  %v1278 = vunpack.c.l.b16 %v327
  %v1279 = vunpack.c.l.b16 %v328
  %v1280 = vunpack.c.l.b16 %v329
  %v1281 = vunpack.c.l.b16 %v330
  %v1282 = vunpack.c.l.b16 %v331
  %v1283 = vunpack.c.l.b16 %v332
  %v1284 = vunpack.c.l.b16 %v333
  %v1285 = vunpack.c.l.b16 %v334
  %v1286 = vunpack.c.l.b16 %v335
  %v1287 = vunpack.c.l.b16 %v336
  %v1288 = vunpack.c.l.b16 %v337
  %v1289 = vpack.c.b16 %v1082, %v1081
  %v1290 = vpack.c.b16 %v1084, %v1083
  %v1291 = vpack.c.b16 %v1086, %v1085
  %v1292 = vpack.c.b16 %v1088, %v1087
  %v1293 = vpack.c.b16 %v1090, %v1089
  %v1294 = vpack.c.b16 %v1092, %v1091
  %v1295 = vpack.c.b16 %v1094, %v1093
  %v1296 = vpack.c.b16 %v1096, %v1095
  %v1297 = vpack.c.b16 %v1098, %v1097
  %v1298 = vpack.c.b16 %v1100, %v1099
  %v1299 = vpack.c.b16 %v1102, %v1101
  %v1300 = vpack.c.b16 %v1104, %v1103
  %v1301 = vpack.c.b16 %v1106, %v1105
  %v1302 = vpack.c.b16 %v1108, %v1107
  %v1303 = vpack.c.b16 %v1110, %v1109
  %v1304 = vpack.c.b16 %v1112, %v1111
  %v1305 = vpack.c.b16 %v1114, %v1113
  %v1306 = vpack.c.b16 %v1116, %v1115
  %v1307 = vpack.c.b16 %v1118, %v1117
  %v1308 = vpack.c.b16 %v1120, %v1119
  %v1309 = vpack.c.b16 %v1122, %v1121
  %v1310 = vpack.c.b16 %v1124, %v1123
  %v1311 = vpack.c.b16 %v1126, %v1125
  %v1312 = vpack.c.b16 %v1128, %v1127
  %v1313 = vpack.c.b16 %v1130, %v1129
  %v1314 = vpack.c.b16 %v1132, %v1131
  %v1315 = vpack.c.b16 %v1134, %v1133
  %v1316 = vpack.c.b16 %v1136, %v1135
  %v1317 = vpack.c.b16 %v1138, %v1137
  %v1318 = vpack.c.b16 %v1140, %v1139
  %v1319 = vpack.c.b16 %v1142, %v1141
  %v1320 = vpack.c.b16 %v1144, %v1143
  %v1321 = vpack.c.b16 %v1146, %v1145
  %v1322 = vpack.c.b16 %v1148, %v1147
  %v1323 = vpack.c.b16 %v1150, %v1149
  %v1324 = vpack.c.b16 %v1152, %v1151
  %v1325 = vpack.c.b16 %v1154, %v1153
  %v1326 = vpack.c.b16 %v1156, %v1155
  %v1327 = vpack.c.b16 %v1158, %v1157
  %v1328 = vpack.c.b16 %v1160, %v1159
  %v1329 = vpack.c.b16 %v1162, %v1161
  %v1330 = vpack.c.b16 %v1164, %v1163
  %v1331 = vpack.c.b16 %v1166, %v1165
  %v1332 = vpack.c.b16 %v1168, %v1167
  %v1333 = vpack.c.b16 %v1170, %v1169
  %v1334 = vpack.c.b16 %v1172, %v1171
  %v1335 = vpack.c.b16 %v1174, %v1173
  %v1336 = vpack.c.b16 %v1176, %v1175
  %v1337 = vpack.c.b16 %v1178, %v1177
  %v1338 = vpack.c.b16 %v1180, %v1179
  %v1339 = vpack.c.b16 %v1182, %v1181
  %v1340 = vpack.c.b16 %v1184, %v1183
  %v1341 = vpack.c.b16 %v1186, %v1185
  %v1342 = vpack.c.b16 %v1188, %v1187
  %v1343 = vpack.c.b16 %v1190, %v1189
  %v1344 = vpack.c.b16 %v1192, %v1191
  %v1345 = vpack.c.b16 %v1194, %v1193
  %v1346 = vpack.c.b16 %v1196, %v1195
  %v1347 = vpack.c.b16 %v1198, %v1197
  %v1348 = vpack.c.b16 %v1200, %v1199
  %v1349 = vpack.c.b16 %v1202, %v1201
  %v1350 = vpack.c.b16 %v1204, %v1203
  %v1351 = vpack.c.b16 %v1206, %v1205
  %v1352 = vpack.c.b16 %v1208, %v1207
  %v1353 = vpack.c.b16 %v1210, %v1209
  %v1354 = vpack.c.b16 %v1212, %v1211
  %v1355 = vpack.c.b16 %v1214, %v1213
  %v1356 = vpack.c.b16 %v1216, %v1215
  %v1357 = vpack.c.b16 %v1218, %v1217
  %v1358 = vpack.c.b16 %v1220, %v1219
  %v1359 = vpack.c.b16 %v1222, %v1221
  %v1360 = vpack.c.b16 %v1224, %v1223
  %v1361 = vpack.c.b16 %v1226, %v1225
  %v1362 = vpack.c.b16 %v1228, %v1227
  %v1363 = vpack.c.b16 %v1230, %v1229
  %v1364 = vpack.c.b16 %v1232, %v1231
  %v1365 = vpack.c.b16 %v1234, %v1233
  %v1366 = vpack.c.b16 %v1236, %v1235
  %v1367 = vpack.c.b16 %v1238, %v1237
  %v1368 = vpack.c.b16 %v1240, %v1239
  %v1369 = vpack.c.b16 %v1242, %v1241
  %v1370 = vpack.c.b16 %v1244, %v1243
  %v1371 = vpack.c.b16 %v1246, %v1245
  %v1372 = vpack.c.b16 %v1248, %v1247
  %v1373 = vpack.c.b16 %v1250, %v1249
  %v1374 = vpack.c.b16 %v1252, %v1251
  %v1375 = vpack.c.b16 %v1254, %v1253
  %v1376 = vpack.c.b16 %v1256, %v1255
  %v1377 = vpack.c.b16 %v1258, %v1257
  %v1378 = vpack.c.b16 %v1260, %v1259
  %v1379 = vpack.c.b16 %v1262, %v1261
  %v1380 = vpack.c.b16 %v1264, %v1263
  %v1381 = vpack.c.b16 %v1266, %v1265
  %v1382 = vpack.c.b16 %v1268, %v1267
  %v1383 = vpack.c.b16 %v1270, %v1269
  %v1384 = vpack.c.b16 %v1272, %v1271
  %v1385 = vpack.c.b16 %v1274, %v1273
  %v1386 = vpack.c.b16 %v1276, %v1275
  %v1387 = vpack.c.b16 %v1278, %v1277
  %v1388 = vpack.c.b16 %v1280, %v1279
  %v1389 = vpack.c.b16 %v1282, %v1281
  %v1390 = vpack.c.b16 %v1284, %v1283
  %v1391 = vpack.c.b16 %v1286, %v1285
  %v1392 = vpack.c.b16 %v1288, %v1287
  %1497 = vmatprep.subr.bf16.mxu0 0
  %1498 = vmatpush1.bf16.msra.mxu0 %v1289
  %1499 = vmatprep.subr.bf16.mxu0 0
  %1500 = vmatpush1.bf16.msra.mxu0 %v1290
  %1501 = vmatprep.subr.bf16.mxu0 0
  %1502 = vmatpush1.bf16.msra.mxu0 %v1291
  %1503 = vmatprep.subr.bf16.mxu0 0
  %1504 = vmatpush1.bf16.msra.mxu0 %v1292
  %1505 = vmatprep.subr.bf16.mxu0 0
  %1506 = vmatpush1.bf16.msra.mxu0 %v1293
  %1507 = vmatprep.subr.bf16.mxu0 0
  %1508 = vmatpush1.bf16.msra.mxu0 %v1294
  %1509 = vmatprep.subr.bf16.mxu0 0
  %1510 = vmatpush1.bf16.msra.mxu0 %v1295
  %1511 = vmatprep.subr.bf16.mxu0 0
  %1512 = vmatpush1.bf16.msra.mxu0 %v1296
  %1513 = vmatprep.subr.bf16.mxu0 0
  %1514 = vmatpush1.bf16.msra.mxu0 %v1297
  %1515 = vmatprep.subr.bf16.mxu0 0
  %1516 = vmatpush1.bf16.msra.mxu0 %v1298
  %1517 = vmatprep.subr.bf16.mxu0 0
  %1518 = vmatpush1.bf16.msra.mxu0 %v1299
  %1519 = vmatprep.subr.bf16.mxu0 0
  %1520 = vmatpush1.bf16.msra.mxu0 %v1300
  %1521 = vmatprep.subr.bf16.mxu0 0
  %1522 = vmatpush1.bf16.msra.mxu0 %v1301
  %1523 = vmatprep.subr.bf16.mxu0 0
  %1524 = vmatpush1.bf16.msra.mxu0 %v1302
  %1525 = vmatprep.subr.bf16.mxu0 0
  %1526 = vmatpush1.bf16.msra.mxu0 %v1303
  %1527 = vmatprep.subr.bf16.mxu0 0
  %1528 = vmatpush1.bf16.msra.mxu0 %v1304
  %1529 = vmatprep.mubr.bf16.mxu0 %v666
  %1530 = vmatmul.mubr.bf16.gmra.mrb[0].mxu0 %v665
  %v1531 = vpop.f32.mrb[0].mxu0
  %v1532 = vadd.f32 %v343, %v1531
  %v1533 = vpop.f32.mrb[0].mxu0
  %v1534 = vpop.f32.mrb[0].mxu0
  %v1535 = vadd.f32 %v343, %v1534
  %v1536 = vpop.f32.mrb[0].mxu0
  %1537 = vmatprep.mubr.bf16.mxu0 %v679
  %1538 = vmatmul.mubr.bf16.gmra.mrb[0].mxu0 %v678
  %v1539 = vpop.f32.mrb[0].mxu0
  %v1540 = vadd.f32 %v343, %v1539
  %v1541 = vpop.f32.mrb[0].mxu0
  %v1542 = vpop.f32.mrb[0].mxu0
  %v1543 = vadd.f32 %v343, %v1542
  %v1544 = vpop.f32.mrb[0].mxu0
  %1545 = vmatprep.mubr.bf16.mxu0 %v692
  %1546 = vmatmul.mubr.bf16.gmra.mrb[0].mxu0 %v691
  %v1547 = vpop.f32.mrb[0].mxu0
  %v1548 = vadd.f32 %v343, %v1547
  %v1549 = vpop.f32.mrb[0].mxu0
  %v1550 = vpop.f32.mrb[0].mxu0
  %v1551 = vadd.f32 %v343, %v1550
  %v1552 = vpop.f32.mrb[0].mxu0
  %1553 = vmatprep.mubr.bf16.mxu0 %v705
  %1554 = vmatmul.mubr.bf16.gmra.mrb[0].mxu0 %v704
  %v1555 = vpop.f32.mrb[0].mxu0
  %v1556 = vadd.f32 %v343, %v1555
  %v1557 = vpop.f32.mrb[0].mxu0
  %v1558 = vpop.f32.mrb[0].mxu0
  %v1559 = vadd.f32 %v343, %v1558
  %v1560 = vpop.f32.mrb[0].mxu0
  %1561 = vmatprep.mubr.bf16.mxu0 %v718
  %1562 = vmatmul.mubr.bf16.gmra.mrb[0].mxu0 %v717
  %v1563 = vpop.f32.mrb[0].mxu0
  %v1564 = vadd.f32 %v343, %v1563
  %v1565 = vpop.f32.mrb[0].mxu0
  %v1566 = vpop.f32.mrb[0].mxu0
  %v1567 = vadd.f32 %v343, %v1566
  %v1568 = vpop.f32.mrb[0].mxu0
  %1569 = vmatprep.mubr.bf16.mxu0 %v731
  %1570 = vmatmul.mubr.bf16.gmra.mrb[0].mxu0 %v730
  %v1571 = vpop.f32.mrb[0].mxu0
  %v1572 = vadd.f32 %v343, %v1571
  %v1573 = vpop.f32.mrb[0].mxu0
  %v1574 = vpop.f32.mrb[0].mxu0
  %v1575 = vadd.f32 %v343, %v1574
  %v1576 = vpop.f32.mrb[0].mxu0
  %1577 = vmatprep.mubr.bf16.mxu0 %v744
  %1578 = vmatmul.mubr.bf16.gmra.mrb[0].mxu0 %v743
  %v1579 = vpop.f32.mrb[0].mxu0
  %v1580 = vadd.f32 %v343, %v1579
  %v1581 = vpop.f32.mrb[0].mxu0
  %v1582 = vpop.f32.mrb[0].mxu0
  %v1583 = vadd.f32 %v343, %v1582
  %v1584 = vpop.f32.mrb[0].mxu0
  %1585 = vmatprep.mubr.bf16.mxu0 %v757
  %1586 = vmatmul.mubr.bf16.gmra.mrb[0].mxu0 %v756
  %v1587 = vpop.f32.mrb[0].mxu0
  %v1588 = vadd.f32 %v343, %v1587
  %v1589 = vpop.f32.mrb[0].mxu0
  %v1590 = vpop.f32.mrb[0].mxu0
  %v1591 = vadd.f32 %v343, %v1590
  %v1592 = vpop.f32.mrb[0].mxu0
  %1593 = vdwg.mxu0
  %1594 = vmatprep.subr.bf16.mxu0 0
  %1595 = vmatpush1.bf16.msra.mxu0 %v1305
  %1596 = vmatprep.subr.bf16.mxu0 0
  %1597 = vmatpush1.bf16.msra.mxu0 %v1306
  %1598 = vmatprep.subr.bf16.mxu0 0
  %1599 = vmatpush1.bf16.msra.mxu0 %v1307
  %1600 = vmatprep.subr.bf16.mxu0 0
  %1601 = vmatpush1.bf16.msra.mxu0 %v1308
  %1602 = vmatprep.subr.bf16.mxu0 0
  %1603 = vmatpush1.bf16.msra.mxu0 %v1309
  %1604 = vmatprep.subr.bf16.mxu0 0
  %1605 = vmatpush1.bf16.msra.mxu0 %v1310
  %1606 = vmatprep.subr.bf16.mxu0 0
  %1607 = vmatpush1.bf16.msra.mxu0 %v1311
  %1608 = vmatprep.subr.bf16.mxu0 0
  %1609 = vmatpush1.bf16.msra.mxu0 %v1312
  %1610 = vmatprep.subr.bf16.mxu0 0
  %1611 = vmatpush1.bf16.msra.mxu0 %v1313
  %1612 = vmatprep.subr.bf16.mxu0 0
  %1613 = vmatpush1.bf16.msra.mxu0 %v1314
  %1614 = vmatprep.subr.bf16.mxu0 0
  %1615 = vmatpush1.bf16.msra.mxu0 %v1315
  %1616 = vmatprep.subr.bf16.mxu0 0
  %1617 = vmatpush1.bf16.msra.mxu0 %v1316
  %1618 = vmatprep.subr.bf16.mxu0 0
  %1619 = vmatpush1.bf16.msra.mxu0 %v1317
  %1620 = vmatprep.subr.bf16.mxu0 0
  %1621 = vmatpush1.bf16.msra.mxu0 %v1318
  %1622 = vmatprep.subr.bf16.mxu0 0
  %1623 = vmatpush1.bf16.msra.mxu0 %v1319
  %1624 = vmatprep.subr.bf16.mxu0 0
  %1625 = vmatpush1.bf16.msra.mxu0 %v1320
  %1626 = vmatprep.mubr.bf16.mxu0 %v668
  %1627 = vmatmul.mubr.bf16.gmra.mrb[0].mxu0 %v667
  %v1628 = vpop.f32.mrb[0].mxu0
  %v1629 = vadd.f32 %v1532, %v1628
  %v1630 = vpop.f32.mrb[0].mxu0
  %v1631 = vpop.f32.mrb[0].mxu0
  %v1632 = vadd.f32 %v1535, %v1631
  %v1633 = vpop.f32.mrb[0].mxu0
  %1634 = vmatprep.mubr.bf16.mxu0 %v681
  %1635 = vmatmul.mubr.bf16.gmra.mrb[0].mxu0 %v680
  %v1636 = vpop.f32.mrb[0].mxu0
  %v1637 = vadd.f32 %v1540, %v1636
  %v1638 = vpop.f32.mrb[0].mxu0
  %v1639 = vpop.f32.mrb[0].mxu0
  %v1640 = vadd.f32 %v1543, %v1639
  %v1641 = vpop.f32.mrb[0].mxu0
  %1642 = vmatprep.mubr.bf16.mxu0 %v694
  %1643 = vmatmul.mubr.bf16.gmra.mrb[0].mxu0 %v693
  %v1644 = vpop.f32.mrb[0].mxu0
  %v1645 = vadd.f32 %v1548, %v1644
  %v1646 = vpop.f32.mrb[0].mxu0
  %v1647 = vpop.f32.mrb[0].mxu0
  %v1648 = vadd.f32 %v1551, %v1647
  %v1649 = vpop.f32.mrb[0].mxu0
  %1650 = vmatprep.mubr.bf16.mxu0 %v707
  %1651 = vmatmul.mubr.bf16.gmra.mrb[0].mxu0 %v706
  %v1652 = vpop.f32.mrb[0].mxu0
  %v1653 = vadd.f32 %v1556, %v1652
  %v1654 = vpop.f32.mrb[0].mxu0
  %v1655 = vpop.f32.mrb[0].mxu0
  %v1656 = vadd.f32 %v1559, %v1655
  %v1657 = vpop.f32.mrb[0].mxu0
  %1658 = vmatprep.mubr.bf16.mxu0 %v720
  %1659 = vmatmul.mubr.bf16.gmra.mrb[0].mxu0 %v719
  %v1660 = vpop.f32.mrb[0].mxu0
  %v1661 = vadd.f32 %v1564, %v1660
  %v1662 = vpop.f32.mrb[0].mxu0
  %v1663 = vpop.f32.mrb[0].mxu0
  %v1664 = vadd.f32 %v1567, %v1663
  %v1665 = vpop.f32.mrb[0].mxu0
  %1666 = vmatprep.mubr.bf16.mxu0 %v733
  %1667 = vmatmul.mubr.bf16.gmra.mrb[0].mxu0 %v732
  %v1668 = vpop.f32.mrb[0].mxu0
  %v1669 = vadd.f32 %v1572, %v1668
  %v1670 = vpop.f32.mrb[0].mxu0
  %v1671 = vpop.f32.mrb[0].mxu0
  %v1672 = vadd.f32 %v1575, %v1671
  %v1673 = vpop.f32.mrb[0].mxu0
  %1674 = vmatprep.mubr.bf16.mxu0 %v746
  %1675 = vmatmul.mubr.bf16.gmra.mrb[0].mxu0 %v745
  %v1676 = vpop.f32.mrb[0].mxu0
  %v1677 = vadd.f32 %v1580, %v1676
  %v1678 = vpop.f32.mrb[0].mxu0
  %v1679 = vpop.f32.mrb[0].mxu0
  %v1680 = vadd.f32 %v1583, %v1679
  %v1681 = vpop.f32.mrb[0].mxu0
  %1682 = vmatprep.mubr.bf16.mxu0 %v759
  %1683 = vmatmul.mubr.bf16.gmra.mrb[0].mxu0 %v758
  %v1684 = vpop.f32.mrb[0].mxu0
  %v1685 = vadd.f32 %v1588, %v1684
  %v1686 = vpop.f32.mrb[0].mxu0
  %v1687 = vpop.f32.mrb[0].mxu0
  %v1688 = vadd.f32 %v1591, %v1687
  %v1689 = vpop.f32.mrb[0].mxu0
  %1690 = vdwg.mxu0
  %1691 = vmatprep.subr.bf16.mxu0 0
  %1692 = vmatpush1.bf16.msra.mxu0 %v1321
  %1693 = vmatprep.subr.bf16.mxu0 0
  %1694 = vmatpush1.bf16.msra.mxu0 %v1322
  %1695 = vmatprep.subr.bf16.mxu0 0
  %1696 = vmatpush1.bf16.msra.mxu0 %v1323
  %1697 = vmatprep.subr.bf16.mxu0 0
  %1698 = vmatpush1.bf16.msra.mxu0 %v1324
  %1699 = vmatprep.subr.bf16.mxu0 0
  %1700 = vmatpush1.bf16.msra.mxu0 %v1325
  %1701 = vmatprep.subr.bf16.mxu0 0
  %1702 = vmatpush1.bf16.msra.mxu0 %v1326
  %1703 = vmatprep.subr.bf16.mxu0 0
  %1704 = vmatpush1.bf16.msra.mxu0 %v1327
  %1705 = vmatprep.subr.bf16.mxu0 0
  %1706 = vmatpush1.bf16.msra.mxu0 %v1328
  %1707 = vmatprep.subr.bf16.mxu0 0
  %1708 = vmatpush1.bf16.msra.mxu0 %v1329
  %1709 = vmatprep.subr.bf16.mxu0 0
  %1710 = vmatpush1.bf16.msra.mxu0 %v1330
  %1711 = vmatprep.subr.bf16.mxu0 0
  %1712 = vmatpush1.bf16.msra.mxu0 %v1331
  %1713 = vmatprep.subr.bf16.mxu0 0
  %1714 = vmatpush1.bf16.msra.mxu0 %v1332
  %1715 = vmatprep.subr.bf16.mxu0 0
  %1716 = vmatpush1.bf16.msra.mxu0 %v1333
  %1717 = vmatprep.subr.bf16.mxu0 0
  %1718 = vmatpush1.bf16.msra.mxu0 %v1334
  %1719 = vmatprep.subr.bf16.mxu0 0
  %1720 = vmatpush1.bf16.msra.mxu0 %v1335
  %1721 = vmatprep.subr.bf16.mxu0 0
  %1722 = vmatpush1.bf16.msra.mxu0 %v1336
  %1723 = vmatprep.mubr.bf16.mxu0 %v670
  %1724 = vmatmul.mubr.bf16.gmra.mrb[0].mxu0 %v669
  %v1725 = vpop.f32.mrb[0].mxu0
  %v1726 = vadd.f32 %v1629, %v1725
  %v1727 = vpop.f32.mrb[0].mxu0
  %v1728 = vpop.f32.mrb[0].mxu0
  %v1729 = vadd.f32 %v1632, %v1728
  %v1730 = vpop.f32.mrb[0].mxu0
  %1731 = vmatprep.mubr.bf16.mxu0 %v683
  %1732 = vmatmul.mubr.bf16.gmra.mrb[0].mxu0 %v682
  %v1733 = vpop.f32.mrb[0].mxu0
  %v1734 = vadd.f32 %v1637, %v1733
  %v1735 = vpop.f32.mrb[0].mxu0
  %v1736 = vpop.f32.mrb[0].mxu0
  %v1737 = vadd.f32 %v1640, %v1736
  %v1738 = vpop.f32.mrb[0].mxu0
  %1739 = vmatprep.mubr.bf16.mxu0 %v696
  %1740 = vmatmul.mubr.bf16.gmra.mrb[0].mxu0 %v695
  %v1741 = vpop.f32.mrb[0].mxu0
  %v1742 = vadd.f32 %v1645, %v1741
  %v1743 = vpop.f32.mrb[0].mxu0
  %v1744 = vpop.f32.mrb[0].mxu0
  %v1745 = vadd.f32 %v1648, %v1744
  %v1746 = vpop.f32.mrb[0].mxu0
  %1747 = vmatprep.mubr.bf16.mxu0 %v709
  %1748 = vmatmul.mubr.bf16.gmra.mrb[0].mxu0 %v708
  %v1749 = vpop.f32.mrb[0].mxu0
  %v1750 = vadd.f32 %v1653, %v1749
  %v1751 = vpop.f32.mrb[0].mxu0
  %v1752 = vpop.f32.mrb[0].mxu0
  %v1753 = vadd.f32 %v1656, %v1752
  %v1754 = vpop.f32.mrb[0].mxu0
  %1755 = vmatprep.mubr.bf16.mxu0 %v722
  %1756 = vmatmul.mubr.bf16.gmra.mrb[0].mxu0 %v721
  %v1757 = vpop.f32.mrb[0].mxu0
  %v1758 = vadd.f32 %v1661, %v1757
  %v1759 = vpop.f32.mrb[0].mxu0
  %v1760 = vpop.f32.mrb[0].mxu0
  %v1761 = vadd.f32 %v1664, %v1760
  %v1762 = vpop.f32.mrb[0].mxu0
  %1763 = vmatprep.mubr.bf16.mxu0 %v735
  %1764 = vmatmul.mubr.bf16.gmra.mrb[0].mxu0 %v734
  %v1765 = vpop.f32.mrb[0].mxu0
  %v1766 = vadd.f32 %v1669, %v1765
  %v1767 = vpop.f32.mrb[0].mxu0
  %v1768 = vpop.f32.mrb[0].mxu0
  %v1769 = vadd.f32 %v1672, %v1768
  %v1770 = vpop.f32.mrb[0].mxu0
  %1771 = vmatprep.mubr.bf16.mxu0 %v748
  %1772 = vmatmul.mubr.bf16.gmra.mrb[0].mxu0 %v747
  %v1773 = vpop.f32.mrb[0].mxu0
  %v1774 = vadd.f32 %v1677, %v1773
  %v1775 = vpop.f32.mrb[0].mxu0
  %v1776 = vpop.f32.mrb[0].mxu0
  %v1777 = vadd.f32 %v1680, %v1776
  %v1778 = vpop.f32.mrb[0].mxu0
  %1779 = vmatprep.mubr.bf16.mxu0 %v761
  %1780 = vmatmul.mubr.bf16.gmra.mrb[0].mxu0 %v760
  %v1781 = vpop.f32.mrb[0].mxu0
  %v1782 = vadd.f32 %v1685, %v1781
  %v1783 = vpop.f32.mrb[0].mxu0
  %v1784 = vpop.f32.mrb[0].mxu0
  %v1785 = vadd.f32 %v1688, %v1784
  %v1786 = vpop.f32.mrb[0].mxu0
  %1787 = vdwg.mxu0
  %1788 = vmatprep.subr.bf16.mxu0 0
  %1789 = vmatpush1.bf16.msra.mxu0 %v1337
  %1790 = vmatprep.subr.bf16.mxu0 0
  %1791 = vmatpush1.bf16.msra.mxu0 %v1338
  %1792 = vmatprep.subr.bf16.mxu0 0
  %1793 = vmatpush1.bf16.msra.mxu0 %v1339
  %1794 = vmatprep.subr.bf16.mxu0 0
  %1795 = vmatpush1.bf16.msra.mxu0 %v1340
  %1796 = vmatprep.subr.bf16.mxu0 0
  %1797 = vmatpush1.bf16.msra.mxu0 %v1341
  %1798 = vmatprep.subr.bf16.mxu0 0
  %1799 = vmatpush1.bf16.msra.mxu0 %v1342
  %1800 = vmatprep.subr.bf16.mxu0 0
  %1801 = vmatpush1.bf16.msra.mxu0 %v1343
  %1802 = vmatprep.subr.bf16.mxu0 0
  %1803 = vmatpush1.bf16.msra.mxu0 %v1344
  %1804 = vmatprep.subr.bf16.mxu0 0
  %1805 = vmatpush1.bf16.msra.mxu0 %v1345
  %1806 = vmatprep.subr.bf16.mxu0 0
  %1807 = vmatpush1.bf16.msra.mxu0 %v1346
  %1808 = vmatprep.subr.bf16.mxu0 0
  %1809 = vmatpush1.bf16.msra.mxu0 %v1347
  %1810 = vmatprep.subr.bf16.mxu0 0
  %1811 = vmatpush1.bf16.msra.mxu0 %v1348
  %1812 = vmatprep.subr.bf16.mxu0 0
  %1813 = vmatpush1.bf16.msra.mxu0 %v1349
  %1814 = vmatprep.subr.bf16.mxu0 0
  %1815 = vmatpush1.bf16.msra.mxu0 %v1350
  %1816 = vmatprep.subr.bf16.mxu0 0
  %1817 = vmatpush1.bf16.msra.mxu0 %v1351
  %1818 = vmatprep.subr.bf16.mxu0 0
  %1819 = vmatpush1.bf16.msra.mxu0 %v1352
  %1820 = vmatprep.mubr.bf16.mxu0 %v672
  %1821 = vmatmul.mubr.bf16.gmra.mrb[0].mxu0 %v671
  %v1822 = vpop.f32.mrb[0].mxu0
  %v1823 = vadd.f32 %v1726, %v1822
  %v1824 = vpop.f32.mrb[0].mxu0
  %v1825 = vpop.f32.mrb[0].mxu0
  %v1826 = vadd.f32 %v1729, %v1825
  %v1827 = vpop.f32.mrb[0].mxu0
  %1828 = vmatprep.mubr.bf16.mxu0 %v685
  %1829 = vmatmul.mubr.bf16.gmra.mrb[0].mxu0 %v684
  %v1830 = vpop.f32.mrb[0].mxu0
  %v1831 = vadd.f32 %v1734, %v1830
  %v1832 = vpop.f32.mrb[0].mxu0
  %v1833 = vpop.f32.mrb[0].mxu0
  %v1834 = vadd.f32 %v1737, %v1833
  %v1835 = vpop.f32.mrb[0].mxu0
  %1836 = vmatprep.mubr.bf16.mxu0 %v698
  %1837 = vmatmul.mubr.bf16.gmra.mrb[0].mxu0 %v697
  %v1838 = vpop.f32.mrb[0].mxu0
  %v1839 = vadd.f32 %v1742, %v1838
  %v1840 = vpop.f32.mrb[0].mxu0
  %v1841 = vpop.f32.mrb[0].mxu0
  %v1842 = vadd.f32 %v1745, %v1841
  %v1843 = vpop.f32.mrb[0].mxu0
  %1844 = vmatprep.mubr.bf16.mxu0 %v711
  %1845 = vmatmul.mubr.bf16.gmra.mrb[0].mxu0 %v710
  %v1846 = vpop.f32.mrb[0].mxu0
  %v1847 = vadd.f32 %v1750, %v1846
  %v1848 = vpop.f32.mrb[0].mxu0
  %v1849 = vpop.f32.mrb[0].mxu0
  %v1850 = vadd.f32 %v1753, %v1849
  %v1851 = vpop.f32.mrb[0].mxu0
  %1852 = vmatprep.mubr.bf16.mxu0 %v724
  %1853 = vmatmul.mubr.bf16.gmra.mrb[0].mxu0 %v723
  %v1854 = vpop.f32.mrb[0].mxu0
  %v1855 = vadd.f32 %v1758, %v1854
  %v1856 = vpop.f32.mrb[0].mxu0
  %v1857 = vpop.f32.mrb[0].mxu0
  %v1858 = vadd.f32 %v1761, %v1857
  %v1859 = vpop.f32.mrb[0].mxu0
  %1860 = vmatprep.mubr.bf16.mxu0 %v737
  %1861 = vmatmul.mubr.bf16.gmra.mrb[0].mxu0 %v736
  %v1862 = vpop.f32.mrb[0].mxu0
  %v1863 = vadd.f32 %v1766, %v1862
  %v1864 = vpop.f32.mrb[0].mxu0
  %v1865 = vpop.f32.mrb[0].mxu0
  %v1866 = vadd.f32 %v1769, %v1865
  %v1867 = vpop.f32.mrb[0].mxu0
  %1868 = vmatprep.mubr.bf16.mxu0 %v750
  %1869 = vmatmul.mubr.bf16.gmra.mrb[0].mxu0 %v749
  %v1870 = vpop.f32.mrb[0].mxu0
  %v1871 = vadd.f32 %v1774, %v1870
  %v1872 = vpop.f32.mrb[0].mxu0
  %v1873 = vpop.f32.mrb[0].mxu0
  %v1874 = vadd.f32 %v1777, %v1873
  %v1875 = vpop.f32.mrb[0].mxu0
  %1876 = vmatprep.mubr.bf16.mxu0 %v763
  %1877 = vmatmul.mubr.bf16.gmra.mrb[0].mxu0 %v762
  %v1878 = vpop.f32.mrb[0].mxu0
  %v1879 = vadd.f32 %v1782, %v1878
  %v1880 = vpop.f32.mrb[0].mxu0
  %v1881 = vpop.f32.mrb[0].mxu0
  %v1882 = vadd.f32 %v1785, %v1881
  %v1883 = vpop.f32.mrb[0].mxu0
  %1884 = vdwg.mxu0
  %1885 = vmatprep.subr.bf16.mxu0 0
  %1886 = vmatpush1.bf16.msra.mxu0 %v1353
  %1887 = vmatprep.subr.bf16.mxu0 0
  %1888 = vmatpush1.bf16.msra.mxu0 %v1354
  %1889 = vmatprep.subr.bf16.mxu0 0
  %1890 = vmatpush1.bf16.msra.mxu0 %v1355
  %1891 = vmatprep.subr.bf16.mxu0 0
  %1892 = vmatpush1.bf16.msra.mxu0 %v1356
  %1893 = vmatprep.subr.bf16.mxu0 0
  %1894 = vmatpush1.bf16.msra.mxu0 %v1357
  %1895 = vmatprep.subr.bf16.mxu0 0
  %1896 = vmatpush1.bf16.msra.mxu0 %v1358
  %1897 = vmatprep.subr.bf16.mxu0 0
  %1898 = vmatpush1.bf16.msra.mxu0 %v1359
  %1899 = vmatprep.subr.bf16.mxu0 0
  %1900 = vmatpush1.bf16.msra.mxu0 %v1360
  %1901 = vmatprep.subr.bf16.mxu0 0
  %1902 = vmatpush1.bf16.msra.mxu0 %v1361
  %1903 = vmatprep.subr.bf16.mxu0 0
  %1904 = vmatpush1.bf16.msra.mxu0 %v1362
  %1905 = vmatprep.subr.bf16.mxu0 0
  %1906 = vmatpush1.bf16.msra.mxu0 %v1363
  %1907 = vmatprep.subr.bf16.mxu0 0
  %1908 = vmatpush1.bf16.msra.mxu0 %v1364
  %1909 = vmatprep.subr.bf16.mxu0 0
  %1910 = vmatpush1.bf16.msra.mxu0 %v1365
  %1911 = vmatprep.subr.bf16.mxu0 0
  %1912 = vmatpush1.bf16.msra.mxu0 %v1366
  %1913 = vmatprep.subr.bf16.mxu0 0
  %1914 = vmatpush1.bf16.msra.mxu0 %v1367
  %1915 = vmatprep.subr.bf16.mxu0 0
  %1916 = vmatpush1.bf16.msra.mxu0 %v1368
  %1917 = vmatprep.mubr.bf16.mxu0 %v674
  %1918 = vmatmul.mubr.bf16.gmra.mrb[0].mxu0 %v673
  %v1919 = vpop.f32.mrb[0].mxu0
  %v1920 = vadd.f32 %v1823, %v1919
  %v1921 = vpop.f32.mrb[0].mxu0
  %v1922 = vpop.f32.mrb[0].mxu0
  %v1923 = vadd.f32 %v1826, %v1922
  %v1924 = vpop.f32.mrb[0].mxu0
  %1925 = vmatprep.mubr.bf16.mxu0 %v687
  %1926 = vmatmul.mubr.bf16.gmra.mrb[0].mxu0 %v686
  %v1927 = vpop.f32.mrb[0].mxu0
  %v1928 = vadd.f32 %v1831, %v1927
  %v1929 = vpop.f32.mrb[0].mxu0
  %v1930 = vpop.f32.mrb[0].mxu0
  %v1931 = vadd.f32 %v1834, %v1930
  %v1932 = vpop.f32.mrb[0].mxu0
  %1933 = vmatprep.mubr.bf16.mxu0 %v700
  %1934 = vmatmul.mubr.bf16.gmra.mrb[0].mxu0 %v699
  %v1935 = vpop.f32.mrb[0].mxu0
  %v1936 = vadd.f32 %v1839, %v1935
  %v1937 = vpop.f32.mrb[0].mxu0
  %v1938 = vpop.f32.mrb[0].mxu0
  %v1939 = vadd.f32 %v1842, %v1938
  %v1940 = vpop.f32.mrb[0].mxu0
  %1941 = vmatprep.mubr.bf16.mxu0 %v713
  %1942 = vmatmul.mubr.bf16.gmra.mrb[0].mxu0 %v712
  %v1943 = vpop.f32.mrb[0].mxu0
  %v1944 = vadd.f32 %v1847, %v1943
  %v1945 = vpop.f32.mrb[0].mxu0
  %v1946 = vpop.f32.mrb[0].mxu0
  %v1947 = vadd.f32 %v1850, %v1946
  %v1948 = vpop.f32.mrb[0].mxu0
  %1949 = vmatprep.mubr.bf16.mxu0 %v726
  %1950 = vmatmul.mubr.bf16.gmra.mrb[0].mxu0 %v725
  %v1951 = vpop.f32.mrb[0].mxu0
  %v1952 = vadd.f32 %v1855, %v1951
  %v1953 = vpop.f32.mrb[0].mxu0
  %v1954 = vpop.f32.mrb[0].mxu0
  %v1955 = vadd.f32 %v1858, %v1954
  %v1956 = vpop.f32.mrb[0].mxu0
  %1957 = vmatprep.mubr.bf16.mxu0 %v739
  %1958 = vmatmul.mubr.bf16.gmra.mrb[0].mxu0 %v738
  %v1959 = vpop.f32.mrb[0].mxu0
  %v1960 = vadd.f32 %v1863, %v1959
  %v1961 = vpop.f32.mrb[0].mxu0
  %v1962 = vpop.f32.mrb[0].mxu0
  %v1963 = vadd.f32 %v1866, %v1962
  %v1964 = vpop.f32.mrb[0].mxu0
  %1965 = vmatprep.mubr.bf16.mxu0 %v752
  %1966 = vmatmul.mubr.bf16.gmra.mrb[0].mxu0 %v751
  %v1967 = vpop.f32.mrb[0].mxu0
  %v1968 = vadd.f32 %v1871, %v1967
  %v1969 = vpop.f32.mrb[0].mxu0
  %v1970 = vpop.f32.mrb[0].mxu0
  %v1971 = vadd.f32 %v1874, %v1970
  %v1972 = vpop.f32.mrb[0].mxu0
  %1973 = vmatprep.mubr.bf16.mxu0 %v765
  %1974 = vmatmul.mubr.bf16.gmra.mrb[0].mxu0 %v764
  %v1975 = vpop.f32.mrb[0].mxu0
  %v1976 = vadd.f32 %v1879, %v1975
  %v1977 = vpop.f32.mrb[0].mxu0
  %v1978 = vpop.f32.mrb[0].mxu0
  %v1979 = vadd.f32 %v1882, %v1978
  %v1980 = vpop.f32.mrb[0].mxu0
  %1981 = vdwg.mxu0
  %1982 = vmatprep.subr.bf16.mxu0 0
  %1983 = vmatpush1.bf16.msra.mxu0 %v1369
  %1984 = vmatprep.subr.bf16.mxu0 0
  %1985 = vmatpush1.bf16.msra.mxu0 %v1370
  %1986 = vmatprep.subr.bf16.mxu0 0
  %1987 = vmatpush1.bf16.msra.mxu0 %v1371
  %1988 = vmatprep.subr.bf16.mxu0 0
  %1989 = vmatpush1.bf16.msra.mxu0 %v1372
  %1990 = vmatprep.subr.bf16.mxu0 0
  %1991 = vmatpush1.bf16.msra.mxu0 %v1373
  %1992 = vmatprep.subr.bf16.mxu0 0
  %1993 = vmatpush1.bf16.msra.mxu0 %v1374
  %1994 = vmatprep.subr.bf16.mxu0 0
  %1995 = vmatpush1.bf16.msra.mxu0 %v1375
  %1996 = vmatprep.subr.bf16.mxu0 0
  %1997 = vmatpush1.bf16.msra.mxu0 %v1376
  %1998 = vmatprep.subr.bf16.mxu0 0
  %1999 = vmatpush1.bf16.msra.mxu0 %v1377
  %2000 = vmatprep.subr.bf16.mxu0 0
  %2001 = vmatpush1.bf16.msra.mxu0 %v1378
  %2002 = vmatprep.subr.bf16.mxu0 0
  %2003 = vmatpush1.bf16.msra.mxu0 %v1379
  %2004 = vmatprep.subr.bf16.mxu0 0
  %2005 = vmatpush1.bf16.msra.mxu0 %v1380
  %2006 = vmatprep.subr.bf16.mxu0 0
  %2007 = vmatpush1.bf16.msra.mxu0 %v1381
  %2008 = vmatprep.subr.bf16.mxu0 0
  %2009 = vmatpush1.bf16.msra.mxu0 %v1382
  %2010 = vmatprep.subr.bf16.mxu0 0
  %2011 = vmatpush1.bf16.msra.mxu0 %v1383
  %2012 = vmatprep.subr.bf16.mxu0 0
  %2013 = vmatpush1.bf16.msra.mxu0 %v1384
  %2014 = vmatprep.mubr.bf16.mxu0 %v676
  %2015 = vmatmul.mubr.bf16.gmra.mrb[0].mxu0 %v675
  %v2016 = vpop.f32.mrb[0].mxu0
  %v2017 = vadd.f32 %v1920, %v2016
  %v2018 = vpop.f32.mrb[0].mxu0
  %v2019 = vpop.f32.mrb[0].mxu0
  %v2020 = vadd.f32 %v1923, %v2019
  %v2021 = vpop.f32.mrb[0].mxu0
  %2022 = vmatprep.mubr.bf16.mxu0 %v689
  %2023 = vmatmul.mubr.bf16.gmra.mrb[0].mxu0 %v688
  %v2024 = vpop.f32.mrb[0].mxu0
  %v2025 = vadd.f32 %v1928, %v2024
  %v2026 = vpop.f32.mrb[0].mxu0
  %v2027 = vpop.f32.mrb[0].mxu0
  %v2028 = vadd.f32 %v1931, %v2027
  %v2029 = vpop.f32.mrb[0].mxu0
  %2030 = vmatprep.mubr.bf16.mxu0 %v702
  %2031 = vmatmul.mubr.bf16.gmra.mrb[0].mxu0 %v701
  %v2032 = vpop.f32.mrb[0].mxu0
  %v2033 = vadd.f32 %v1936, %v2032
  %v2034 = vpop.f32.mrb[0].mxu0
  %v2035 = vpop.f32.mrb[0].mxu0
  %v2036 = vadd.f32 %v1939, %v2035
  %v2037 = vpop.f32.mrb[0].mxu0
  %2038 = vmatprep.mubr.bf16.mxu0 %v715
  %2039 = vmatmul.mubr.bf16.gmra.mrb[0].mxu0 %v714
  %v2040 = vpop.f32.mrb[0].mxu0
  %v2041 = vadd.f32 %v1944, %v2040
  %v2042 = vpop.f32.mrb[0].mxu0
  %v2043 = vpop.f32.mrb[0].mxu0
  %v2044 = vadd.f32 %v1947, %v2043
  %v2045 = vpop.f32.mrb[0].mxu0
  %2046 = vmatprep.mubr.bf16.mxu0 %v728
  %2047 = vmatmul.mubr.bf16.gmra.mrb[0].mxu0 %v727
  %v2048 = vpop.f32.mrb[0].mxu0
  %v2049 = vadd.f32 %v1952, %v2048
  %v2050 = vpop.f32.mrb[0].mxu0
  %v2051 = vpop.f32.mrb[0].mxu0
  %v2052 = vadd.f32 %v1955, %v2051
  %v2053 = vpop.f32.mrb[0].mxu0
  %2054 = vmatprep.mubr.bf16.mxu0 %v741
  %2055 = vmatmul.mubr.bf16.gmra.mrb[0].mxu0 %v740
  %v2056 = vpop.f32.mrb[0].mxu0
  %v2057 = vadd.f32 %v1960, %v2056
  %v2058 = vpop.f32.mrb[0].mxu0
  %v2059 = vpop.f32.mrb[0].mxu0
  %v2060 = vadd.f32 %v1963, %v2059
  %v2061 = vpop.f32.mrb[0].mxu0
  %2062 = vmatprep.mubr.bf16.mxu0 %v754
  %2063 = vmatmul.mubr.bf16.gmra.mrb[0].mxu0 %v753
  %v2064 = vpop.f32.mrb[0].mxu0
  %v2065 = vadd.f32 %v1968, %v2064
  %v2066 = vpop.f32.mrb[0].mxu0
  %v2067 = vpop.f32.mrb[0].mxu0
  %v2068 = vadd.f32 %v1971, %v2067
  %v2069 = vpop.f32.mrb[0].mxu0
  %2070 = vmatprep.mubr.bf16.mxu0 %v767
  %2071 = vmatmul.mubr.bf16.gmra.mrb[0].mxu0 %v766
  %v2072 = vpop.f32.mrb[0].mxu0
  %v2073 = vadd.f32 %v1976, %v2072
  %v2074 = vpop.f32.mrb[0].mxu0
  %v2075 = vpop.f32.mrb[0].mxu0
  %v2076 = vadd.f32 %v1979, %v2075
  %v2077 = vpop.f32.mrb[0].mxu0
  %2078 = vdwg.mxu0
  %2079 = vmatprep.subr.bf16.mxu0 0
  %2080 = vmatpush1.bf16.msra.mxu0 %v1385
  %2081 = vmatprep.subr.bf16.mxu0 0
  %2082 = vmatpush1.bf16.msra.mxu0 %v1386
  %2083 = vmatprep.subr.bf16.mxu0 0
  %2084 = vmatpush1.bf16.msra.mxu0 %v1387
  %2085 = vmatprep.subr.bf16.mxu0 0
  %2086 = vmatpush1.bf16.msra.mxu0 %v1388
  %2087 = vmatprep.subr.bf16.mxu0 0
  %2088 = vmatpush1.bf16.msra.mxu0 %v1389
  %2089 = vmatprep.subr.bf16.mxu0 0
  %2090 = vmatpush1.bf16.msra.mxu0 %v1390
  %2091 = vmatprep.subr.bf16.mxu0 0
  %2092 = vmatpush1.bf16.msra.mxu0 %v1391
  %2093 = vmatprep.subr.bf16.mxu0 0
  %2094 = vmatpush1.bf16.msra.mxu0 %v1392
  %2095 = vmatprep.subr.bf16.mxu0 0
  %2096 = vmatpush1.bf16.msra.mxu0 0
  %2097 = vmatprep.subr.bf16.mxu0 0
  %2098 = vmatpush1.bf16.msra.mxu0 0
  %2099 = vmatprep.subr.bf16.mxu0 0
  %2100 = vmatpush1.bf16.msra.mxu0 0
  %2101 = vmatprep.subr.bf16.mxu0 0
  %2102 = vmatpush1.bf16.msra.mxu0 0
  %2103 = vmatprep.subr.bf16.mxu0 0
  %2104 = vmatpush1.bf16.msra.mxu0 0
  %2105 = vmatprep.subr.bf16.mxu0 0
  %2106 = vmatpush1.bf16.msra.mxu0 0
  %2107 = vmatprep.subr.bf16.mxu0 0
  %2108 = vmatpush1.bf16.msra.mxu0 0
  %2109 = vmatprep.subr.bf16.mxu0 0
  %2110 = vmatpush1.bf16.msra.mxu0 0
  %2111 = vmatprep.mubr.bf16.mxu0 0
  %2112 = vmatmul.mubr.bf16.gmra.mrb[0].mxu0 %v677
  %v2113 = vpop.f32.mrb[0].mxu0
  %v2114 = vadd.f32 %v2017, %v2113
  %v2115 = vpop.f32.mrb[0].mxu0
  %v2116 = vpop.f32.mrb[0].mxu0
  %v2117 = vadd.f32 %v2020, %v2116
  %v2118 = vpop.f32.mrb[0].mxu0
  %2119 = vmatprep.mubr.bf16.mxu0 0
  %2120 = vmatmul.mubr.bf16.gmra.mrb[0].mxu0 %v690
  %v2121 = vpop.f32.mrb[0].mxu0
  %v2122 = vadd.f32 %v2025, %v2121
  %v2123 = vpop.f32.mrb[0].mxu0
  %v2124 = vpop.f32.mrb[0].mxu0
  %v2125 = vadd.f32 %v2028, %v2124
  %v2126 = vpop.f32.mrb[0].mxu0
  %2127 = vmatprep.mubr.bf16.mxu0 0
  %2128 = vmatmul.mubr.bf16.gmra.mrb[0].mxu0 %v703
  %v2129 = vpop.f32.mrb[0].mxu0
  %v2130 = vadd.f32 %v2033, %v2129
  %v2131 = vpop.f32.mrb[0].mxu0
  %v2132 = vpop.f32.mrb[0].mxu0
  %v2133 = vadd.f32 %v2036, %v2132
  %v2134 = vpop.f32.mrb[0].mxu0
  %2135 = vmatprep.mubr.bf16.mxu0 0
  %2136 = vmatmul.mubr.bf16.gmra.mrb[0].mxu0 %v716
  %v2137 = vpop.f32.mrb[0].mxu0
  %v2138 = vadd.f32 %v2041, %v2137
  %v2139 = vpop.f32.mrb[0].mxu0
  %v2140 = vpop.f32.mrb[0].mxu0
  %v2141 = vadd.f32 %v2044, %v2140
  %v2142 = vpop.f32.mrb[0].mxu0
  %2143 = vmatprep.mubr.bf16.mxu0 0
  %2144 = vmatmul.mubr.bf16.gmra.mrb[0].mxu0 %v729
  %v2145 = vpop.f32.mrb[0].mxu0
  %v2146 = vadd.f32 %v2049, %v2145
  %v2147 = vpop.f32.mrb[0].mxu0
  %v2148 = vpop.f32.mrb[0].mxu0
  %v2149 = vadd.f32 %v2052, %v2148
  %v2150 = vpop.f32.mrb[0].mxu0
  %2151 = vmatprep.mubr.bf16.mxu0 0
  %2152 = vmatmul.mubr.bf16.gmra.mrb[0].mxu0 %v742
  %v2153 = vpop.f32.mrb[0].mxu0
  %v2154 = vadd.f32 %v2057, %v2153
  %v2155 = vpop.f32.mrb[0].mxu0
  %v2156 = vpop.f32.mrb[0].mxu0
  %v2157 = vadd.f32 %v2060, %v2156
  %v2158 = vpop.f32.mrb[0].mxu0
  %2159 = vmatprep.mubr.bf16.mxu0 0
  %2160 = vmatmul.mubr.bf16.gmra.mrb[0].mxu0 %v755
  %v2161 = vpop.f32.mrb[0].mxu0
  %v2162 = vadd.f32 %v2065, %v2161
  %v2163 = vpop.f32.mrb[0].mxu0
  %v2164 = vpop.f32.mrb[0].mxu0
  %v2165 = vadd.f32 %v2068, %v2164
  %v2166 = vpop.f32.mrb[0].mxu0
  %2167 = vmatprep.mubr.bf16.mxu0 0
  %2168 = vmatmul.mubr.bf16.gmra.mrb[0].mxu0 %v768
  %v2169 = vpop.f32.mrb[0].mxu0
  %v2170 = vadd.f32 %v2073, %v2169
  %v2171 = vpop.f32.mrb[0].mxu0
  %v2172 = vpop.f32.mrb[0].mxu0
  %v2173 = vadd.f32 %v2076, %v2172
  %v2174 = vpop.f32.mrb[0].mxu0
  %2175 = vdwg.mxu0
  %2176 = vst [vmem:[%s3] sm:$0xff] %v2114
  %2177 = vst [vmem:[%s3 + $0x8] sm:$0xff] %v2117
  %2178 = vst [vmem:[%s3 + $0x10] sm:$0xff] %v2122
  %2179 = vst [vmem:[%s3 + $0x18] sm:$0xff] %v2125
  %2180 = vst [vmem:[%s3 + $0x20] sm:$0xff] %v2130
  %2181 = vst [vmem:[%s3 + $0x28] sm:$0xff] %v2133
  %2182 = vst [vmem:[%s3 + $0x30] sm:$0xff] %v2138
  %2183 = vst [vmem:[%s3 + $0x38] sm:$0xff] %v2141
  %2184 = vst [vmem:[%s3 + $0x40] sm:$0xff] %v2146
  %2185 = vst [vmem:[%s3 + $0x48] sm:$0xff] %v2149
  %2186 = vst [vmem:[%s3 + $0x50] sm:$0xff] %v2154
  %2187 = vst [vmem:[%s3 + $0x58] sm:$0xff] %v2157
  %2188 = vst [vmem:[%s3 + $0x60] sm:$0xff] %v2162
  %2189 = vst [vmem:[%s3 + $0x68] sm:$0xff] %v2165
  %2190 = vst [vmem:[%s3 + $0x70] sm:$0xff] %v2170
  %2191 = vst [vmem:[%s3 + $0x78] sm:$0xff] %v2173
  %p2192 = scmp.eq.s32.totalorder 0, 0
  // Predicated region
  $region14: #{d_forward.6} parent=0 // pred_check
    %p2193 = pneg %p2192
  $region15: #{d_forward.6} parent=0 // pred_check_branch
    %2195 = sbr.rel (%p2193) target = $region17
  $region16: #{d_forward.6} parent=0 // pred_region
    %2196 = vst [vmem:[%s4] sm:$0x1] 0.0
    %2197 = vst [vmem:[%s5] sm:$0x1] 0.0
  $region17: #{d_forward.6} parent=0 // pred_fallthru
    _
  %v2198 = vld [vmem:[%s4] sm:$0x1]
  %v2199 = vadd.f32 %v2114, %v2117
  %v2200 = vadd.f32 %v2199, %v2122
  %v2201 = vadd.f32 %v2200, %v2125
  %v2202 = vadd.f32 %v2201, %v2130
  %v2203 = vadd.f32 %v2202, %v2133
  %v2204 = vadd.f32 %v2203, %v2138
  %v2205 = vadd.f32 %v2204, %v2141
  %v2206 = vadd.f32 %v2205, %v2146
  %v2207 = vadd.f32 %v2206, %v2149
  %v2208 = vadd.f32 %v2207, %v2154
  %v2209 = vadd.f32 %v2208, %v2157
  %v2210 = vadd.f32 %v2209, %v2162
  %v2211 = vadd.f32 %v2210, %v2165
  %v2212 = vadd.f32 %v2211, %v2170
  %v2213 = vadd.f32 %v2212, %v2173
  %v2214 = vrot.slane %v2213, 4
  %v2215 = vadd.f32 %v2213, %v2214
  %v2216 = vrot.slane %v2215, 2
  %v2217 = vadd.f32 %v2215, %v2216
  %v2218 = vrot.slane %v2217, 1
  %v2219 = vadd.f32 %v2217, %v2218
  %v2220 = vadd.f32 %v2198, %v2219
  %2221 = vst [vmem:[%s4] sm:$0x1] %v2220
  %v2222 = vld [vmem:[%s5] sm:$0x1]
  %v2223 = vmul.f32 %v2114, %v2114
  %v2224 = vmul.f32 %v2117, %v2117
  %v2225 = vmul.f32 %v2122, %v2122
  %v2226 = vmul.f32 %v2125, %v2125
  %v2227 = vmul.f32 %v2130, %v2130
  %v2228 = vmul.f32 %v2133, %v2133
  %v2229 = vmul.f32 %v2138, %v2138
  %v2230 = vmul.f32 %v2141, %v2141
  %v2231 = vmul.f32 %v2146, %v2146
  %v2232 = vmul.f32 %v2149, %v2149
  %v2233 = vmul.f32 %v2154, %v2154
  %v2234 = vmul.f32 %v2157, %v2157
  %v2235 = vmul.f32 %v2162, %v2162
  %v2236 = vmul.f32 %v2165, %v2165
  %v2237 = vmul.f32 %v2170, %v2170
  %v2238 = vmul.f32 %v2173, %v2173
  %v2239 = vadd.f32 %v2223, %v2224
  %v2240 = vadd.f32 %v2239, %v2225
  %v2241 = vadd.f32 %v2240, %v2226
  %v2242 = vadd.f32 %v2241, %v2227
  %v2243 = vadd.f32 %v2242, %v2228
  %v2244 = vadd.f32 %v2243, %v2229
  %v2245 = vadd.f32 %v2244, %v2230
  %v2246 = vadd.f32 %v2245, %v2231
  %v2247 = vadd.f32 %v2246, %v2232
  %v2248 = vadd.f32 %v2247, %v2233
  %v2249 = vadd.f32 %v2248, %v2234
  %v2250 = vadd.f32 %v2249, %v2235
  %v2251 = vadd.f32 %v2250, %v2236
  %v2252 = vadd.f32 %v2251, %v2237
  %v2253 = vadd.f32 %v2252, %v2238
  %v2254 = vrot.slane %v2253, 4
  %v2255 = vadd.f32 %v2253, %v2254
  %v2256 = vrot.slane %v2255, 2
  %v2257 = vadd.f32 %v2255, %v2256
  %v2258 = vrot.slane %v2257, 1
  %v2259 = vadd.f32 %v2257, %v2258
  %v2260 = vadd.f32 %v2222, %v2259
  %2261 = vst [vmem:[%s5] sm:$0x1] %v2260
  // Predicated region
  $region18: #{d_forward.6} parent=0 // pred_check
    _
  $region19: #{d_forward.6} parent=0 // pred_check_branch
    %2263 = sbr.rel (0) target = $region21
  $region20: #{d_forward.6} parent=0 // pred_region
    _
  $region21: #{d_forward.6} parent=0 // pred_fallthru
    _
  // Predicated region
  $region22: #{d_forward.6} parent=0 // pred_check
    _
  $region23: #{d_forward.6} parent=0 // pred_check_branch
    %2265 = sbr.rel (0) target = $region25
  $region24: #{d_forward.6} parent=0 // pred_region
    _
  $region25: #{d_forward.6} parent=0 // pred_fallthru
    _
  // Predicated region
  $region26: #{d_forward.6} parent=0 // pred_check
    _
  $region27: #{d_forward.6} parent=0 // pred_check_branch
    %2267 = sbr.rel (0) target = $region29
  $region28: #{d_forward.6} parent=0 // pred_region
    _
  $region29: #{d_forward.6} parent=0 // pred_fallthru
    _
  // Predicated region
  $region30: #{d_forward.6} parent=0 // pred_check
    _
  $region31: #{d_forward.6} parent=0 // pred_check_branch
    %2269 = sbr.rel (0) target = $region33
  $region32: #{d_forward.6} parent=0 // pred_region
    _
  $region33: #{d_forward.6} parent=0 // pred_fallthru
    _
  // Predicated region
  $region34: #{d_forward.6} parent=0 // pred_check
    _
  $region35: #{d_forward.6} parent=0 // pred_check_branch
    %2271 = sbr.rel (0) target = $region37
  $region36: #{d_forward.6} parent=0 // pred_region
    _
  $region37: #{d_forward.6} parent=0 // pred_fallthru
    _
  // Predicated region
  $region38: #{d_forward.6} parent=0 // pred_check
    _
  $region39: #{d_forward.6} parent=0 // pred_check_branch
    %2273 = sbr.rel (0) target = $region41
  $region40: #{d_forward.6} parent=0 // pred_region
    _
  $region41: #{d_forward.6} parent=0 // pred_fallthru
    _

// kernel: d_forward.7
$region0: #{d_forward.7}
  #allocation0 [shape = 'u32[]', space=smem, size = 0x4, offset = 0x4, fixed_abs, tag = 'smem constant byte address 0x4 - core index']
  #allocation1 [shape = 'u32[144,128]{1,0:T(1,128)}', space=vmem, size = 0x12000, scoped, tag = 'internal scratch']
  %s0 = inlined_call_operand.vmem [shape: f32[128,128], index: 0, kind: input, shape index: {}]
  %s1 = inlined_call_operand.vmem [shape: f32[1,128], index: 1, kind: input, shape index: {}]
  %s2 = inlined_call_operand.vmem [shape: f32[1,128], index: 2, kind: input, shape index: {}]
  %s3 = inlined_call_operand.vmem [shape: f32[128,128], index: 3, kind: output, shape index: {}]
  %s4 = sld [smem:[#allocation0]]
  $region22: #{d_forward.7} parent=0
    _
  %s6 = ssub.s32 1, %s4
  %s7 = scalar_select 0, %s6, %s4
  // Predicated region
  $region2: #{d_forward.7} parent=0 // pred_check
    _
  $region3: #{d_forward.7} parent=0 // pred_check_branch
    %9 = sbr.rel (0) target = $region5
  $region4: #{d_forward.7} parent=0 // pred_region
    _
  $region5: #{d_forward.7} parent=0 // pred_fallthru
    _
  // Predicated region
  $region6: #{d_forward.7} parent=0 // pred_check
    _
  $region7: #{d_forward.7} parent=0 // pred_check_branch
    %11 = sbr.rel (0) target = $region9
  $region8: #{d_forward.7} parent=0 // pred_region
    _
  $region9: #{d_forward.7} parent=0 // pred_fallthru
    _
  // Predicated region
  $region10: #{d_forward.7} parent=0 // pred_check
    _
  $region11: #{d_forward.7} parent=0 // pred_check_branch
    %13 = sbr.rel (0) target = $region13
  $region12: #{d_forward.7} parent=0 // pred_region
    _
  $region13: #{d_forward.7} parent=0 // pred_fallthru
    _
  %v14 = vld [vmem:[%s0] sm:$0xff]
  %v15 = vld [vmem:[%s0 + $0x8] sm:$0xff]
  %v16 = vld [vmem:[%s0 + $0x10] sm:$0xff]
  %v17 = vld [vmem:[%s0 + $0x18] sm:$0xff]
  %v18 = vld [vmem:[%s0 + $0x20] sm:$0xff]
  %v19 = vld [vmem:[%s0 + $0x28] sm:$0xff]
  %v20 = vld [vmem:[%s0 + $0x30] sm:$0xff]
  %v21 = vld [vmem:[%s0 + $0x38] sm:$0xff]
  %v22 = vld [vmem:[%s0 + $0x40] sm:$0xff]
  %v23 = vld [vmem:[%s0 + $0x48] sm:$0xff]
  %v24 = vld [vmem:[%s0 + $0x50] sm:$0xff]
  %v25 = vld [vmem:[%s0 + $0x58] sm:$0xff]
  %v26 = vld [vmem:[%s0 + $0x60] sm:$0xff]
  %v27 = vld [vmem:[%s0 + $0x68] sm:$0xff]
  %v28 = vld [vmem:[%s0 + $0x70] sm:$0xff]
  %v29 = vld [vmem:[%s0 + $0x78] sm:$0xff]
  %v30 = vld [vmem:[%s1] sm:$0x1]
  %v31 = vmul.f32 %v30, 0.0078125
  %v32 = vld [vmem:[%s2] sm:$0x1]
  %v33 = vmul.f32 %v32, 0.0078125
  %v34 = vmul.f32 %v31, %v31
  %v35 = vsub.f32 %v33, %v34
  %v36 = vmax.f32 %v35, 0.0
  %v38 = vlaneseq
  %v39 = vshrl.u32 %v38, 7
  %v40 = vsub.s32 0, %v39
  %v41 = vrot.slane %v31, %v40
  %v43 = vsub.f32 %v14, %v41
  %v44 = vsub.f32 %v15, %v41
  %v45 = vsub.f32 %v16, %v41
  %v46 = vsub.f32 %v17, %v41
  %v47 = vsub.f32 %v18, %v41
  %v48 = vsub.f32 %v19, %v41
  %v49 = vsub.f32 %v20, %v41
  %v50 = vsub.f32 %v21, %v41
  %v51 = vsub.f32 %v22, %v41
  %v52 = vsub.f32 %v23, %v41
  %v53 = vsub.f32 %v24, %v41
  %v54 = vsub.f32 %v25, %v41
  %v55 = vsub.f32 %v26, %v41
  %v56 = vsub.f32 %v27, %v41
  %v57 = vsub.f32 %v28, %v41
  %v58 = vsub.f32 %v29, %v41
  %v59 = vadd.f32 %v36, 1e-05
  %v60 = vrsqrt.pop %v59
  %v62 = vlaneseq
  %v63 = vshrl.u32 %v62, 7
  %v64 = vsub.s32 0, %v63
  %v65 = vrot.slane %v60, %v64
  %v67 = vmul.f32 %v43, %v65
  %v68 = vmul.f32 %v44, %v65
  %v69 = vmul.f32 %v45, %v65
  %v70 = vmul.f32 %v46, %v65
  %v71 = vmul.f32 %v47, %v65
  %v72 = vmul.f32 %v48, %v65
  %v73 = vmul.f32 %v49, %v65
  %v74 = vmul.f32 %v50, %v65
  %v75 = vmul.f32 %v51, %v65
  %v76 = vmul.f32 %v52, %v65
  %v77 = vmul.f32 %v53, %v65
  %v78 = vmul.f32 %v54, %v65
  %v79 = vmul.f32 %v55, %v65
  %v80 = vmul.f32 %v56, %v65
  %v81 = vmul.f32 %v57, %v65
  %v82 = vmul.f32 %v58, %v65
  %vm83 = vcmp.ge.f32.partialorder %v67, 0.0
  %vm84 = vcmp.ge.f32.partialorder %v68, 0.0
  %vm85 = vcmp.ge.f32.partialorder %v69, 0.0
  %vm86 = vcmp.ge.f32.partialorder %v70, 0.0
  %vm87 = vcmp.ge.f32.partialorder %v71, 0.0
  %vm88 = vcmp.ge.f32.partialorder %v72, 0.0
  %vm89 = vcmp.ge.f32.partialorder %v73, 0.0
  %vm90 = vcmp.ge.f32.partialorder %v74, 0.0
  %vm91 = vcmp.ge.f32.partialorder %v75, 0.0
  %vm92 = vcmp.ge.f32.partialorder %v76, 0.0
  %vm93 = vcmp.ge.f32.partialorder %v77, 0.0
  %vm94 = vcmp.ge.f32.partialorder %v78, 0.0
  %vm95 = vcmp.ge.f32.partialorder %v79, 0.0
  %vm96 = vcmp.ge.f32.partialorder %v80, 0.0
  %vm97 = vcmp.ge.f32.partialorder %v81, 0.0
  %vm98 = vcmp.ge.f32.partialorder %v82, 0.0
  %v99 = vmul.f32 %v67, 0.2
  %v100 = vmul.f32 %v68, 0.2
  %v101 = vmul.f32 %v69, 0.2
  %v102 = vmul.f32 %v70, 0.2
  %v103 = vmul.f32 %v71, 0.2
  %v104 = vmul.f32 %v72, 0.2
  %v105 = vmul.f32 %v73, 0.2
  %v106 = vmul.f32 %v74, 0.2
  %v107 = vmul.f32 %v75, 0.2
  %v108 = vmul.f32 %v76, 0.2
  %v109 = vmul.f32 %v77, 0.2
  %v110 = vmul.f32 %v78, 0.2
  %v111 = vmul.f32 %v79, 0.2
  %v112 = vmul.f32 %v80, 0.2
  %v113 = vmul.f32 %v81, 0.2
  %v114 = vmul.f32 %v82, 0.2
  %v115 = vsel %vm83, %v67, %v99
  %v116 = vsel %vm84, %v68, %v100
  %v117 = vsel %vm85, %v69, %v101
  %v118 = vsel %vm86, %v70, %v102
  %v119 = vsel %vm87, %v71, %v103
  %v120 = vsel %vm88, %v72, %v104
  %v121 = vsel %vm89, %v73, %v105
  %v122 = vsel %vm90, %v74, %v106
  %v123 = vsel %vm91, %v75, %v107
  %v124 = vsel %vm92, %v76, %v108
  %v125 = vsel %vm93, %v77, %v109
  %v126 = vsel %vm94, %v78, %v110
  %v127 = vsel %vm95, %v79, %v111
  %v128 = vsel %vm96, %v80, %v112
  %v129 = vsel %vm97, %v81, %v113
  %v130 = vsel %vm98, %v82, %v114
  %131 = vst [vmem:[%s3] sm:$0xff] %v115
  %132 = vst [vmem:[%s3 + $0x8] sm:$0xff] %v116
  %133 = vst [vmem:[%s3 + $0x10] sm:$0xff] %v117
  %134 = vst [vmem:[%s3 + $0x18] sm:$0xff] %v118
  %135 = vst [vmem:[%s3 + $0x20] sm:$0xff] %v119
  %136 = vst [vmem:[%s3 + $0x28] sm:$0xff] %v120
  %137 = vst [vmem:[%s3 + $0x30] sm:$0xff] %v121
  %138 = vst [vmem:[%s3 + $0x38] sm:$0xff] %v122
  %139 = vst [vmem:[%s3 + $0x40] sm:$0xff] %v123
  %140 = vst [vmem:[%s3 + $0x48] sm:$0xff] %v124
  %141 = vst [vmem:[%s3 + $0x50] sm:$0xff] %v125
  %142 = vst [vmem:[%s3 + $0x58] sm:$0xff] %v126
  %143 = vst [vmem:[%s3 + $0x60] sm:$0xff] %v127
  %144 = vst [vmem:[%s3 + $0x68] sm:$0xff] %v128
  %145 = vst [vmem:[%s3 + $0x70] sm:$0xff] %v129
  %146 = vst [vmem:[%s3 + $0x78] sm:$0xff] %v130
  // Predicated region
  $region14: #{d_forward.7} parent=0 // pred_check
    _
  $region15: #{d_forward.7} parent=0 // pred_check_branch
    %148 = sbr.rel (0) target = $region17
  $region16: #{d_forward.7} parent=0 // pred_region
    _
  $region17: #{d_forward.7} parent=0 // pred_fallthru
    _
  // Predicated region
  $region18: #{d_forward.7} parent=0 // pred_check
    _
  $region19: #{d_forward.7} parent=0 // pred_check_branch
    %150 = sbr.rel (0) target = $region21
  $region20: #{d_forward.7} parent=0 // pred_region
    _
  $region21: #{d_forward.7} parent=0 // pred_fallthru
    _

// kernel: d_forward.9
$region0: #{d_forward.9}
  #allocation0 [shape = 'u32[]', space=smem, size = 0x4, offset = 0x4, fixed_abs, tag = 'smem constant byte address 0x4 - core index']
  #allocation1 [shape = 'u32[144,128]{1,0:T(1,128)}', space=vmem, size = 0x12000, scoped, tag = 'internal scratch']
  %s0 = inlined_call_operand.vmem [shape: f32[32,256], index: 0, kind: input, shape index: {}]
  %s1 = inlined_call_operand.vmem [shape: f32[1,256], index: 1, kind: input, shape index: {}]
  %s2 = inlined_call_operand.vmem [shape: f32[1,256], index: 2, kind: input, shape index: {}]
  %s3 = inlined_call_operand.vmem [shape: f32[32,256], index: 3, kind: output, shape index: {}]
  %s4 = sld [smem:[#allocation0]]
  $region22: #{d_forward.9} parent=0
    _
  %s6 = ssub.s32 1, %s4
  %s7 = scalar_select 0, %s6, %s4
  // Predicated region
  $region2: #{d_forward.9} parent=0 // pred_check
    _
  $region3: #{d_forward.9} parent=0 // pred_check_branch
    %9 = sbr.rel (0) target = $region5
  $region4: #{d_forward.9} parent=0 // pred_region
    _
  $region5: #{d_forward.9} parent=0 // pred_fallthru
    _
  // Predicated region
  $region6: #{d_forward.9} parent=0 // pred_check
    _
  $region7: #{d_forward.9} parent=0 // pred_check_branch
    %11 = sbr.rel (0) target = $region9
  $region8: #{d_forward.9} parent=0 // pred_region
    _
  $region9: #{d_forward.9} parent=0 // pred_fallthru
    _
  // Predicated region
  $region10: #{d_forward.9} parent=0 // pred_check
    _
  $region11: #{d_forward.9} parent=0 // pred_check_branch
    %13 = sbr.rel (0) target = $region13
  $region12: #{d_forward.9} parent=0 // pred_region
    _
  $region13: #{d_forward.9} parent=0 // pred_fallthru
    _
  %v14 = vld [vmem:[%s0] sm:$0xff]
  %v15 = vld [vmem:[%s0 + $0x8] sm:$0xff]
  %v16 = vld [vmem:[%s0 + $0x10] sm:$0xff]
  %v17 = vld [vmem:[%s0 + $0x18] sm:$0xff]
  %v18 = vld [vmem:[%s0 + $0x20] sm:$0xff]
  %v19 = vld [vmem:[%s0 + $0x28] sm:$0xff]
  %v20 = vld [vmem:[%s0 + $0x30] sm:$0xff]
  %v21 = vld [vmem:[%s0 + $0x38] sm:$0xff]
  %v22 = vld [vmem:[%s1] sm:$0x3]
  %v23 = vmul.f32 %v22, 0.03125
  %v24 = vld [vmem:[%s2] sm:$0x3]
  %v25 = vmul.f32 %v24, 0.03125
  %v26 = vmul.f32 %v23, %v23
  %v27 = vsub.f32 %v25, %v26
  %v28 = vmax.f32 %v27, 0.0
  %v30 = vlaneseq
  %v31 = vshrl.u32 %v30, 7
  %v32 = vsub.s32 0, %v31
  %v33 = vrot.slane %v23, %v32
  %v34 = vlaneseq
  %v35 = vshrl.u32 %v34, 7
  %v36 = vsub.s32 1, %v35
  %v37 = vrot.slane %v23, %v36
  %v40 = vsub.f32 %v14, %v33
  %v41 = vsub.f32 %v15, %v37
  %v42 = vsub.f32 %v16, %v33
  %v43 = vsub.f32 %v17, %v37
  %v44 = vsub.f32 %v18, %v33
  %v45 = vsub.f32 %v19, %v37
  %v46 = vsub.f32 %v20, %v33
  %v47 = vsub.f32 %v21, %v37
  %v48 = vadd.f32 %v28, 1e-05
  %v49 = vrsqrt.pop %v48
  %v51 = vlaneseq
  %v52 = vshrl.u32 %v51, 7
  %v53 = vsub.s32 0, %v52
  %v54 = vrot.slane %v49, %v53
  %v55 = vlaneseq
  %v56 = vshrl.u32 %v55, 7
  %v57 = vsub.s32 1, %v56
  %v58 = vrot.slane %v49, %v57
  %v61 = vmul.f32 %v40, %v54
  %v62 = vmul.f32 %v41, %v58
  %v63 = vmul.f32 %v42, %v54
  %v64 = vmul.f32 %v43, %v58
  %v65 = vmul.f32 %v44, %v54
  %v66 = vmul.f32 %v45, %v58
  %v67 = vmul.f32 %v46, %v54
  %v68 = vmul.f32 %v47, %v58
  %vm69 = vcmp.ge.f32.partialorder %v61, 0.0
  %vm70 = vcmp.ge.f32.partialorder %v62, 0.0
  %vm71 = vcmp.ge.f32.partialorder %v63, 0.0
  %vm72 = vcmp.ge.f32.partialorder %v64, 0.0
  %vm73 = vcmp.ge.f32.partialorder %v65, 0.0
  %vm74 = vcmp.ge.f32.partialorder %v66, 0.0
  %vm75 = vcmp.ge.f32.partialorder %v67, 0.0
  %vm76 = vcmp.ge.f32.partialorder %v68, 0.0
  %v77 = vmul.f32 %v61, 0.2
  %v78 = vmul.f32 %v62, 0.2
  %v79 = vmul.f32 %v63, 0.2
  %v80 = vmul.f32 %v64, 0.2
  %v81 = vmul.f32 %v65, 0.2
  %v82 = vmul.f32 %v66, 0.2
  %v83 = vmul.f32 %v67, 0.2
  %v84 = vmul.f32 %v68, 0.2
  %v85 = vsel %vm69, %v61, %v77
  %v86 = vsel %vm70, %v62, %v78
  %v87 = vsel %vm71, %v63, %v79
  %v88 = vsel %vm72, %v64, %v80
  %v89 = vsel %vm73, %v65, %v81
  %v90 = vsel %vm74, %v66, %v82
  %v91 = vsel %vm75, %v67, %v83
  %v92 = vsel %vm76, %v68, %v84
  %93 = vst [vmem:[%s3] sm:$0xff] %v85
  %94 = vst [vmem:[%s3 + $0x8] sm:$0xff] %v86
  %95 = vst [vmem:[%s3 + $0x10] sm:$0xff] %v87
  %96 = vst [vmem:[%s3 + $0x18] sm:$0xff] %v88
  %97 = vst [vmem:[%s3 + $0x20] sm:$0xff] %v89
  %98 = vst [vmem:[%s3 + $0x28] sm:$0xff] %v90
  %99 = vst [vmem:[%s3 + $0x30] sm:$0xff] %v91
  %100 = vst [vmem:[%s3 + $0x38] sm:$0xff] %v92
  // Predicated region
  $region14: #{d_forward.9} parent=0 // pred_check
    _
  $region15: #{d_forward.9} parent=0 // pred_check_branch
    %102 = sbr.rel (0) target = $region17
  $region16: #{d_forward.9} parent=0 // pred_region
    _
  $region17: #{d_forward.9} parent=0 // pred_fallthru
    _
  // Predicated region
  $region18: #{d_forward.9} parent=0 // pred_check
    _
  $region19: #{d_forward.9} parent=0 // pred_check_branch
    %104 = sbr.rel (0) target = $region21
  $region20: #{d_forward.9} parent=0 // pred_region
    _
  $region21: #{d_forward.9} parent=0 // pred_fallthru
    _

// kernel: d_forward.8
$region0: #{d_forward.8}
  #allocation0 [shape = 'u32[]', space=smem, size = 0x4, offset = 0x4, fixed_abs, tag = 'smem constant byte address 0x4 - core index']
  #allocation1 [shape = 'u32[144,128]{1,0:T(1,128)}', space=vmem, size = 0x12000, scoped, tag = 'internal scratch']
  %s0 = inlined_call_operand.vmem [shape: bf16[32,3200], index: 0, kind: input, shape index: {}]
  %s1 = inlined_call_operand.vmem [shape: bf16[3200,256], index: 1, kind: input, shape index: {}]
  %s2 = inlined_call_operand.vmem [shape: f32[1,256], index: 2, kind: input, shape index: {}]
  %s3 = inlined_call_operand.vmem [shape: f32[32,256], index: 3, kind: output, shape index: {0}]
  %s4 = inlined_call_operand.vmem [shape: f32[1,256], index: 4, kind: output, shape index: {1}]
  %s5 = inlined_call_operand.vmem [shape: f32[1,256], index: 5, kind: output, shape index: {2}]
  %6 = xla_tuple %s3, %s4, %s5
  %s7 = sld [smem:[#allocation0]]
  $region42: #{d_forward.8} parent=0
    _
  %s9 = ssub.s32 1, %s7
  %s10 = scalar_select 0, %s9, %s7
  // Predicated region
  $region2: #{d_forward.8} parent=0 // pred_check
    _
  $region3: #{d_forward.8} parent=0 // pred_check_branch
    %12 = sbr.rel (0) target = $region5
  $region4: #{d_forward.8} parent=0 // pred_region
    _
  $region5: #{d_forward.8} parent=0 // pred_fallthru
    _
  // Predicated region
  $region6: #{d_forward.8} parent=0 // pred_check
    _
  $region7: #{d_forward.8} parent=0 // pred_check_branch
    %14 = sbr.rel (0) target = $region9
  $region8: #{d_forward.8} parent=0 // pred_region
    _
  $region9: #{d_forward.8} parent=0 // pred_fallthru
    _
  // Predicated region
  $region10: #{d_forward.8} parent=0 // pred_check
    _
  $region11: #{d_forward.8} parent=0 // pred_check_branch
    %16 = sbr.rel (0) target = $region13
  $region12: #{d_forward.8} parent=0 // pred_region
    _
  $region13: #{d_forward.8} parent=0 // pred_fallthru
    _
  %v18 = vld [vmem:[%s0] sm:$0xff]
  %v19 = vld [vmem:[%s0 + $0x8] sm:$0xff]
  %v20 = vld [vmem:[%s0 + $0x10] sm:$0xff]
  %v21 = vld [vmem:[%s0 + $0x18] sm:$0xff]
  %v22 = vld [vmem:[%s0 + $0x20] sm:$0xff]
  %v23 = vld [vmem:[%s0 + $0x28] sm:$0xff]
  %v24 = vld [vmem:[%s0 + $0x30] sm:$0xff]
  %v25 = vld [vmem:[%s0 + $0x38] sm:$0xff]
  %v26 = vld [vmem:[%s0 + $0x40] sm:$0xff]
  %v27 = vld [vmem:[%s0 + $0x48] sm:$0xff]
  %v28 = vld [vmem:[%s0 + $0x50] sm:$0xff]
  %v29 = vld [vmem:[%s0 + $0x58] sm:$0xff]
  %v30 = vld [vmem:[%s0 + $0x60] sm:$0xf]
  %v31 = vld [vmem:[%s0 + $0x64] sm:$0xff]
  %v32 = vld [vmem:[%s0 + $0x6c] sm:$0xff]
  %v33 = vld [vmem:[%s0 + $0x74] sm:$0xff]
  %v34 = vld [vmem:[%s0 + $0x7c] sm:$0xff]
  %v35 = vld [vmem:[%s0 + $0x84] sm:$0xff]
  %v36 = vld [vmem:[%s0 + $0x8c] sm:$0xff]
  %v37 = vld [vmem:[%s0 + $0x94] sm:$0xff]
  %v38 = vld [vmem:[%s0 + $0x9c] sm:$0xff]
  %v39 = vld [vmem:[%s0 + $0xa4] sm:$0xff]
  %v40 = vld [vmem:[%s0 + $0xac] sm:$0xff]
  %v41 = vld [vmem:[%s0 + $0xb4] sm:$0xff]
  %v42 = vld [vmem:[%s0 + $0xbc] sm:$0xff]
  %v43 = vld [vmem:[%s0 + $0xc4] sm:$0xf]
  %v44 = vld [vmem:[%s0 + $0xc8] sm:$0xff]
  %v45 = vld [vmem:[%s0 + $0xd0] sm:$0xff]
  %v46 = vld [vmem:[%s0 + $0xd8] sm:$0xff]
  %v47 = vld [vmem:[%s0 + $0xe0] sm:$0xff]
  %v48 = vld [vmem:[%s0 + $0xe8] sm:$0xff]
  %v49 = vld [vmem:[%s0 + $0xf0] sm:$0xff]
  %v50 = vld [vmem:[%s0 + $0xf8] sm:$0xff]
  %v51 = vld [vmem:[%s0 + $0x100] sm:$0xff]
  %v52 = vld [vmem:[%s0 + $0x108] sm:$0xff]
  %v53 = vld [vmem:[%s0 + $0x110] sm:$0xff]
  %v54 = vld [vmem:[%s0 + $0x118] sm:$0xff]
  %v55 = vld [vmem:[%s0 + $0x120] sm:$0xff]
  %v56 = vld [vmem:[%s0 + $0x128] sm:$0xf]
  %v57 = vld [vmem:[%s0 + $0x12c] sm:$0xff]
  %v58 = vld [vmem:[%s0 + $0x134] sm:$0xff]
  %v59 = vld [vmem:[%s0 + $0x13c] sm:$0xff]
  %v60 = vld [vmem:[%s0 + $0x144] sm:$0xff]
  %v61 = vld [vmem:[%s0 + $0x14c] sm:$0xff]
  %v62 = vld [vmem:[%s0 + $0x154] sm:$0xff]
  %v63 = vld [vmem:[%s0 + $0x15c] sm:$0xff]
  %v64 = vld [vmem:[%s0 + $0x164] sm:$0xff]
  %v65 = vld [vmem:[%s0 + $0x16c] sm:$0xff]
  %v66 = vld [vmem:[%s0 + $0x174] sm:$0xff]
  %v67 = vld [vmem:[%s0 + $0x17c] sm:$0xff]
  %v68 = vld [vmem:[%s0 + $0x184] sm:$0xff]
  %v69 = vld [vmem:[%s0 + $0x18c] sm:$0xf]
  %v70 = vld [vmem:[%s1] sm:$0xff]
  %v71 = vld [vmem:[%s1 + $0x8] sm:$0xff]
  %v72 = vld [vmem:[%s1 + $0x10] sm:$0xff]
  %v73 = vld [vmem:[%s1 + $0x18] sm:$0xff]
  %v74 = vld [vmem:[%s1 + $0x20] sm:$0xff]
  %v75 = vld [vmem:[%s1 + $0x28] sm:$0xff]
  %v76 = vld [vmem:[%s1 + $0x30] sm:$0xff]
  %v77 = vld [vmem:[%s1 + $0x38] sm:$0xff]
  %v78 = vld [vmem:[%s1 + $0x40] sm:$0xff]
  %v79 = vld [vmem:[%s1 + $0x48] sm:$0xff]
  %v80 = vld [vmem:[%s1 + $0x50] sm:$0xff]
  %v81 = vld [vmem:[%s1 + $0x58] sm:$0xff]
  %v82 = vld [vmem:[%s1 + $0x60] sm:$0xff]
  %v83 = vld [vmem:[%s1 + $0x68] sm:$0xff]
  %v84 = vld [vmem:[%s1 + $0x70] sm:$0xff]
  %v85 = vld [vmem:[%s1 + $0x78] sm:$0xff]
  %v86 = vld [vmem:[%s1 + $0x80] sm:$0xff]
  %v87 = vld [vmem:[%s1 + $0x88] sm:$0xff]
  %v88 = vld [vmem:[%s1 + $0x90] sm:$0xff]
  %v89 = vld [vmem:[%s1 + $0x98] sm:$0xff]
  %v90 = vld [vmem:[%s1 + $0xa0] sm:$0xff]
  %v91 = vld [vmem:[%s1 + $0xa8] sm:$0xff]
  %v92 = vld [vmem:[%s1 + $0xb0] sm:$0xff]
  %v93 = vld [vmem:[%s1 + $0xb8] sm:$0xff]
  %v94 = vld [vmem:[%s1 + $0xc0] sm:$0xff]
  %v95 = vld [vmem:[%s1 + $0xc8] sm:$0xff]
  %v96 = vld [vmem:[%s1 + $0xd0] sm:$0xff]
  %v97 = vld [vmem:[%s1 + $0xd8] sm:$0xff]
  %v98 = vld [vmem:[%s1 + $0xe0] sm:$0xff]
  %v99 = vld [vmem:[%s1 + $0xe8] sm:$0xff]
  %v100 = vld [vmem:[%s1 + $0xf0] sm:$0xff]
  %v101 = vld [vmem:[%s1 + $0xf8] sm:$0xff]
  %v102 = vld [vmem:[%s1 + $0x100] sm:$0xff]
  %v103 = vld [vmem:[%s1 + $0x108] sm:$0xff]
  %v104 = vld [vmem:[%s1 + $0x110] sm:$0xff]
  %v105 = vld [vmem:[%s1 + $0x118] sm:$0xff]
  %v106 = vld [vmem:[%s1 + $0x120] sm:$0xff]
  %v107 = vld [vmem:[%s1 + $0x128] sm:$0xff]
  %v108 = vld [vmem:[%s1 + $0x130] sm:$0xff]
  %v109 = vld [vmem:[%s1 + $0x138] sm:$0xff]
  %v110 = vld [vmem:[%s1 + $0x140] sm:$0xff]
  %v111 = vld [vmem:[%s1 + $0x148] sm:$0xff]
  %v112 = vld [vmem:[%s1 + $0x150] sm:$0xff]
  %v113 = vld [vmem:[%s1 + $0x158] sm:$0xff]
  %v114 = vld [vmem:[%s1 + $0x160] sm:$0xff]
  %v115 = vld [vmem:[%s1 + $0x168] sm:$0xff]
  %v116 = vld [vmem:[%s1 + $0x170] sm:$0xff]
  %v117 = vld [vmem:[%s1 + $0x178] sm:$0xff]
  %v118 = vld [vmem:[%s1 + $0x180] sm:$0xff]
  %v119 = vld [vmem:[%s1 + $0x188] sm:$0xff]
  %v120 = vld [vmem:[%s1 + $0x190] sm:$0xff]
  %v121 = vld [vmem:[%s1 + $0x198] sm:$0xff]
  %v122 = vld [vmem:[%s1 + $0x1a0] sm:$0xff]
  %v123 = vld [vmem:[%s1 + $0x1a8] sm:$0xff]
  %v124 = vld [vmem:[%s1 + $0x1b0] sm:$0xff]
  %v125 = vld [vmem:[%s1 + $0x1b8] sm:$0xff]
  %v126 = vld [vmem:[%s1 + $0x1c0] sm:$0xff]
  %v127 = vld [vmem:[%s1 + $0x1c8] sm:$0xff]
  %v128 = vld [vmem:[%s1 + $0x1d0] sm:$0xff]
  %v129 = vld [vmem:[%s1 + $0x1d8] sm:$0xff]
  %v130 = vld [vmem:[%s1 + $0x1e0] sm:$0xff]
  %v131 = vld [vmem:[%s1 + $0x1e8] sm:$0xff]
  %v132 = vld [vmem:[%s1 + $0x1f0] sm:$0xff]
  %v133 = vld [vmem:[%s1 + $0x1f8] sm:$0xff]
  %v134 = vld [vmem:[%s1 + $0x200] sm:$0xff]
  %v135 = vld [vmem:[%s1 + $0x208] sm:$0xff]
  %v136 = vld [vmem:[%s1 + $0x210] sm:$0xff]
  %v137 = vld [vmem:[%s1 + $0x218] sm:$0xff]
  %v138 = vld [vmem:[%s1 + $0x220] sm:$0xff]
  %v139 = vld [vmem:[%s1 + $0x228] sm:$0xff]
  %v140 = vld [vmem:[%s1 + $0x230] sm:$0xff]
  %v141 = vld [vmem:[%s1 + $0x238] sm:$0xff]
  %v142 = vld [vmem:[%s1 + $0x240] sm:$0xff]
  %v143 = vld [vmem:[%s1 + $0x248] sm:$0xff]
  %v144 = vld [vmem:[%s1 + $0x250] sm:$0xff]
  %v145 = vld [vmem:[%s1 + $0x258] sm:$0xff]
  %v146 = vld [vmem:[%s1 + $0x260] sm:$0xff]
  %v147 = vld [vmem:[%s1 + $0x268] sm:$0xff]
  %v148 = vld [vmem:[%s1 + $0x270] sm:$0xff]
  %v149 = vld [vmem:[%s1 + $0x278] sm:$0xff]
  %v150 = vld [vmem:[%s1 + $0x280] sm:$0xff]
  %v151 = vld [vmem:[%s1 + $0x288] sm:$0xff]
  %v152 = vld [vmem:[%s1 + $0x290] sm:$0xff]
  %v153 = vld [vmem:[%s1 + $0x298] sm:$0xff]
  %v154 = vld [vmem:[%s1 + $0x2a0] sm:$0xff]
  %v155 = vld [vmem:[%s1 + $0x2a8] sm:$0xff]
  %v156 = vld [vmem:[%s1 + $0x2b0] sm:$0xff]
  %v157 = vld [vmem:[%s1 + $0x2b8] sm:$0xff]
  %v158 = vld [vmem:[%s1 + $0x2c0] sm:$0xff]
  %v159 = vld [vmem:[%s1 + $0x2c8] sm:$0xff]
  %v160 = vld [vmem:[%s1 + $0x2d0] sm:$0xff]
  %v161 = vld [vmem:[%s1 + $0x2d8] sm:$0xff]
  %v162 = vld [vmem:[%s1 + $0x2e0] sm:$0xff]
  %v163 = vld [vmem:[%s1 + $0x2e8] sm:$0xff]
  %v164 = vld [vmem:[%s1 + $0x2f0] sm:$0xff]
  %v165 = vld [vmem:[%s1 + $0x2f8] sm:$0xff]
  %v166 = vld [vmem:[%s1 + $0x300] sm:$0xff]
  %v167 = vld [vmem:[%s1 + $0x308] sm:$0xff]
  %v168 = vld [vmem:[%s1 + $0x310] sm:$0xff]
  %v169 = vld [vmem:[%s1 + $0x318] sm:$0xff]
  %v170 = vld [vmem:[%s1 + $0x320] sm:$0xff]
  %v171 = vld [vmem:[%s1 + $0x328] sm:$0xff]
  %v172 = vld [vmem:[%s1 + $0x330] sm:$0xff]
  %v173 = vld [vmem:[%s1 + $0x338] sm:$0xff]
  %v174 = vld [vmem:[%s1 + $0x340] sm:$0xff]
  %v175 = vld [vmem:[%s1 + $0x348] sm:$0xff]
  %v176 = vld [vmem:[%s1 + $0x350] sm:$0xff]
  %v177 = vld [vmem:[%s1 + $0x358] sm:$0xff]
  %v178 = vld [vmem:[%s1 + $0x360] sm:$0xff]
  %v179 = vld [vmem:[%s1 + $0x368] sm:$0xff]
  %v180 = vld [vmem:[%s1 + $0x370] sm:$0xff]
  %v181 = vld [vmem:[%s1 + $0x378] sm:$0xff]
  %v182 = vld [vmem:[%s1 + $0x380] sm:$0xff]
  %v183 = vld [vmem:[%s1 + $0x388] sm:$0xff]
  %v184 = vld [vmem:[%s1 + $0x390] sm:$0xff]
  %v185 = vld [vmem:[%s1 + $0x398] sm:$0xff]
  %v186 = vld [vmem:[%s1 + $0x3a0] sm:$0xff]
  %v187 = vld [vmem:[%s1 + $0x3a8] sm:$0xff]
  %v188 = vld [vmem:[%s1 + $0x3b0] sm:$0xff]
  %v189 = vld [vmem:[%s1 + $0x3b8] sm:$0xff]
  %v190 = vld [vmem:[%s1 + $0x3c0] sm:$0xff]
  %v191 = vld [vmem:[%s1 + $0x3c8] sm:$0xff]
  %v192 = vld [vmem:[%s1 + $0x3d0] sm:$0xff]
  %v193 = vld [vmem:[%s1 + $0x3d8] sm:$0xff]
  %v194 = vld [vmem:[%s1 + $0x3e0] sm:$0xff]
  %v195 = vld [vmem:[%s1 + $0x3e8] sm:$0xff]
  %v196 = vld [vmem:[%s1 + $0x3f0] sm:$0xff]
  %v197 = vld [vmem:[%s1 + $0x3f8] sm:$0xff]
  %v198 = vld [vmem:[%s1 + $0x400] sm:$0xff]
  %v199 = vld [vmem:[%s1 + $0x408] sm:$0xff]
  %v200 = vld [vmem:[%s1 + $0x410] sm:$0xff]
  %v201 = vld [vmem:[%s1 + $0x418] sm:$0xff]
  %v202 = vld [vmem:[%s1 + $0x420] sm:$0xff]
  %v203 = vld [vmem:[%s1 + $0x428] sm:$0xff]
  %v204 = vld [vmem:[%s1 + $0x430] sm:$0xff]
  %v205 = vld [vmem:[%s1 + $0x438] sm:$0xff]
  %v206 = vld [vmem:[%s1 + $0x440] sm:$0xff]
  %v207 = vld [vmem:[%s1 + $0x448] sm:$0xff]
  %v208 = vld [vmem:[%s1 + $0x450] sm:$0xff]
  %v209 = vld [vmem:[%s1 + $0x458] sm:$0xff]
  %v210 = vld [vmem:[%s1 + $0x460] sm:$0xff]
  %v211 = vld [vmem:[%s1 + $0x468] sm:$0xff]
  %v212 = vld [vmem:[%s1 + $0x470] sm:$0xff]
  %v213 = vld [vmem:[%s1 + $0x478] sm:$0xff]
  %v214 = vld [vmem:[%s1 + $0x480] sm:$0xff]
  %v215 = vld [vmem:[%s1 + $0x488] sm:$0xff]
  %v216 = vld [vmem:[%s1 + $0x490] sm:$0xff]
  %v217 = vld [vmem:[%s1 + $0x498] sm:$0xff]
  %v218 = vld [vmem:[%s1 + $0x4a0] sm:$0xff]
  %v219 = vld [vmem:[%s1 + $0x4a8] sm:$0xff]
  %v220 = vld [vmem:[%s1 + $0x4b0] sm:$0xff]
  %v221 = vld [vmem:[%s1 + $0x4b8] sm:$0xff]
  %v222 = vld [vmem:[%s1 + $0x4c0] sm:$0xff]
  %v223 = vld [vmem:[%s1 + $0x4c8] sm:$0xff]
  %v224 = vld [vmem:[%s1 + $0x4d0] sm:$0xff]
  %v225 = vld [vmem:[%s1 + $0x4d8] sm:$0xff]
  %v226 = vld [vmem:[%s1 + $0x4e0] sm:$0xff]
  %v227 = vld [vmem:[%s1 + $0x4e8] sm:$0xff]
  %v228 = vld [vmem:[%s1 + $0x4f0] sm:$0xff]
  %v229 = vld [vmem:[%s1 + $0x4f8] sm:$0xff]
  %v230 = vld [vmem:[%s1 + $0x500] sm:$0xff]
  %v231 = vld [vmem:[%s1 + $0x508] sm:$0xff]
  %v232 = vld [vmem:[%s1 + $0x510] sm:$0xff]
  %v233 = vld [vmem:[%s1 + $0x518] sm:$0xff]
  %v234 = vld [vmem:[%s1 + $0x520] sm:$0xff]
  %v235 = vld [vmem:[%s1 + $0x528] sm:$0xff]
  %v236 = vld [vmem:[%s1 + $0x530] sm:$0xff]
  %v237 = vld [vmem:[%s1 + $0x538] sm:$0xff]
  %v238 = vld [vmem:[%s1 + $0x540] sm:$0xff]
  %v239 = vld [vmem:[%s1 + $0x548] sm:$0xff]
  %v240 = vld [vmem:[%s1 + $0x550] sm:$0xff]
  %v241 = vld [vmem:[%s1 + $0x558] sm:$0xff]
  %v242 = vld [vmem:[%s1 + $0x560] sm:$0xff]
  %v243 = vld [vmem:[%s1 + $0x568] sm:$0xff]
  %v244 = vld [vmem:[%s1 + $0x570] sm:$0xff]
  %v245 = vld [vmem:[%s1 + $0x578] sm:$0xff]
  %v246 = vld [vmem:[%s1 + $0x580] sm:$0xff]
  %v247 = vld [vmem:[%s1 + $0x588] sm:$0xff]
  %v248 = vld [vmem:[%s1 + $0x590] sm:$0xff]
  %v249 = vld [vmem:[%s1 + $0x598] sm:$0xff]
  %v250 = vld [vmem:[%s1 + $0x5a0] sm:$0xff]
  %v251 = vld [vmem:[%s1 + $0x5a8] sm:$0xff]
  %v252 = vld [vmem:[%s1 + $0x5b0] sm:$0xff]
  %v253 = vld [vmem:[%s1 + $0x5b8] sm:$0xff]
  %v254 = vld [vmem:[%s1 + $0x5c0] sm:$0xff]
  %v255 = vld [vmem:[%s1 + $0x5c8] sm:$0xff]
  %v256 = vld [vmem:[%s1 + $0x5d0] sm:$0xff]
  %v257 = vld [vmem:[%s1 + $0x5d8] sm:$0xff]
  %v258 = vld [vmem:[%s1 + $0x5e0] sm:$0xff]
  %v259 = vld [vmem:[%s1 + $0x5e8] sm:$0xff]
  %v260 = vld [vmem:[%s1 + $0x5f0] sm:$0xff]
  %v261 = vld [vmem:[%s1 + $0x5f8] sm:$0xff]
  %v262 = vld [vmem:[%s1 + $0x600] sm:$0xff]
  %v263 = vld [vmem:[%s1 + $0x608] sm:$0xff]
  %v264 = vld [vmem:[%s1 + $0x610] sm:$0xff]
  %v265 = vld [vmem:[%s1 + $0x618] sm:$0xff]
  %v266 = vld [vmem:[%s1 + $0x620] sm:$0xff]
  %v267 = vld [vmem:[%s1 + $0x628] sm:$0xff]
  %v268 = vld [vmem:[%s1 + $0x630] sm:$0xff]
  %v269 = vld [vmem:[%s1 + $0x638] sm:$0xff]
  %v270 = vld [vmem:[%s1 + $0x640] sm:$0xff]
  %v271 = vld [vmem:[%s1 + $0x648] sm:$0xff]
  %v272 = vld [vmem:[%s1 + $0x650] sm:$0xff]
  %v273 = vld [vmem:[%s1 + $0x658] sm:$0xff]
  %v274 = vld [vmem:[%s1 + $0x660] sm:$0xff]
  %v275 = vld [vmem:[%s1 + $0x668] sm:$0xff]
  %v276 = vld [vmem:[%s1 + $0x670] sm:$0xff]
  %v277 = vld [vmem:[%s1 + $0x678] sm:$0xff]
  %v278 = vld [vmem:[%s1 + $0x680] sm:$0xff]
  %v279 = vld [vmem:[%s1 + $0x688] sm:$0xff]
  %v280 = vld [vmem:[%s1 + $0x690] sm:$0xff]
  %v281 = vld [vmem:[%s1 + $0x698] sm:$0xff]
  %v282 = vld [vmem:[%s1 + $0x6a0] sm:$0xff]
  %v283 = vld [vmem:[%s1 + $0x6a8] sm:$0xff]
  %v284 = vld [vmem:[%s1 + $0x6b0] sm:$0xff]
  %v285 = vld [vmem:[%s1 + $0x6b8] sm:$0xff]
  %v286 = vld [vmem:[%s1 + $0x6c0] sm:$0xff]
  %v287 = vld [vmem:[%s1 + $0x6c8] sm:$0xff]
  %v288 = vld [vmem:[%s1 + $0x6d0] sm:$0xff]
  %v289 = vld [vmem:[%s1 + $0x6d8] sm:$0xff]
  %v290 = vld [vmem:[%s1 + $0x6e0] sm:$0xff]
  %v291 = vld [vmem:[%s1 + $0x6e8] sm:$0xff]
  %v292 = vld [vmem:[%s1 + $0x6f0] sm:$0xff]
  %v293 = vld [vmem:[%s1 + $0x6f8] sm:$0xff]
  %v294 = vld [vmem:[%s1 + $0x700] sm:$0xff]
  %v295 = vld [vmem:[%s1 + $0x708] sm:$0xff]
  %v296 = vld [vmem:[%s1 + $0x710] sm:$0xff]
  %v297 = vld [vmem:[%s1 + $0x718] sm:$0xff]
  %v298 = vld [vmem:[%s1 + $0x720] sm:$0xff]
  %v299 = vld [vmem:[%s1 + $0x728] sm:$0xff]
  %v300 = vld [vmem:[%s1 + $0x730] sm:$0xff]
  %v301 = vld [vmem:[%s1 + $0x738] sm:$0xff]
  %v302 = vld [vmem:[%s1 + $0x740] sm:$0xff]
  %v303 = vld [vmem:[%s1 + $0x748] sm:$0xff]
  %v304 = vld [vmem:[%s1 + $0x750] sm:$0xff]
  %v305 = vld [vmem:[%s1 + $0x758] sm:$0xff]
  %v306 = vld [vmem:[%s1 + $0x760] sm:$0xff]
  %v307 = vld [vmem:[%s1 + $0x768] sm:$0xff]
  %v308 = vld [vmem:[%s1 + $0x770] sm:$0xff]
  %v309 = vld [vmem:[%s1 + $0x778] sm:$0xff]
  %v310 = vld [vmem:[%s1 + $0x780] sm:$0xff]
  %v311 = vld [vmem:[%s1 + $0x788] sm:$0xff]
  %v312 = vld [vmem:[%s1 + $0x790] sm:$0xff]
  %v313 = vld [vmem:[%s1 + $0x798] sm:$0xff]
  %v314 = vld [vmem:[%s1 + $0x7a0] sm:$0xff]
  %v315 = vld [vmem:[%s1 + $0x7a8] sm:$0xff]
  %v316 = vld [vmem:[%s1 + $0x7b0] sm:$0xff]
  %v317 = vld [vmem:[%s1 + $0x7b8] sm:$0xff]
  %v318 = vld [vmem:[%s1 + $0x7c0] sm:$0xff]
  %v319 = vld [vmem:[%s1 + $0x7c8] sm:$0xff]
  %v320 = vld [vmem:[%s1 + $0x7d0] sm:$0xff]
  %v321 = vld [vmem:[%s1 + $0x7d8] sm:$0xff]
  %v322 = vld [vmem:[%s1 + $0x7e0] sm:$0xff]
  %v323 = vld [vmem:[%s1 + $0x7e8] sm:$0xff]
  %v324 = vld [vmem:[%s1 + $0x7f0] sm:$0xff]
  %v325 = vld [vmem:[%s1 + $0x7f8] sm:$0xff]
  %v326 = vld [vmem:[%s1 + $0x800] sm:$0xff]
  %v327 = vld [vmem:[%s1 + $0x808] sm:$0xff]
  %v328 = vld [vmem:[%s1 + $0x810] sm:$0xff]
  %v329 = vld [vmem:[%s1 + $0x818] sm:$0xff]
  %v330 = vld [vmem:[%s1 + $0x820] sm:$0xff]
  %v331 = vld [vmem:[%s1 + $0x828] sm:$0xff]
  %v332 = vld [vmem:[%s1 + $0x830] sm:$0xff]
  %v333 = vld [vmem:[%s1 + $0x838] sm:$0xff]
  %v334 = vld [vmem:[%s1 + $0x840] sm:$0xff]
  %v335 = vld [vmem:[%s1 + $0x848] sm:$0xff]
  %v336 = vld [vmem:[%s1 + $0x850] sm:$0xff]
  %v337 = vld [vmem:[%s1 + $0x858] sm:$0xff]
  %v338 = vld [vmem:[%s1 + $0x860] sm:$0xff]
  %v339 = vld [vmem:[%s1 + $0x868] sm:$0xff]
  %v340 = vld [vmem:[%s1 + $0x870] sm:$0xff]
  %v341 = vld [vmem:[%s1 + $0x878] sm:$0xff]
  %v342 = vld [vmem:[%s1 + $0x880] sm:$0xff]
  %v343 = vld [vmem:[%s1 + $0x888] sm:$0xff]
  %v344 = vld [vmem:[%s1 + $0x890] sm:$0xff]
  %v345 = vld [vmem:[%s1 + $0x898] sm:$0xff]
  %v346 = vld [vmem:[%s1 + $0x8a0] sm:$0xff]
  %v347 = vld [vmem:[%s1 + $0x8a8] sm:$0xff]
  %v348 = vld [vmem:[%s1 + $0x8b0] sm:$0xff]
  %v349 = vld [vmem:[%s1 + $0x8b8] sm:$0xff]
  %v350 = vld [vmem:[%s1 + $0x8c0] sm:$0xff]
  %v351 = vld [vmem:[%s1 + $0x8c8] sm:$0xff]
  %v352 = vld [vmem:[%s1 + $0x8d0] sm:$0xff]
  %v353 = vld [vmem:[%s1 + $0x8d8] sm:$0xff]
  %v354 = vld [vmem:[%s1 + $0x8e0] sm:$0xff]
  %v355 = vld [vmem:[%s1 + $0x8e8] sm:$0xff]
  %v356 = vld [vmem:[%s1 + $0x8f0] sm:$0xff]
  %v357 = vld [vmem:[%s1 + $0x8f8] sm:$0xff]
  %v358 = vld [vmem:[%s1 + $0x900] sm:$0xff]
  %v359 = vld [vmem:[%s1 + $0x908] sm:$0xff]
  %v360 = vld [vmem:[%s1 + $0x910] sm:$0xff]
  %v361 = vld [vmem:[%s1 + $0x918] sm:$0xff]
  %v362 = vld [vmem:[%s1 + $0x920] sm:$0xff]
  %v363 = vld [vmem:[%s1 + $0x928] sm:$0xff]
  %v364 = vld [vmem:[%s1 + $0x930] sm:$0xff]
  %v365 = vld [vmem:[%s1 + $0x938] sm:$0xff]
  %v366 = vld [vmem:[%s1 + $0x940] sm:$0xff]
  %v367 = vld [vmem:[%s1 + $0x948] sm:$0xff]
  %v368 = vld [vmem:[%s1 + $0x950] sm:$0xff]
  %v369 = vld [vmem:[%s1 + $0x958] sm:$0xff]
  %v370 = vld [vmem:[%s1 + $0x960] sm:$0xff]
  %v371 = vld [vmem:[%s1 + $0x968] sm:$0xff]
  %v372 = vld [vmem:[%s1 + $0x970] sm:$0xff]
  %v373 = vld [vmem:[%s1 + $0x978] sm:$0xff]
  %v374 = vld [vmem:[%s1 + $0x980] sm:$0xff]
  %v375 = vld [vmem:[%s1 + $0x988] sm:$0xff]
  %v376 = vld [vmem:[%s1 + $0x990] sm:$0xff]
  %v377 = vld [vmem:[%s1 + $0x998] sm:$0xff]
  %v378 = vld [vmem:[%s1 + $0x9a0] sm:$0xff]
  %v379 = vld [vmem:[%s1 + $0x9a8] sm:$0xff]
  %v380 = vld [vmem:[%s1 + $0x9b0] sm:$0xff]
  %v381 = vld [vmem:[%s1 + $0x9b8] sm:$0xff]
  %v382 = vld [vmem:[%s1 + $0x9c0] sm:$0xff]
  %v383 = vld [vmem:[%s1 + $0x9c8] sm:$0xff]
  %v384 = vld [vmem:[%s1 + $0x9d0] sm:$0xff]
  %v385 = vld [vmem:[%s1 + $0x9d8] sm:$0xff]
  %v386 = vld [vmem:[%s1 + $0x9e0] sm:$0xff]
  %v387 = vld [vmem:[%s1 + $0x9e8] sm:$0xff]
  %v388 = vld [vmem:[%s1 + $0x9f0] sm:$0xff]
  %v389 = vld [vmem:[%s1 + $0x9f8] sm:$0xff]
  %v390 = vld [vmem:[%s1 + $0xa00] sm:$0xff]
  %v391 = vld [vmem:[%s1 + $0xa08] sm:$0xff]
  %v392 = vld [vmem:[%s1 + $0xa10] sm:$0xff]
  %v393 = vld [vmem:[%s1 + $0xa18] sm:$0xff]
  %v394 = vld [vmem:[%s1 + $0xa20] sm:$0xff]
  %v395 = vld [vmem:[%s1 + $0xa28] sm:$0xff]
  %v396 = vld [vmem:[%s1 + $0xa30] sm:$0xff]
  %v397 = vld [vmem:[%s1 + $0xa38] sm:$0xff]
  %v398 = vld [vmem:[%s1 + $0xa40] sm:$0xff]
  %v399 = vld [vmem:[%s1 + $0xa48] sm:$0xff]
  %v400 = vld [vmem:[%s1 + $0xa50] sm:$0xff]
  %v401 = vld [vmem:[%s1 + $0xa58] sm:$0xff]
  %v402 = vld [vmem:[%s1 + $0xa60] sm:$0xff]
  %v403 = vld [vmem:[%s1 + $0xa68] sm:$0xff]
  %v404 = vld [vmem:[%s1 + $0xa70] sm:$0xff]
  %v405 = vld [vmem:[%s1 + $0xa78] sm:$0xff]
  %v406 = vld [vmem:[%s1 + $0xa80] sm:$0xff]
  %v407 = vld [vmem:[%s1 + $0xa88] sm:$0xff]
  %v408 = vld [vmem:[%s1 + $0xa90] sm:$0xff]
  %v409 = vld [vmem:[%s1 + $0xa98] sm:$0xff]
  %v410 = vld [vmem:[%s1 + $0xaa0] sm:$0xff]
  %v411 = vld [vmem:[%s1 + $0xaa8] sm:$0xff]
  %v412 = vld [vmem:[%s1 + $0xab0] sm:$0xff]
  %v413 = vld [vmem:[%s1 + $0xab8] sm:$0xff]
  %v414 = vld [vmem:[%s1 + $0xac0] sm:$0xff]
  %v415 = vld [vmem:[%s1 + $0xac8] sm:$0xff]
  %v416 = vld [vmem:[%s1 + $0xad0] sm:$0xff]
  %v417 = vld [vmem:[%s1 + $0xad8] sm:$0xff]
  %v418 = vld [vmem:[%s1 + $0xae0] sm:$0xff]
  %v419 = vld [vmem:[%s1 + $0xae8] sm:$0xff]
  %v420 = vld [vmem:[%s1 + $0xaf0] sm:$0xff]
  %v421 = vld [vmem:[%s1 + $0xaf8] sm:$0xff]
  %v422 = vld [vmem:[%s1 + $0xb00] sm:$0xff]
  %v423 = vld [vmem:[%s1 + $0xb08] sm:$0xff]
  %v424 = vld [vmem:[%s1 + $0xb10] sm:$0xff]
  %v425 = vld [vmem:[%s1 + $0xb18] sm:$0xff]
  %v426 = vld [vmem:[%s1 + $0xb20] sm:$0xff]
  %v427 = vld [vmem:[%s1 + $0xb28] sm:$0xff]
  %v428 = vld [vmem:[%s1 + $0xb30] sm:$0xff]
  %v429 = vld [vmem:[%s1 + $0xb38] sm:$0xff]
  %v430 = vld [vmem:[%s1 + $0xb40] sm:$0xff]
  %v431 = vld [vmem:[%s1 + $0xb48] sm:$0xff]
  %v432 = vld [vmem:[%s1 + $0xb50] sm:$0xff]
  %v433 = vld [vmem:[%s1 + $0xb58] sm:$0xff]
  %v434 = vld [vmem:[%s1 + $0xb60] sm:$0xff]
  %v435 = vld [vmem:[%s1 + $0xb68] sm:$0xff]
  %v436 = vld [vmem:[%s1 + $0xb70] sm:$0xff]
  %v437 = vld [vmem:[%s1 + $0xb78] sm:$0xff]
  %v438 = vld [vmem:[%s1 + $0xb80] sm:$0xff]
  %v439 = vld [vmem:[%s1 + $0xb88] sm:$0xff]
  %v440 = vld [vmem:[%s1 + $0xb90] sm:$0xff]
  %v441 = vld [vmem:[%s1 + $0xb98] sm:$0xff]
  %v442 = vld [vmem:[%s1 + $0xba0] sm:$0xff]
  %v443 = vld [vmem:[%s1 + $0xba8] sm:$0xff]
  %v444 = vld [vmem:[%s1 + $0xbb0] sm:$0xff]
  %v445 = vld [vmem:[%s1 + $0xbb8] sm:$0xff]
  %v446 = vld [vmem:[%s1 + $0xbc0] sm:$0xff]
  %v447 = vld [vmem:[%s1 + $0xbc8] sm:$0xff]
  %v448 = vld [vmem:[%s1 + $0xbd0] sm:$0xff]
  %v449 = vld [vmem:[%s1 + $0xbd8] sm:$0xff]
  %v450 = vld [vmem:[%s1 + $0xbe0] sm:$0xff]
  %v451 = vld [vmem:[%s1 + $0xbe8] sm:$0xff]
  %v452 = vld [vmem:[%s1 + $0xbf0] sm:$0xff]
  %v453 = vld [vmem:[%s1 + $0xbf8] sm:$0xff]
  %v454 = vld [vmem:[%s1 + $0xc00] sm:$0xff]
  %v455 = vld [vmem:[%s1 + $0xc08] sm:$0xff]
  %v456 = vld [vmem:[%s1 + $0xc10] sm:$0xff]
  %v457 = vld [vmem:[%s1 + $0xc18] sm:$0xff]
  %v458 = vld [vmem:[%s1 + $0xc20] sm:$0xff]
  %v459 = vld [vmem:[%s1 + $0xc28] sm:$0xff]
  %v460 = vld [vmem:[%s1 + $0xc30] sm:$0xff]
  %v461 = vld [vmem:[%s1 + $0xc38] sm:$0xff]
  %v462 = vld [vmem:[%s1 + $0xc40] sm:$0xff]
  %v463 = vld [vmem:[%s1 + $0xc48] sm:$0xff]
  %v464 = vld [vmem:[%s1 + $0xc50] sm:$0xff]
  %v465 = vld [vmem:[%s1 + $0xc58] sm:$0xff]
  %v466 = vld [vmem:[%s1 + $0xc60] sm:$0xff]
  %v467 = vld [vmem:[%s1 + $0xc68] sm:$0xff]
  %v468 = vld [vmem:[%s1 + $0xc70] sm:$0xff]
  %v469 = vld [vmem:[%s1 + $0xc78] sm:$0xff]
  %v470 = vld [vmem:[%s2] sm:$0x3]
  %v472 = vlaneseq
  %v473 = vshrl.u32 %v472, 7
  %v474 = vsub.s32 0, %v473
  %v475 = vrot.slane %v470, %v474
  %v476 = vlaneseq
  %v477 = vshrl.u32 %v476, 7
  %v478 = vsub.s32 1, %v477
  %v479 = vrot.slane %v470, %v478
  %v534 = vunpack.c.l.b16 %v18
  %v535 = vunpack.c.h.b16 %v18
  %v536 = vunpack.c.l.b16 %v19
  %v537 = vunpack.c.h.b16 %v19
  %v538 = vunpack.c.l.b16 %v20
  %v539 = vunpack.c.h.b16 %v20
  %v540 = vunpack.c.l.b16 %v21
  %v541 = vunpack.c.h.b16 %v21
  %v542 = vunpack.c.l.b16 %v22
  %v543 = vunpack.c.h.b16 %v22
  %v544 = vunpack.c.l.b16 %v23
  %v545 = vunpack.c.h.b16 %v23
  %v546 = vunpack.c.l.b16 %v24
  %v547 = vunpack.c.h.b16 %v24
  %v548 = vunpack.c.l.b16 %v25
  %v549 = vunpack.c.h.b16 %v25
  %v550 = vunpack.c.l.b16 %v26
  %v551 = vunpack.c.h.b16 %v26
  %v552 = vunpack.c.l.b16 %v27
  %v553 = vunpack.c.h.b16 %v27
  %v554 = vunpack.c.l.b16 %v28
  %v555 = vunpack.c.h.b16 %v28
  %v556 = vunpack.c.l.b16 %v29
  %v557 = vunpack.c.h.b16 %v29
  %v558 = vunpack.c.l.b16 %v30
  %v559 = vunpack.c.l.b16 %v31
  %v560 = vunpack.c.h.b16 %v31
  %v561 = vunpack.c.l.b16 %v32
  %v562 = vunpack.c.h.b16 %v32
  %v563 = vunpack.c.l.b16 %v33
  %v564 = vunpack.c.h.b16 %v33
  %v565 = vunpack.c.l.b16 %v34
  %v566 = vunpack.c.h.b16 %v34
  %v567 = vunpack.c.l.b16 %v35
  %v568 = vunpack.c.h.b16 %v35
  %v569 = vunpack.c.l.b16 %v36
  %v570 = vunpack.c.h.b16 %v36
  %v571 = vunpack.c.l.b16 %v37
  %v572 = vunpack.c.h.b16 %v37
  %v573 = vunpack.c.l.b16 %v38
  %v574 = vunpack.c.h.b16 %v38
  %v575 = vunpack.c.l.b16 %v39
  %v576 = vunpack.c.h.b16 %v39
  %v577 = vunpack.c.l.b16 %v40
  %v578 = vunpack.c.h.b16 %v40
  %v579 = vunpack.c.l.b16 %v41
  %v580 = vunpack.c.h.b16 %v41
  %v581 = vunpack.c.l.b16 %v42
  %v582 = vunpack.c.h.b16 %v42
  %v583 = vunpack.c.l.b16 %v43
  %v584 = vunpack.c.l.b16 %v44
  %v585 = vunpack.c.h.b16 %v44
  %v586 = vunpack.c.l.b16 %v45
  %v587 = vunpack.c.h.b16 %v45
  %v588 = vunpack.c.l.b16 %v46
  %v589 = vunpack.c.h.b16 %v46
  %v590 = vunpack.c.l.b16 %v47
  %v591 = vunpack.c.h.b16 %v47
  %v592 = vunpack.c.l.b16 %v48
  %v593 = vunpack.c.h.b16 %v48
  %v594 = vunpack.c.l.b16 %v49
  %v595 = vunpack.c.h.b16 %v49
  %v596 = vunpack.c.l.b16 %v50
  %v597 = vunpack.c.h.b16 %v50
  %v598 = vunpack.c.l.b16 %v51
  %v599 = vunpack.c.h.b16 %v51
  %v600 = vunpack.c.l.b16 %v52
  %v601 = vunpack.c.h.b16 %v52
  %v602 = vunpack.c.l.b16 %v53
  %v603 = vunpack.c.h.b16 %v53
  %v604 = vunpack.c.l.b16 %v54
  %v605 = vunpack.c.h.b16 %v54
  %v606 = vunpack.c.l.b16 %v55
  %v607 = vunpack.c.h.b16 %v55
  %v608 = vunpack.c.l.b16 %v56
  %v609 = vunpack.c.l.b16 %v57
  %v610 = vunpack.c.h.b16 %v57
  %v611 = vunpack.c.l.b16 %v58
  %v612 = vunpack.c.h.b16 %v58
  %v613 = vunpack.c.l.b16 %v59
  %v614 = vunpack.c.h.b16 %v59
  %v615 = vunpack.c.l.b16 %v60
  %v616 = vunpack.c.h.b16 %v60
  %v617 = vunpack.c.l.b16 %v61
  %v618 = vunpack.c.h.b16 %v61
  %v619 = vunpack.c.l.b16 %v62
  %v620 = vunpack.c.h.b16 %v62
  %v621 = vunpack.c.l.b16 %v63
  %v622 = vunpack.c.h.b16 %v63
  %v623 = vunpack.c.l.b16 %v64
  %v624 = vunpack.c.h.b16 %v64
  %v625 = vunpack.c.l.b16 %v65
  %v626 = vunpack.c.h.b16 %v65
  %v627 = vunpack.c.l.b16 %v66
  %v628 = vunpack.c.h.b16 %v66
  %v629 = vunpack.c.l.b16 %v67
  %v630 = vunpack.c.h.b16 %v67
  %v631 = vunpack.c.l.b16 %v68
  %v632 = vunpack.c.h.b16 %v68
  %v633 = vunpack.c.l.b16 %v69
  %v634 = vpack.c.b16 %v559, %v534
  %v635 = vpack.c.b16 %v560, %v535
  %v636 = vpack.c.b16 %v561, %v536
  %v637 = vpack.c.b16 %v562, %v537
  %v638 = vpack.c.b16 %v563, %v538
  %v639 = vpack.c.b16 %v564, %v539
  %v640 = vpack.c.b16 %v565, %v540
  %v641 = vpack.c.b16 %v566, %v541
  %v642 = vpack.c.b16 %v567, %v542
  %v643 = vpack.c.b16 %v568, %v543
  %v644 = vpack.c.b16 %v569, %v544
  %v645 = vpack.c.b16 %v570, %v545
  %v646 = vpack.c.b16 %v571, %v546
  %v647 = vpack.c.b16 %v572, %v547
  %v648 = vpack.c.b16 %v573, %v548
  %v649 = vpack.c.b16 %v574, %v549
  %v650 = vpack.c.b16 %v575, %v550
  %v651 = vpack.c.b16 %v576, %v551
  %v652 = vpack.c.b16 %v577, %v552
  %v653 = vpack.c.b16 %v578, %v553
  %v654 = vpack.c.b16 %v579, %v554
  %v655 = vpack.c.b16 %v580, %v555
  %v656 = vpack.c.b16 %v581, %v556
  %v657 = vpack.c.b16 %v582, %v557
  %v658 = vpack.c.b16 %v583, %v558
  %v659 = vpack.c.b16 %v609, %v584
  %v660 = vpack.c.b16 %v610, %v585
  %v661 = vpack.c.b16 %v611, %v586
  %v662 = vpack.c.b16 %v612, %v587
  %v663 = vpack.c.b16 %v613, %v588
  %v664 = vpack.c.b16 %v614, %v589
  %v665 = vpack.c.b16 %v615, %v590
  %v666 = vpack.c.b16 %v616, %v591
  %v667 = vpack.c.b16 %v617, %v592
  %v668 = vpack.c.b16 %v618, %v593
  %v669 = vpack.c.b16 %v619, %v594
  %v670 = vpack.c.b16 %v620, %v595
  %v671 = vpack.c.b16 %v621, %v596
  %v672 = vpack.c.b16 %v622, %v597
  %v673 = vpack.c.b16 %v623, %v598
  %v674 = vpack.c.b16 %v624, %v599
  %v675 = vpack.c.b16 %v625, %v600
  %v676 = vpack.c.b16 %v626, %v601
  %v677 = vpack.c.b16 %v627, %v602
  %v678 = vpack.c.b16 %v628, %v603
  %v679 = vpack.c.b16 %v629, %v604
  %v680 = vpack.c.b16 %v630, %v605
  %v681 = vpack.c.b16 %v631, %v606
  %v682 = vpack.c.b16 %v632, %v607
  %v683 = vpack.c.b16 %v633, %v608
  %v1134 = vunpack.c.l.b16 %v70
  %v1135 = vunpack.c.h.b16 %v70
  %v1136 = vunpack.c.l.b16 %v71
  %v1137 = vunpack.c.h.b16 %v71
  %v1138 = vunpack.c.l.b16 %v72
  %v1139 = vunpack.c.h.b16 %v72
  %v1140 = vunpack.c.l.b16 %v73
  %v1141 = vunpack.c.h.b16 %v73
  %v1142 = vunpack.c.l.b16 %v74
  %v1143 = vunpack.c.h.b16 %v74
  %v1144 = vunpack.c.l.b16 %v75
  %v1145 = vunpack.c.h.b16 %v75
  %v1146 = vunpack.c.l.b16 %v76
  %v1147 = vunpack.c.h.b16 %v76
  %v1148 = vunpack.c.l.b16 %v77
  %v1149 = vunpack.c.h.b16 %v77
  %v1150 = vunpack.c.l.b16 %v78
  %v1151 = vunpack.c.h.b16 %v78
  %v1152 = vunpack.c.l.b16 %v79
  %v1153 = vunpack.c.h.b16 %v79
  %v1154 = vunpack.c.l.b16 %v80
  %v1155 = vunpack.c.h.b16 %v80
  %v1156 = vunpack.c.l.b16 %v81
  %v1157 = vunpack.c.h.b16 %v81
  %v1158 = vunpack.c.l.b16 %v82
  %v1159 = vunpack.c.h.b16 %v82
  %v1160 = vunpack.c.l.b16 %v83
  %v1161 = vunpack.c.h.b16 %v83
  %v1162 = vunpack.c.l.b16 %v84
  %v1163 = vunpack.c.h.b16 %v84
  %v1164 = vunpack.c.l.b16 %v85
  %v1165 = vunpack.c.h.b16 %v85
  %v1166 = vunpack.c.l.b16 %v86
  %v1167 = vunpack.c.h.b16 %v86
  %v1168 = vunpack.c.l.b16 %v87
  %v1169 = vunpack.c.h.b16 %v87
  %v1170 = vunpack.c.l.b16 %v88
  %v1171 = vunpack.c.h.b16 %v88
  %v1172 = vunpack.c.l.b16 %v89
  %v1173 = vunpack.c.h.b16 %v89
  %v1174 = vunpack.c.l.b16 %v90
  %v1175 = vunpack.c.h.b16 %v90
  %v1176 = vunpack.c.l.b16 %v91
  %v1177 = vunpack.c.h.b16 %v91
  %v1178 = vunpack.c.l.b16 %v92
  %v1179 = vunpack.c.h.b16 %v92
  %v1180 = vunpack.c.l.b16 %v93
  %v1181 = vunpack.c.h.b16 %v93
  %v1182 = vunpack.c.l.b16 %v94
  %v1183 = vunpack.c.h.b16 %v94
  %v1184 = vunpack.c.l.b16 %v95
  %v1185 = vunpack.c.h.b16 %v95
  %v1186 = vunpack.c.l.b16 %v96
  %v1187 = vunpack.c.h.b16 %v96
  %v1188 = vunpack.c.l.b16 %v97
  %v1189 = vunpack.c.h.b16 %v97
  %v1190 = vunpack.c.l.b16 %v98
  %v1191 = vunpack.c.h.b16 %v98
  %v1192 = vunpack.c.l.b16 %v99
  %v1193 = vunpack.c.h.b16 %v99
  %v1194 = vunpack.c.l.b16 %v100
  %v1195 = vunpack.c.h.b16 %v100
  %v1196 = vunpack.c.l.b16 %v101
  %v1197 = vunpack.c.h.b16 %v101
  %v1198 = vunpack.c.l.b16 %v102
  %v1199 = vunpack.c.h.b16 %v102
  %v1200 = vunpack.c.l.b16 %v103
  %v1201 = vunpack.c.h.b16 %v103
  %v1202 = vunpack.c.l.b16 %v104
  %v1203 = vunpack.c.h.b16 %v104
  %v1204 = vunpack.c.l.b16 %v105
  %v1205 = vunpack.c.h.b16 %v105
  %v1206 = vunpack.c.l.b16 %v106
  %v1207 = vunpack.c.h.b16 %v106
  %v1208 = vunpack.c.l.b16 %v107
  %v1209 = vunpack.c.h.b16 %v107
  %v1210 = vunpack.c.l.b16 %v108
  %v1211 = vunpack.c.h.b16 %v108
  %v1212 = vunpack.c.l.b16 %v109
  %v1213 = vunpack.c.h.b16 %v109
  %v1214 = vunpack.c.l.b16 %v110
  %v1215 = vunpack.c.h.b16 %v110
  %v1216 = vunpack.c.l.b16 %v111
  %v1217 = vunpack.c.h.b16 %v111
  %v1218 = vunpack.c.l.b16 %v112
  %v1219 = vunpack.c.h.b16 %v112
  %v1220 = vunpack.c.l.b16 %v113
  %v1221 = vunpack.c.h.b16 %v113
  %v1222 = vunpack.c.l.b16 %v114
  %v1223 = vunpack.c.h.b16 %v114
  %v1224 = vunpack.c.l.b16 %v115
  %v1225 = vunpack.c.h.b16 %v115
  %v1226 = vunpack.c.l.b16 %v116
  %v1227 = vunpack.c.h.b16 %v116
  %v1228 = vunpack.c.l.b16 %v117
  %v1229 = vunpack.c.h.b16 %v117
  %v1230 = vunpack.c.l.b16 %v118
  %v1231 = vunpack.c.h.b16 %v118
  %v1232 = vunpack.c.l.b16 %v119
  %v1233 = vunpack.c.h.b16 %v119
  %v1234 = vunpack.c.l.b16 %v120
  %v1235 = vunpack.c.h.b16 %v120
  %v1236 = vunpack.c.l.b16 %v121
  %v1237 = vunpack.c.h.b16 %v121
  %v1238 = vunpack.c.l.b16 %v122
  %v1239 = vunpack.c.h.b16 %v122
  %v1240 = vunpack.c.l.b16 %v123
  %v1241 = vunpack.c.h.b16 %v123
  %v1242 = vunpack.c.l.b16 %v124
  %v1243 = vunpack.c.h.b16 %v124
  %v1244 = vunpack.c.l.b16 %v125
  %v1245 = vunpack.c.h.b16 %v125
  %v1246 = vunpack.c.l.b16 %v126
  %v1247 = vunpack.c.h.b16 %v126
  %v1248 = vunpack.c.l.b16 %v127
  %v1249 = vunpack.c.h.b16 %v127
  %v1250 = vunpack.c.l.b16 %v128
  %v1251 = vunpack.c.h.b16 %v128
  %v1252 = vunpack.c.l.b16 %v129
  %v1253 = vunpack.c.h.b16 %v129
  %v1254 = vunpack.c.l.b16 %v130
  %v1255 = vunpack.c.h.b16 %v130
  %v1256 = vunpack.c.l.b16 %v131
  %v1257 = vunpack.c.h.b16 %v131
  %v1258 = vunpack.c.l.b16 %v132
  %v1259 = vunpack.c.h.b16 %v132
  %v1260 = vunpack.c.l.b16 %v133
  %v1261 = vunpack.c.h.b16 %v133
  %v1262 = vunpack.c.l.b16 %v134
  %v1263 = vunpack.c.h.b16 %v134
  %v1264 = vunpack.c.l.b16 %v135
  %v1265 = vunpack.c.h.b16 %v135
  %v1266 = vunpack.c.l.b16 %v136
  %v1267 = vunpack.c.h.b16 %v136
  %v1268 = vunpack.c.l.b16 %v137
  %v1269 = vunpack.c.h.b16 %v137
  %v1270 = vunpack.c.l.b16 %v138
  %v1271 = vunpack.c.h.b16 %v138
  %v1272 = vunpack.c.l.b16 %v139
  %v1273 = vunpack.c.h.b16 %v139
  %v1274 = vunpack.c.l.b16 %v140
  %v1275 = vunpack.c.h.b16 %v140
  %v1276 = vunpack.c.l.b16 %v141
  %v1277 = vunpack.c.h.b16 %v141
  %v1278 = vunpack.c.l.b16 %v142
  %v1279 = vunpack.c.h.b16 %v142
  %v1280 = vunpack.c.l.b16 %v143
  %v1281 = vunpack.c.h.b16 %v143
  %v1282 = vunpack.c.l.b16 %v144
  %v1283 = vunpack.c.h.b16 %v144
  %v1284 = vunpack.c.l.b16 %v145
  %v1285 = vunpack.c.h.b16 %v145
  %v1286 = vunpack.c.l.b16 %v146
  %v1287 = vunpack.c.h.b16 %v146
  %v1288 = vunpack.c.l.b16 %v147
  %v1289 = vunpack.c.h.b16 %v147
  %v1290 = vunpack.c.l.b16 %v148
  %v1291 = vunpack.c.h.b16 %v148
  %v1292 = vunpack.c.l.b16 %v149
  %v1293 = vunpack.c.h.b16 %v149
  %v1294 = vunpack.c.l.b16 %v150
  %v1295 = vunpack.c.h.b16 %v150
  %v1296 = vunpack.c.l.b16 %v151
  %v1297 = vunpack.c.h.b16 %v151
  %v1298 = vunpack.c.l.b16 %v152
  %v1299 = vunpack.c.h.b16 %v152
  %v1300 = vunpack.c.l.b16 %v153
  %v1301 = vunpack.c.h.b16 %v153
  %v1302 = vunpack.c.l.b16 %v154
  %v1303 = vunpack.c.h.b16 %v154
  %v1304 = vunpack.c.l.b16 %v155
  %v1305 = vunpack.c.h.b16 %v155
  %v1306 = vunpack.c.l.b16 %v156
  %v1307 = vunpack.c.h.b16 %v156
  %v1308 = vunpack.c.l.b16 %v157
  %v1309 = vunpack.c.h.b16 %v157
  %v1310 = vunpack.c.l.b16 %v158
  %v1311 = vunpack.c.h.b16 %v158
  %v1312 = vunpack.c.l.b16 %v159
  %v1313 = vunpack.c.h.b16 %v159
  %v1314 = vunpack.c.l.b16 %v160
  %v1315 = vunpack.c.h.b16 %v160
  %v1316 = vunpack.c.l.b16 %v161
  %v1317 = vunpack.c.h.b16 %v161
  %v1318 = vunpack.c.l.b16 %v162
  %v1319 = vunpack.c.h.b16 %v162
  %v1320 = vunpack.c.l.b16 %v163
  %v1321 = vunpack.c.h.b16 %v163
  %v1322 = vunpack.c.l.b16 %v164
  %v1323 = vunpack.c.h.b16 %v164
  %v1324 = vunpack.c.l.b16 %v165
  %v1325 = vunpack.c.h.b16 %v165
  %v1326 = vunpack.c.l.b16 %v166
  %v1327 = vunpack.c.h.b16 %v166
  %v1328 = vunpack.c.l.b16 %v167
  %v1329 = vunpack.c.h.b16 %v167
  %v1330 = vunpack.c.l.b16 %v168
  %v1331 = vunpack.c.h.b16 %v168
  %v1332 = vunpack.c.l.b16 %v169
  %v1333 = vunpack.c.h.b16 %v169
  %v1334 = vunpack.c.l.b16 %v170
  %v1335 = vunpack.c.h.b16 %v170
  %v1336 = vunpack.c.l.b16 %v171
  %v1337 = vunpack.c.h.b16 %v171
  %v1338 = vunpack.c.l.b16 %v172
  %v1339 = vunpack.c.h.b16 %v172
  %v1340 = vunpack.c.l.b16 %v173
  %v1341 = vunpack.c.h.b16 %v173
  %v1342 = vunpack.c.l.b16 %v174
  %v1343 = vunpack.c.h.b16 %v174
  %v1344 = vunpack.c.l.b16 %v175
  %v1345 = vunpack.c.h.b16 %v175
  %v1346 = vunpack.c.l.b16 %v176
  %v1347 = vunpack.c.h.b16 %v176
  %v1348 = vunpack.c.l.b16 %v177
  %v1349 = vunpack.c.h.b16 %v177
  %v1350 = vunpack.c.l.b16 %v178
  %v1351 = vunpack.c.h.b16 %v178
  %v1352 = vunpack.c.l.b16 %v179
  %v1353 = vunpack.c.h.b16 %v179
  %v1354 = vunpack.c.l.b16 %v180
  %v1355 = vunpack.c.h.b16 %v180
  %v1356 = vunpack.c.l.b16 %v181
  %v1357 = vunpack.c.h.b16 %v181
  %v1358 = vunpack.c.l.b16 %v182
  %v1359 = vunpack.c.h.b16 %v182
  %v1360 = vunpack.c.l.b16 %v183
  %v1361 = vunpack.c.h.b16 %v183
  %v1362 = vunpack.c.l.b16 %v184
  %v1363 = vunpack.c.h.b16 %v184
  %v1364 = vunpack.c.l.b16 %v185
  %v1365 = vunpack.c.h.b16 %v185
  %v1366 = vunpack.c.l.b16 %v186
  %v1367 = vunpack.c.h.b16 %v186
  %v1368 = vunpack.c.l.b16 %v187
  %v1369 = vunpack.c.h.b16 %v187
  %v1370 = vunpack.c.l.b16 %v188
  %v1371 = vunpack.c.h.b16 %v188
  %v1372 = vunpack.c.l.b16 %v189
  %v1373 = vunpack.c.h.b16 %v189
  %v1374 = vunpack.c.l.b16 %v190
  %v1375 = vunpack.c.h.b16 %v190
  %v1376 = vunpack.c.l.b16 %v191
  %v1377 = vunpack.c.h.b16 %v191
  %v1378 = vunpack.c.l.b16 %v192
  %v1379 = vunpack.c.h.b16 %v192
  %v1380 = vunpack.c.l.b16 %v193
  %v1381 = vunpack.c.h.b16 %v193
  %v1382 = vunpack.c.l.b16 %v194
  %v1383 = vunpack.c.h.b16 %v194
  %v1384 = vunpack.c.l.b16 %v195
  %v1385 = vunpack.c.h.b16 %v195
  %v1386 = vunpack.c.l.b16 %v196
  %v1387 = vunpack.c.h.b16 %v196
  %v1388 = vunpack.c.l.b16 %v197
  %v1389 = vunpack.c.h.b16 %v197
  %v1390 = vunpack.c.l.b16 %v198
  %v1391 = vunpack.c.h.b16 %v198
  %v1392 = vunpack.c.l.b16 %v199
  %v1393 = vunpack.c.h.b16 %v199
  %v1394 = vunpack.c.l.b16 %v200
  %v1395 = vunpack.c.h.b16 %v200
  %v1396 = vunpack.c.l.b16 %v201
  %v1397 = vunpack.c.h.b16 %v201
  %v1398 = vunpack.c.l.b16 %v202
  %v1399 = vunpack.c.h.b16 %v202
  %v1400 = vunpack.c.l.b16 %v203
  %v1401 = vunpack.c.h.b16 %v203
  %v1402 = vunpack.c.l.b16 %v204
  %v1403 = vunpack.c.h.b16 %v204
  %v1404 = vunpack.c.l.b16 %v205
  %v1405 = vunpack.c.h.b16 %v205
  %v1406 = vunpack.c.l.b16 %v206
  %v1407 = vunpack.c.h.b16 %v206
  %v1408 = vunpack.c.l.b16 %v207
  %v1409 = vunpack.c.h.b16 %v207
  %v1410 = vunpack.c.l.b16 %v208
  %v1411 = vunpack.c.h.b16 %v208
  %v1412 = vunpack.c.l.b16 %v209
  %v1413 = vunpack.c.h.b16 %v209
  %v1414 = vunpack.c.l.b16 %v210
  %v1415 = vunpack.c.h.b16 %v210
  %v1416 = vunpack.c.l.b16 %v211
  %v1417 = vunpack.c.h.b16 %v211
  %v1418 = vunpack.c.l.b16 %v212
  %v1419 = vunpack.c.h.b16 %v212
  %v1420 = vunpack.c.l.b16 %v213
  %v1421 = vunpack.c.h.b16 %v213
  %v1422 = vunpack.c.l.b16 %v214
  %v1423 = vunpack.c.h.b16 %v214
  %v1424 = vunpack.c.l.b16 %v215
  %v1425 = vunpack.c.h.b16 %v215
  %v1426 = vunpack.c.l.b16 %v216
  %v1427 = vunpack.c.h.b16 %v216
  %v1428 = vunpack.c.l.b16 %v217
  %v1429 = vunpack.c.h.b16 %v217
  %v1430 = vunpack.c.l.b16 %v218
  %v1431 = vunpack.c.h.b16 %v218
  %v1432 = vunpack.c.l.b16 %v219
  %v1433 = vunpack.c.h.b16 %v219
  %v1434 = vunpack.c.l.b16 %v220
  %v1435 = vunpack.c.h.b16 %v220
  %v1436 = vunpack.c.l.b16 %v221
  %v1437 = vunpack.c.h.b16 %v221
  %v1438 = vunpack.c.l.b16 %v222
  %v1439 = vunpack.c.h.b16 %v222
  %v1440 = vunpack.c.l.b16 %v223
  %v1441 = vunpack.c.h.b16 %v223
  %v1442 = vunpack.c.l.b16 %v224
  %v1443 = vunpack.c.h.b16 %v224
  %v1444 = vunpack.c.l.b16 %v225
  %v1445 = vunpack.c.h.b16 %v225
  %v1446 = vunpack.c.l.b16 %v226
  %v1447 = vunpack.c.h.b16 %v226
  %v1448 = vunpack.c.l.b16 %v227
  %v1449 = vunpack.c.h.b16 %v227
  %v1450 = vunpack.c.l.b16 %v228
  %v1451 = vunpack.c.h.b16 %v228
  %v1452 = vunpack.c.l.b16 %v229
  %v1453 = vunpack.c.h.b16 %v229
  %v1454 = vunpack.c.l.b16 %v230
  %v1455 = vunpack.c.h.b16 %v230
  %v1456 = vunpack.c.l.b16 %v231
  %v1457 = vunpack.c.h.b16 %v231
  %v1458 = vunpack.c.l.b16 %v232
  %v1459 = vunpack.c.h.b16 %v232
  %v1460 = vunpack.c.l.b16 %v233
  %v1461 = vunpack.c.h.b16 %v233
  %v1462 = vunpack.c.l.b16 %v234
  %v1463 = vunpack.c.h.b16 %v234
  %v1464 = vunpack.c.l.b16 %v235
  %v1465 = vunpack.c.h.b16 %v235
  %v1466 = vunpack.c.l.b16 %v236
  %v1467 = vunpack.c.h.b16 %v236
  %v1468 = vunpack.c.l.b16 %v237
  %v1469 = vunpack.c.h.b16 %v237
  %v1470 = vunpack.c.l.b16 %v238
  %v1471 = vunpack.c.h.b16 %v238
  %v1472 = vunpack.c.l.b16 %v239
  %v1473 = vunpack.c.h.b16 %v239
  %v1474 = vunpack.c.l.b16 %v240
  %v1475 = vunpack.c.h.b16 %v240
  %v1476 = vunpack.c.l.b16 %v241
  %v1477 = vunpack.c.h.b16 %v241
  %v1478 = vunpack.c.l.b16 %v242
  %v1479 = vunpack.c.h.b16 %v242
  %v1480 = vunpack.c.l.b16 %v243
  %v1481 = vunpack.c.h.b16 %v243
  %v1482 = vunpack.c.l.b16 %v244
  %v1483 = vunpack.c.h.b16 %v244
  %v1484 = vunpack.c.l.b16 %v245
  %v1485 = vunpack.c.h.b16 %v245
  %v1486 = vunpack.c.l.b16 %v246
  %v1487 = vunpack.c.h.b16 %v246
  %v1488 = vunpack.c.l.b16 %v247
  %v1489 = vunpack.c.h.b16 %v247
  %v1490 = vunpack.c.l.b16 %v248
  %v1491 = vunpack.c.h.b16 %v248
  %v1492 = vunpack.c.l.b16 %v249
  %v1493 = vunpack.c.h.b16 %v249
  %v1494 = vunpack.c.l.b16 %v250
  %v1495 = vunpack.c.h.b16 %v250
  %v1496 = vunpack.c.l.b16 %v251
  %v1497 = vunpack.c.h.b16 %v251
  %v1498 = vunpack.c.l.b16 %v252
  %v1499 = vunpack.c.h.b16 %v252
  %v1500 = vunpack.c.l.b16 %v253
  %v1501 = vunpack.c.h.b16 %v253
  %v1502 = vunpack.c.l.b16 %v254
  %v1503 = vunpack.c.h.b16 %v254
  %v1504 = vunpack.c.l.b16 %v255
  %v1505 = vunpack.c.h.b16 %v255
  %v1506 = vunpack.c.l.b16 %v256
  %v1507 = vunpack.c.h.b16 %v256
  %v1508 = vunpack.c.l.b16 %v257
  %v1509 = vunpack.c.h.b16 %v257
  %v1510 = vunpack.c.l.b16 %v258
  %v1511 = vunpack.c.h.b16 %v258
  %v1512 = vunpack.c.l.b16 %v259
  %v1513 = vunpack.c.h.b16 %v259
  %v1514 = vunpack.c.l.b16 %v260
  %v1515 = vunpack.c.h.b16 %v260
  %v1516 = vunpack.c.l.b16 %v261
  %v1517 = vunpack.c.h.b16 %v261
  %v1518 = vunpack.c.l.b16 %v262
  %v1519 = vunpack.c.h.b16 %v262
  %v1520 = vunpack.c.l.b16 %v263
  %v1521 = vunpack.c.h.b16 %v263
  %v1522 = vunpack.c.l.b16 %v264
  %v1523 = vunpack.c.h.b16 %v264
  %v1524 = vunpack.c.l.b16 %v265
  %v1525 = vunpack.c.h.b16 %v265
  %v1526 = vunpack.c.l.b16 %v266
  %v1527 = vunpack.c.h.b16 %v266
  %v1528 = vunpack.c.l.b16 %v267
  %v1529 = vunpack.c.h.b16 %v267
  %v1530 = vunpack.c.l.b16 %v268
  %v1531 = vunpack.c.h.b16 %v268
  %v1532 = vunpack.c.l.b16 %v269
  %v1533 = vunpack.c.h.b16 %v269
  %v1534 = vunpack.c.l.b16 %v270
  %v1535 = vunpack.c.h.b16 %v270
  %v1536 = vunpack.c.l.b16 %v271
  %v1537 = vunpack.c.h.b16 %v271
  %v1538 = vunpack.c.l.b16 %v272
  %v1539 = vunpack.c.h.b16 %v272
  %v1540 = vunpack.c.l.b16 %v273
  %v1541 = vunpack.c.h.b16 %v273
  %v1542 = vunpack.c.l.b16 %v274
  %v1543 = vunpack.c.h.b16 %v274
  %v1544 = vunpack.c.l.b16 %v275
  %v1545 = vunpack.c.h.b16 %v275
  %v1546 = vunpack.c.l.b16 %v276
  %v1547 = vunpack.c.h.b16 %v276
  %v1548 = vunpack.c.l.b16 %v277
  %v1549 = vunpack.c.h.b16 %v277
  %v1550 = vunpack.c.l.b16 %v278
  %v1551 = vunpack.c.h.b16 %v278
  %v1552 = vunpack.c.l.b16 %v279
  %v1553 = vunpack.c.h.b16 %v279
  %v1554 = vunpack.c.l.b16 %v280
  %v1555 = vunpack.c.h.b16 %v280
  %v1556 = vunpack.c.l.b16 %v281
  %v1557 = vunpack.c.h.b16 %v281
  %v1558 = vunpack.c.l.b16 %v282
  %v1559 = vunpack.c.h.b16 %v282
  %v1560 = vunpack.c.l.b16 %v283
  %v1561 = vunpack.c.h.b16 %v283
  %v1562 = vunpack.c.l.b16 %v284
  %v1563 = vunpack.c.h.b16 %v284
  %v1564 = vunpack.c.l.b16 %v285
  %v1565 = vunpack.c.h.b16 %v285
  %v1566 = vunpack.c.l.b16 %v286
  %v1567 = vunpack.c.h.b16 %v286
  %v1568 = vunpack.c.l.b16 %v287
  %v1569 = vunpack.c.h.b16 %v287
  %v1570 = vunpack.c.l.b16 %v288
  %v1571 = vunpack.c.h.b16 %v288
  %v1572 = vunpack.c.l.b16 %v289
  %v1573 = vunpack.c.h.b16 %v289
  %v1574 = vunpack.c.l.b16 %v290
  %v1575 = vunpack.c.h.b16 %v290
  %v1576 = vunpack.c.l.b16 %v291
  %v1577 = vunpack.c.h.b16 %v291
  %v1578 = vunpack.c.l.b16 %v292
  %v1579 = vunpack.c.h.b16 %v292
  %v1580 = vunpack.c.l.b16 %v293
  %v1581 = vunpack.c.h.b16 %v293
  %v1582 = vunpack.c.l.b16 %v294
  %v1583 = vunpack.c.h.b16 %v294
  %v1584 = vunpack.c.l.b16 %v295
  %v1585 = vunpack.c.h.b16 %v295
  %v1586 = vunpack.c.l.b16 %v296
  %v1587 = vunpack.c.h.b16 %v296
  %v1588 = vunpack.c.l.b16 %v297
  %v1589 = vunpack.c.h.b16 %v297
  %v1590 = vunpack.c.l.b16 %v298
  %v1591 = vunpack.c.h.b16 %v298
  %v1592 = vunpack.c.l.b16 %v299
  %v1593 = vunpack.c.h.b16 %v299
  %v1594 = vunpack.c.l.b16 %v300
  %v1595 = vunpack.c.h.b16 %v300
  %v1596 = vunpack.c.l.b16 %v301
  %v1597 = vunpack.c.h.b16 %v301
  %v1598 = vunpack.c.l.b16 %v302
  %v1599 = vunpack.c.h.b16 %v302
  %v1600 = vunpack.c.l.b16 %v303
  %v1601 = vunpack.c.h.b16 %v303
  %v1602 = vunpack.c.l.b16 %v304
  %v1603 = vunpack.c.h.b16 %v304
  %v1604 = vunpack.c.l.b16 %v305
  %v1605 = vunpack.c.h.b16 %v305
  %v1606 = vunpack.c.l.b16 %v306
  %v1607 = vunpack.c.h.b16 %v306
  %v1608 = vunpack.c.l.b16 %v307
  %v1609 = vunpack.c.h.b16 %v307
  %v1610 = vunpack.c.l.b16 %v308
  %v1611 = vunpack.c.h.b16 %v308
  %v1612 = vunpack.c.l.b16 %v309
  %v1613 = vunpack.c.h.b16 %v309
  %v1614 = vunpack.c.l.b16 %v310
  %v1615 = vunpack.c.h.b16 %v310
  %v1616 = vunpack.c.l.b16 %v311
  %v1617 = vunpack.c.h.b16 %v311
  %v1618 = vunpack.c.l.b16 %v312
  %v1619 = vunpack.c.h.b16 %v312
  %v1620 = vunpack.c.l.b16 %v313
  %v1621 = vunpack.c.h.b16 %v313
  %v1622 = vunpack.c.l.b16 %v314
  %v1623 = vunpack.c.h.b16 %v314
  %v1624 = vunpack.c.l.b16 %v315
  %v1625 = vunpack.c.h.b16 %v315
  %v1626 = vunpack.c.l.b16 %v316
  %v1627 = vunpack.c.h.b16 %v316
  %v1628 = vunpack.c.l.b16 %v317
  %v1629 = vunpack.c.h.b16 %v317
  %v1630 = vunpack.c.l.b16 %v318
  %v1631 = vunpack.c.h.b16 %v318
  %v1632 = vunpack.c.l.b16 %v319
  %v1633 = vunpack.c.h.b16 %v319
  %v1634 = vunpack.c.l.b16 %v320
  %v1635 = vunpack.c.h.b16 %v320
  %v1636 = vunpack.c.l.b16 %v321
  %v1637 = vunpack.c.h.b16 %v321
  %v1638 = vunpack.c.l.b16 %v322
  %v1639 = vunpack.c.h.b16 %v322
  %v1640 = vunpack.c.l.b16 %v323
  %v1641 = vunpack.c.h.b16 %v323
  %v1642 = vunpack.c.l.b16 %v324
  %v1643 = vunpack.c.h.b16 %v324
  %v1644 = vunpack.c.l.b16 %v325
  %v1645 = vunpack.c.h.b16 %v325
  %v1646 = vunpack.c.l.b16 %v326
  %v1647 = vunpack.c.h.b16 %v326
  %v1648 = vunpack.c.l.b16 %v327
  %v1649 = vunpack.c.h.b16 %v327
  %v1650 = vunpack.c.l.b16 %v328
  %v1651 = vunpack.c.h.b16 %v328
  %v1652 = vunpack.c.l.b16 %v329
  %v1653 = vunpack.c.h.b16 %v329
  %v1654 = vunpack.c.l.b16 %v330
  %v1655 = vunpack.c.h.b16 %v330
  %v1656 = vunpack.c.l.b16 %v331
  %v1657 = vunpack.c.h.b16 %v331
  %v1658 = vunpack.c.l.b16 %v332
  %v1659 = vunpack.c.h.b16 %v332
  %v1660 = vunpack.c.l.b16 %v333
  %v1661 = vunpack.c.h.b16 %v333
  %v1662 = vunpack.c.l.b16 %v334
  %v1663 = vunpack.c.h.b16 %v334
  %v1664 = vunpack.c.l.b16 %v335
  %v1665 = vunpack.c.h.b16 %v335
  %v1666 = vunpack.c.l.b16 %v336
  %v1667 = vunpack.c.h.b16 %v336
  %v1668 = vunpack.c.l.b16 %v337
  %v1669 = vunpack.c.h.b16 %v337
  %v1670 = vunpack.c.l.b16 %v338
  %v1671 = vunpack.c.h.b16 %v338
  %v1672 = vunpack.c.l.b16 %v339
  %v1673 = vunpack.c.h.b16 %v339
  %v1674 = vunpack.c.l.b16 %v340
  %v1675 = vunpack.c.h.b16 %v340
  %v1676 = vunpack.c.l.b16 %v341
  %v1677 = vunpack.c.h.b16 %v341
  %v1678 = vunpack.c.l.b16 %v342
  %v1679 = vunpack.c.h.b16 %v342
  %v1680 = vunpack.c.l.b16 %v343
  %v1681 = vunpack.c.h.b16 %v343
  %v1682 = vunpack.c.l.b16 %v344
  %v1683 = vunpack.c.h.b16 %v344
  %v1684 = vunpack.c.l.b16 %v345
  %v1685 = vunpack.c.h.b16 %v345
  %v1686 = vunpack.c.l.b16 %v346
  %v1687 = vunpack.c.h.b16 %v346
  %v1688 = vunpack.c.l.b16 %v347
  %v1689 = vunpack.c.h.b16 %v347
  %v1690 = vunpack.c.l.b16 %v348
  %v1691 = vunpack.c.h.b16 %v348
  %v1692 = vunpack.c.l.b16 %v349
  %v1693 = vunpack.c.h.b16 %v349
  %v1694 = vunpack.c.l.b16 %v350
  %v1695 = vunpack.c.h.b16 %v350
  %v1696 = vunpack.c.l.b16 %v351
  %v1697 = vunpack.c.h.b16 %v351
  %v1698 = vunpack.c.l.b16 %v352
  %v1699 = vunpack.c.h.b16 %v352
  %v1700 = vunpack.c.l.b16 %v353
  %v1701 = vunpack.c.h.b16 %v353
  %v1702 = vunpack.c.l.b16 %v354
  %v1703 = vunpack.c.h.b16 %v354
  %v1704 = vunpack.c.l.b16 %v355
  %v1705 = vunpack.c.h.b16 %v355
  %v1706 = vunpack.c.l.b16 %v356
  %v1707 = vunpack.c.h.b16 %v356
  %v1708 = vunpack.c.l.b16 %v357
  %v1709 = vunpack.c.h.b16 %v357
  %v1710 = vunpack.c.l.b16 %v358
  %v1711 = vunpack.c.h.b16 %v358
  %v1712 = vunpack.c.l.b16 %v359
  %v1713 = vunpack.c.h.b16 %v359
  %v1714 = vunpack.c.l.b16 %v360
  %v1715 = vunpack.c.h.b16 %v360
  %v1716 = vunpack.c.l.b16 %v361
  %v1717 = vunpack.c.h.b16 %v361
  %v1718 = vunpack.c.l.b16 %v362
  %v1719 = vunpack.c.h.b16 %v362
  %v1720 = vunpack.c.l.b16 %v363
  %v1721 = vunpack.c.h.b16 %v363
  %v1722 = vunpack.c.l.b16 %v364
  %v1723 = vunpack.c.h.b16 %v364
  %v1724 = vunpack.c.l.b16 %v365
  %v1725 = vunpack.c.h.b16 %v365
  %v1726 = vunpack.c.l.b16 %v366
  %v1727 = vunpack.c.h.b16 %v366
  %v1728 = vunpack.c.l.b16 %v367
  %v1729 = vunpack.c.h.b16 %v367
  %v1730 = vunpack.c.l.b16 %v368
  %v1731 = vunpack.c.h.b16 %v368
  %v1732 = vunpack.c.l.b16 %v369
  %v1733 = vunpack.c.h.b16 %v369
  %v1734 = vunpack.c.l.b16 %v370
  %v1735 = vunpack.c.h.b16 %v370
  %v1736 = vunpack.c.l.b16 %v371
  %v1737 = vunpack.c.h.b16 %v371
  %v1738 = vunpack.c.l.b16 %v372
  %v1739 = vunpack.c.h.b16 %v372
  %v1740 = vunpack.c.l.b16 %v373
  %v1741 = vunpack.c.h.b16 %v373
  %v1742 = vunpack.c.l.b16 %v374
  %v1743 = vunpack.c.h.b16 %v374
  %v1744 = vunpack.c.l.b16 %v375
  %v1745 = vunpack.c.h.b16 %v375
  %v1746 = vunpack.c.l.b16 %v376
  %v1747 = vunpack.c.h.b16 %v376
  %v1748 = vunpack.c.l.b16 %v377
  %v1749 = vunpack.c.h.b16 %v377
  %v1750 = vunpack.c.l.b16 %v378
  %v1751 = vunpack.c.h.b16 %v378
  %v1752 = vunpack.c.l.b16 %v379
  %v1753 = vunpack.c.h.b16 %v379
  %v1754 = vunpack.c.l.b16 %v380
  %v1755 = vunpack.c.h.b16 %v380
  %v1756 = vunpack.c.l.b16 %v381
  %v1757 = vunpack.c.h.b16 %v381
  %v1758 = vunpack.c.l.b16 %v382
  %v1759 = vunpack.c.h.b16 %v382
  %v1760 = vunpack.c.l.b16 %v383
  %v1761 = vunpack.c.h.b16 %v383
  %v1762 = vunpack.c.l.b16 %v384
  %v1763 = vunpack.c.h.b16 %v384
  %v1764 = vunpack.c.l.b16 %v385
  %v1765 = vunpack.c.h.b16 %v385
  %v1766 = vunpack.c.l.b16 %v386
  %v1767 = vunpack.c.h.b16 %v386
  %v1768 = vunpack.c.l.b16 %v387
  %v1769 = vunpack.c.h.b16 %v387
  %v1770 = vunpack.c.l.b16 %v388
  %v1771 = vunpack.c.h.b16 %v388
  %v1772 = vunpack.c.l.b16 %v389
  %v1773 = vunpack.c.h.b16 %v389
  %v1774 = vunpack.c.l.b16 %v390
  %v1775 = vunpack.c.h.b16 %v390
  %v1776 = vunpack.c.l.b16 %v391
  %v1777 = vunpack.c.h.b16 %v391
  %v1778 = vunpack.c.l.b16 %v392
  %v1779 = vunpack.c.h.b16 %v392
  %v1780 = vunpack.c.l.b16 %v393
  %v1781 = vunpack.c.h.b16 %v393
  %v1782 = vunpack.c.l.b16 %v394
  %v1783 = vunpack.c.h.b16 %v394
  %v1784 = vunpack.c.l.b16 %v395
  %v1785 = vunpack.c.h.b16 %v395
  %v1786 = vunpack.c.l.b16 %v396
  %v1787 = vunpack.c.h.b16 %v396
  %v1788 = vunpack.c.l.b16 %v397
  %v1789 = vunpack.c.h.b16 %v397
  %v1790 = vunpack.c.l.b16 %v398
  %v1791 = vunpack.c.h.b16 %v398
  %v1792 = vunpack.c.l.b16 %v399
  %v1793 = vunpack.c.h.b16 %v399
  %v1794 = vunpack.c.l.b16 %v400
  %v1795 = vunpack.c.h.b16 %v400
  %v1796 = vunpack.c.l.b16 %v401
  %v1797 = vunpack.c.h.b16 %v401
  %v1798 = vunpack.c.l.b16 %v402
  %v1799 = vunpack.c.h.b16 %v402
  %v1800 = vunpack.c.l.b16 %v403
  %v1801 = vunpack.c.h.b16 %v403
  %v1802 = vunpack.c.l.b16 %v404
  %v1803 = vunpack.c.h.b16 %v404
  %v1804 = vunpack.c.l.b16 %v405
  %v1805 = vunpack.c.h.b16 %v405
  %v1806 = vunpack.c.l.b16 %v406
  %v1807 = vunpack.c.h.b16 %v406
  %v1808 = vunpack.c.l.b16 %v407
  %v1809 = vunpack.c.h.b16 %v407
  %v1810 = vunpack.c.l.b16 %v408
  %v1811 = vunpack.c.h.b16 %v408
  %v1812 = vunpack.c.l.b16 %v409
  %v1813 = vunpack.c.h.b16 %v409
  %v1814 = vunpack.c.l.b16 %v410
  %v1815 = vunpack.c.h.b16 %v410
  %v1816 = vunpack.c.l.b16 %v411
  %v1817 = vunpack.c.h.b16 %v411
  %v1818 = vunpack.c.l.b16 %v412
  %v1819 = vunpack.c.h.b16 %v412
  %v1820 = vunpack.c.l.b16 %v413
  %v1821 = vunpack.c.h.b16 %v413
  %v1822 = vunpack.c.l.b16 %v414
  %v1823 = vunpack.c.h.b16 %v414
  %v1824 = vunpack.c.l.b16 %v415
  %v1825 = vunpack.c.h.b16 %v415
  %v1826 = vunpack.c.l.b16 %v416
  %v1827 = vunpack.c.h.b16 %v416
  %v1828 = vunpack.c.l.b16 %v417
  %v1829 = vunpack.c.h.b16 %v417
  %v1830 = vunpack.c.l.b16 %v418
  %v1831 = vunpack.c.h.b16 %v418
  %v1832 = vunpack.c.l.b16 %v419
  %v1833 = vunpack.c.h.b16 %v419
  %v1834 = vunpack.c.l.b16 %v420
  %v1835 = vunpack.c.h.b16 %v420
  %v1836 = vunpack.c.l.b16 %v421
  %v1837 = vunpack.c.h.b16 %v421
  %v1838 = vunpack.c.l.b16 %v422
  %v1839 = vunpack.c.h.b16 %v422
  %v1840 = vunpack.c.l.b16 %v423
  %v1841 = vunpack.c.h.b16 %v423
  %v1842 = vunpack.c.l.b16 %v424
  %v1843 = vunpack.c.h.b16 %v424
  %v1844 = vunpack.c.l.b16 %v425
  %v1845 = vunpack.c.h.b16 %v425
  %v1846 = vunpack.c.l.b16 %v426
  %v1847 = vunpack.c.h.b16 %v426
  %v1848 = vunpack.c.l.b16 %v427
  %v1849 = vunpack.c.h.b16 %v427
  %v1850 = vunpack.c.l.b16 %v428
  %v1851 = vunpack.c.h.b16 %v428
  %v1852 = vunpack.c.l.b16 %v429
  %v1853 = vunpack.c.h.b16 %v429
  %v1854 = vunpack.c.l.b16 %v430
  %v1855 = vunpack.c.h.b16 %v430
  %v1856 = vunpack.c.l.b16 %v431
  %v1857 = vunpack.c.h.b16 %v431
  %v1858 = vunpack.c.l.b16 %v432
  %v1859 = vunpack.c.h.b16 %v432
  %v1860 = vunpack.c.l.b16 %v433
  %v1861 = vunpack.c.h.b16 %v433
  %v1862 = vunpack.c.l.b16 %v434
  %v1863 = vunpack.c.h.b16 %v434
  %v1864 = vunpack.c.l.b16 %v435
  %v1865 = vunpack.c.h.b16 %v435
  %v1866 = vunpack.c.l.b16 %v436
  %v1867 = vunpack.c.h.b16 %v436
  %v1868 = vunpack.c.l.b16 %v437
  %v1869 = vunpack.c.h.b16 %v437
  %v1870 = vunpack.c.l.b16 %v438
  %v1871 = vunpack.c.h.b16 %v438
  %v1872 = vunpack.c.l.b16 %v439
  %v1873 = vunpack.c.h.b16 %v439
  %v1874 = vunpack.c.l.b16 %v440
  %v1875 = vunpack.c.h.b16 %v440
  %v1876 = vunpack.c.l.b16 %v441
  %v1877 = vunpack.c.h.b16 %v441
  %v1878 = vunpack.c.l.b16 %v442
  %v1879 = vunpack.c.h.b16 %v442
  %v1880 = vunpack.c.l.b16 %v443
  %v1881 = vunpack.c.h.b16 %v443
  %v1882 = vunpack.c.l.b16 %v444
  %v1883 = vunpack.c.h.b16 %v444
  %v1884 = vunpack.c.l.b16 %v445
  %v1885 = vunpack.c.h.b16 %v445
  %v1886 = vunpack.c.l.b16 %v446
  %v1887 = vunpack.c.h.b16 %v446
  %v1888 = vunpack.c.l.b16 %v447
  %v1889 = vunpack.c.h.b16 %v447
  %v1890 = vunpack.c.l.b16 %v448
  %v1891 = vunpack.c.h.b16 %v448
  %v1892 = vunpack.c.l.b16 %v449
  %v1893 = vunpack.c.h.b16 %v449
  %v1894 = vunpack.c.l.b16 %v450
  %v1895 = vunpack.c.h.b16 %v450
  %v1896 = vunpack.c.l.b16 %v451
  %v1897 = vunpack.c.h.b16 %v451
  %v1898 = vunpack.c.l.b16 %v452
  %v1899 = vunpack.c.h.b16 %v452
  %v1900 = vunpack.c.l.b16 %v453
  %v1901 = vunpack.c.h.b16 %v453
  %v1902 = vunpack.c.l.b16 %v454
  %v1903 = vunpack.c.h.b16 %v454
  %v1904 = vunpack.c.l.b16 %v455
  %v1905 = vunpack.c.h.b16 %v455
  %v1906 = vunpack.c.l.b16 %v456
  %v1907 = vunpack.c.h.b16 %v456
  %v1908 = vunpack.c.l.b16 %v457
  %v1909 = vunpack.c.h.b16 %v457
  %v1910 = vunpack.c.l.b16 %v458
  %v1911 = vunpack.c.h.b16 %v458
  %v1912 = vunpack.c.l.b16 %v459
  %v1913 = vunpack.c.h.b16 %v459
  %v1914 = vunpack.c.l.b16 %v460
  %v1915 = vunpack.c.h.b16 %v460
  %v1916 = vunpack.c.l.b16 %v461
  %v1917 = vunpack.c.h.b16 %v461
  %v1918 = vunpack.c.l.b16 %v462
  %v1919 = vunpack.c.h.b16 %v462
  %v1920 = vunpack.c.l.b16 %v463
  %v1921 = vunpack.c.h.b16 %v463
  %v1922 = vunpack.c.l.b16 %v464
  %v1923 = vunpack.c.h.b16 %v464
  %v1924 = vunpack.c.l.b16 %v465
  %v1925 = vunpack.c.h.b16 %v465
  %v1926 = vunpack.c.l.b16 %v466
  %v1927 = vunpack.c.h.b16 %v466
  %v1928 = vunpack.c.l.b16 %v467
  %v1929 = vunpack.c.h.b16 %v467
  %v1930 = vunpack.c.l.b16 %v468
  %v1931 = vunpack.c.h.b16 %v468
  %v1932 = vunpack.c.l.b16 %v469
  %v1933 = vunpack.c.h.b16 %v469
  %v1934 = vpack.c.b16 %v1136, %v1134
  %v1935 = vpack.c.b16 %v1137, %v1135
  %v1936 = vpack.c.b16 %v1140, %v1138
  %v1937 = vpack.c.b16 %v1141, %v1139
  %v1938 = vpack.c.b16 %v1144, %v1142
  %v1939 = vpack.c.b16 %v1145, %v1143
  %v1940 = vpack.c.b16 %v1148, %v1146
  %v1941 = vpack.c.b16 %v1149, %v1147
  %v1942 = vpack.c.b16 %v1152, %v1150
  %v1943 = vpack.c.b16 %v1153, %v1151
  %v1944 = vpack.c.b16 %v1156, %v1154
  %v1945 = vpack.c.b16 %v1157, %v1155
  %v1946 = vpack.c.b16 %v1160, %v1158
  %v1947 = vpack.c.b16 %v1161, %v1159
  %v1948 = vpack.c.b16 %v1164, %v1162
  %v1949 = vpack.c.b16 %v1165, %v1163
  %v1950 = vpack.c.b16 %v1168, %v1166
  %v1951 = vpack.c.b16 %v1169, %v1167
  %v1952 = vpack.c.b16 %v1172, %v1170
  %v1953 = vpack.c.b16 %v1173, %v1171
  %v1954 = vpack.c.b16 %v1176, %v1174
  %v1955 = vpack.c.b16 %v1177, %v1175
  %v1956 = vpack.c.b16 %v1180, %v1178
  %v1957 = vpack.c.b16 %v1181, %v1179
  %v1958 = vpack.c.b16 %v1184, %v1182
  %v1959 = vpack.c.b16 %v1185, %v1183
  %v1960 = vpack.c.b16 %v1188, %v1186
  %v1961 = vpack.c.b16 %v1189, %v1187
  %v1962 = vpack.c.b16 %v1192, %v1190
  %v1963 = vpack.c.b16 %v1193, %v1191
  %v1964 = vpack.c.b16 %v1196, %v1194
  %v1965 = vpack.c.b16 %v1197, %v1195
  %v1966 = vpack.c.b16 %v1200, %v1198
  %v1967 = vpack.c.b16 %v1201, %v1199
  %v1968 = vpack.c.b16 %v1204, %v1202
  %v1969 = vpack.c.b16 %v1205, %v1203
  %v1970 = vpack.c.b16 %v1208, %v1206
  %v1971 = vpack.c.b16 %v1209, %v1207
  %v1972 = vpack.c.b16 %v1212, %v1210
  %v1973 = vpack.c.b16 %v1213, %v1211
  %v1974 = vpack.c.b16 %v1216, %v1214
  %v1975 = vpack.c.b16 %v1217, %v1215
  %v1976 = vpack.c.b16 %v1220, %v1218
  %v1977 = vpack.c.b16 %v1221, %v1219
  %v1978 = vpack.c.b16 %v1224, %v1222
  %v1979 = vpack.c.b16 %v1225, %v1223
  %v1980 = vpack.c.b16 %v1228, %v1226
  %v1981 = vpack.c.b16 %v1229, %v1227
  %v1982 = vpack.c.b16 %v1232, %v1230
  %v1983 = vpack.c.b16 %v1233, %v1231
  %v1984 = vpack.c.b16 %v1236, %v1234
  %v1985 = vpack.c.b16 %v1237, %v1235
  %v1986 = vpack.c.b16 %v1240, %v1238
  %v1987 = vpack.c.b16 %v1241, %v1239
  %v1988 = vpack.c.b16 %v1244, %v1242
  %v1989 = vpack.c.b16 %v1245, %v1243
  %v1990 = vpack.c.b16 %v1248, %v1246
  %v1991 = vpack.c.b16 %v1249, %v1247
  %v1992 = vpack.c.b16 %v1252, %v1250
  %v1993 = vpack.c.b16 %v1253, %v1251
  %v1994 = vpack.c.b16 %v1256, %v1254
  %v1995 = vpack.c.b16 %v1257, %v1255
  %v1996 = vpack.c.b16 %v1260, %v1258
  %v1997 = vpack.c.b16 %v1261, %v1259
  %v1998 = vpack.c.b16 %v1264, %v1262
  %v1999 = vpack.c.b16 %v1265, %v1263
  %v2000 = vpack.c.b16 %v1268, %v1266
  %v2001 = vpack.c.b16 %v1269, %v1267
  %v2002 = vpack.c.b16 %v1272, %v1270
  %v2003 = vpack.c.b16 %v1273, %v1271
  %v2004 = vpack.c.b16 %v1276, %v1274
  %v2005 = vpack.c.b16 %v1277, %v1275
  %v2006 = vpack.c.b16 %v1280, %v1278
  %v2007 = vpack.c.b16 %v1281, %v1279
  %v2008 = vpack.c.b16 %v1284, %v1282
  %v2009 = vpack.c.b16 %v1285, %v1283
  %v2010 = vpack.c.b16 %v1288, %v1286
  %v2011 = vpack.c.b16 %v1289, %v1287
  %v2012 = vpack.c.b16 %v1292, %v1290
  %v2013 = vpack.c.b16 %v1293, %v1291
  %v2014 = vpack.c.b16 %v1296, %v1294
  %v2015 = vpack.c.b16 %v1297, %v1295
  %v2016 = vpack.c.b16 %v1300, %v1298
  %v2017 = vpack.c.b16 %v1301, %v1299
  %v2018 = vpack.c.b16 %v1304, %v1302
  %v2019 = vpack.c.b16 %v1305, %v1303
  %v2020 = vpack.c.b16 %v1308, %v1306
  %v2021 = vpack.c.b16 %v1309, %v1307
  %v2022 = vpack.c.b16 %v1312, %v1310
  %v2023 = vpack.c.b16 %v1313, %v1311
  %v2024 = vpack.c.b16 %v1316, %v1314
  %v2025 = vpack.c.b16 %v1317, %v1315
  %v2026 = vpack.c.b16 %v1320, %v1318
  %v2027 = vpack.c.b16 %v1321, %v1319
  %v2028 = vpack.c.b16 %v1324, %v1322
  %v2029 = vpack.c.b16 %v1325, %v1323
  %v2030 = vpack.c.b16 %v1328, %v1326
  %v2031 = vpack.c.b16 %v1329, %v1327
  %v2032 = vpack.c.b16 %v1332, %v1330
  %v2033 = vpack.c.b16 %v1333, %v1331
  %v2034 = vpack.c.b16 %v1336, %v1334
  %v2035 = vpack.c.b16 %v1337, %v1335
  %v2036 = vpack.c.b16 %v1340, %v1338
  %v2037 = vpack.c.b16 %v1341, %v1339
  %v2038 = vpack.c.b16 %v1344, %v1342
  %v2039 = vpack.c.b16 %v1345, %v1343
  %v2040 = vpack.c.b16 %v1348, %v1346
  %v2041 = vpack.c.b16 %v1349, %v1347
  %v2042 = vpack.c.b16 %v1352, %v1350
  %v2043 = vpack.c.b16 %v1353, %v1351
  %v2044 = vpack.c.b16 %v1356, %v1354
  %v2045 = vpack.c.b16 %v1357, %v1355
  %v2046 = vpack.c.b16 %v1360, %v1358
  %v2047 = vpack.c.b16 %v1361, %v1359
  %v2048 = vpack.c.b16 %v1364, %v1362
  %v2049 = vpack.c.b16 %v1365, %v1363
  %v2050 = vpack.c.b16 %v1368, %v1366
  %v2051 = vpack.c.b16 %v1369, %v1367
  %v2052 = vpack.c.b16 %v1372, %v1370
  %v2053 = vpack.c.b16 %v1373, %v1371
  %v2054 = vpack.c.b16 %v1376, %v1374
  %v2055 = vpack.c.b16 %v1377, %v1375
  %v2056 = vpack.c.b16 %v1380, %v1378
  %v2057 = vpack.c.b16 %v1381, %v1379
  %v2058 = vpack.c.b16 %v1384, %v1382
  %v2059 = vpack.c.b16 %v1385, %v1383
  %v2060 = vpack.c.b16 %v1388, %v1386
  %v2061 = vpack.c.b16 %v1389, %v1387
  %v2062 = vpack.c.b16 %v1392, %v1390
  %v2063 = vpack.c.b16 %v1393, %v1391
  %v2064 = vpack.c.b16 %v1396, %v1394
  %v2065 = vpack.c.b16 %v1397, %v1395
  %v2066 = vpack.c.b16 %v1400, %v1398
  %v2067 = vpack.c.b16 %v1401, %v1399
  %v2068 = vpack.c.b16 %v1404, %v1402
  %v2069 = vpack.c.b16 %v1405, %v1403
  %v2070 = vpack.c.b16 %v1408, %v1406
  %v2071 = vpack.c.b16 %v1409, %v1407
  %v2072 = vpack.c.b16 %v1412, %v1410
  %v2073 = vpack.c.b16 %v1413, %v1411
  %v2074 = vpack.c.b16 %v1416, %v1414
  %v2075 = vpack.c.b16 %v1417, %v1415
  %v2076 = vpack.c.b16 %v1420, %v1418
  %v2077 = vpack.c.b16 %v1421, %v1419
  %v2078 = vpack.c.b16 %v1424, %v1422
  %v2079 = vpack.c.b16 %v1425, %v1423
  %v2080 = vpack.c.b16 %v1428, %v1426
  %v2081 = vpack.c.b16 %v1429, %v1427
  %v2082 = vpack.c.b16 %v1432, %v1430
  %v2083 = vpack.c.b16 %v1433, %v1431
  %v2084 = vpack.c.b16 %v1436, %v1434
  %v2085 = vpack.c.b16 %v1437, %v1435
  %v2086 = vpack.c.b16 %v1440, %v1438
  %v2087 = vpack.c.b16 %v1441, %v1439
  %v2088 = vpack.c.b16 %v1444, %v1442
  %v2089 = vpack.c.b16 %v1445, %v1443
  %v2090 = vpack.c.b16 %v1448, %v1446
  %v2091 = vpack.c.b16 %v1449, %v1447
  %v2092 = vpack.c.b16 %v1452, %v1450
  %v2093 = vpack.c.b16 %v1453, %v1451
  %v2094 = vpack.c.b16 %v1456, %v1454
  %v2095 = vpack.c.b16 %v1457, %v1455
  %v2096 = vpack.c.b16 %v1460, %v1458
  %v2097 = vpack.c.b16 %v1461, %v1459
  %v2098 = vpack.c.b16 %v1464, %v1462
  %v2099 = vpack.c.b16 %v1465, %v1463
  %v2100 = vpack.c.b16 %v1468, %v1466
  %v2101 = vpack.c.b16 %v1469, %v1467
  %v2102 = vpack.c.b16 %v1472, %v1470
  %v2103 = vpack.c.b16 %v1473, %v1471
  %v2104 = vpack.c.b16 %v1476, %v1474
  %v2105 = vpack.c.b16 %v1477, %v1475
  %v2106 = vpack.c.b16 %v1480, %v1478
  %v2107 = vpack.c.b16 %v1481, %v1479
  %v2108 = vpack.c.b16 %v1484, %v1482
  %v2109 = vpack.c.b16 %v1485, %v1483
  %v2110 = vpack.c.b16 %v1488, %v1486
  %v2111 = vpack.c.b16 %v1489, %v1487
  %v2112 = vpack.c.b16 %v1492, %v1490
  %v2113 = vpack.c.b16 %v1493, %v1491
  %v2114 = vpack.c.b16 %v1496, %v1494
  %v2115 = vpack.c.b16 %v1497, %v1495
  %v2116 = vpack.c.b16 %v1500, %v1498
  %v2117 = vpack.c.b16 %v1501, %v1499
  %v2118 = vpack.c.b16 %v1504, %v1502
  %v2119 = vpack.c.b16 %v1505, %v1503
  %v2120 = vpack.c.b16 %v1508, %v1506
  %v2121 = vpack.c.b16 %v1509, %v1507
  %v2122 = vpack.c.b16 %v1512, %v1510
  %v2123 = vpack.c.b16 %v1513, %v1511
  %v2124 = vpack.c.b16 %v1516, %v1514
  %v2125 = vpack.c.b16 %v1517, %v1515
  %v2126 = vpack.c.b16 %v1520, %v1518
  %v2127 = vpack.c.b16 %v1521, %v1519
  %v2128 = vpack.c.b16 %v1524, %v1522
  %v2129 = vpack.c.b16 %v1525, %v1523
  %v2130 = vpack.c.b16 %v1528, %v1526
  %v2131 = vpack.c.b16 %v1529, %v1527
  %v2132 = vpack.c.b16 %v1532, %v1530
  %v2133 = vpack.c.b16 %v1533, %v1531
  %v2134 = vpack.c.b16 %v1536, %v1534
  %v2135 = vpack.c.b16 %v1537, %v1535
  %v2136 = vpack.c.b16 %v1540, %v1538
  %v2137 = vpack.c.b16 %v1541, %v1539
  %v2138 = vpack.c.b16 %v1544, %v1542
  %v2139 = vpack.c.b16 %v1545, %v1543
  %v2140 = vpack.c.b16 %v1548, %v1546
  %v2141 = vpack.c.b16 %v1549, %v1547
  %v2142 = vpack.c.b16 %v1552, %v1550
  %v2143 = vpack.c.b16 %v1553, %v1551
  %v2144 = vpack.c.b16 %v1556, %v1554
  %v2145 = vpack.c.b16 %v1557, %v1555
  %v2146 = vpack.c.b16 %v1560, %v1558
  %v2147 = vpack.c.b16 %v1561, %v1559
  %v2148 = vpack.c.b16 %v1564, %v1562
  %v2149 = vpack.c.b16 %v1565, %v1563
  %v2150 = vpack.c.b16 %v1568, %v1566
  %v2151 = vpack.c.b16 %v1569, %v1567
  %v2152 = vpack.c.b16 %v1572, %v1570
  %v2153 = vpack.c.b16 %v1573, %v1571
  %v2154 = vpack.c.b16 %v1576, %v1574
  %v2155 = vpack.c.b16 %v1577, %v1575
  %v2156 = vpack.c.b16 %v1580, %v1578
  %v2157 = vpack.c.b16 %v1581, %v1579
  %v2158 = vpack.c.b16 %v1584, %v1582
  %v2159 = vpack.c.b16 %v1585, %v1583
  %v2160 = vpack.c.b16 %v1588, %v1586
  %v2161 = vpack.c.b16 %v1589, %v1587
  %v2162 = vpack.c.b16 %v1592, %v1590
  %v2163 = vpack.c.b16 %v1593, %v1591
  %v2164 = vpack.c.b16 %v1596, %v1594
  %v2165 = vpack.c.b16 %v1597, %v1595
  %v2166 = vpack.c.b16 %v1600, %v1598
  %v2167 = vpack.c.b16 %v1601, %v1599
  %v2168 = vpack.c.b16 %v1604, %v1602
  %v2169 = vpack.c.b16 %v1605, %v1603
  %v2170 = vpack.c.b16 %v1608, %v1606
  %v2171 = vpack.c.b16 %v1609, %v1607
  %v2172 = vpack.c.b16 %v1612, %v1610
  %v2173 = vpack.c.b16 %v1613, %v1611
  %v2174 = vpack.c.b16 %v1616, %v1614
  %v2175 = vpack.c.b16 %v1617, %v1615
  %v2176 = vpack.c.b16 %v1620, %v1618
  %v2177 = vpack.c.b16 %v1621, %v1619
  %v2178 = vpack.c.b16 %v1624, %v1622
  %v2179 = vpack.c.b16 %v1625, %v1623
  %v2180 = vpack.c.b16 %v1628, %v1626
  %v2181 = vpack.c.b16 %v1629, %v1627
  %v2182 = vpack.c.b16 %v1632, %v1630
  %v2183 = vpack.c.b16 %v1633, %v1631
  %v2184 = vpack.c.b16 %v1636, %v1634
  %v2185 = vpack.c.b16 %v1637, %v1635
  %v2186 = vpack.c.b16 %v1640, %v1638
  %v2187 = vpack.c.b16 %v1641, %v1639
  %v2188 = vpack.c.b16 %v1644, %v1642
  %v2189 = vpack.c.b16 %v1645, %v1643
  %v2190 = vpack.c.b16 %v1648, %v1646
  %v2191 = vpack.c.b16 %v1649, %v1647
  %v2192 = vpack.c.b16 %v1652, %v1650
  %v2193 = vpack.c.b16 %v1653, %v1651
  %v2194 = vpack.c.b16 %v1656, %v1654
  %v2195 = vpack.c.b16 %v1657, %v1655
  %v2196 = vpack.c.b16 %v1660, %v1658
  %v2197 = vpack.c.b16 %v1661, %v1659
  %v2198 = vpack.c.b16 %v1664, %v1662
  %v2199 = vpack.c.b16 %v1665, %v1663
  %v2200 = vpack.c.b16 %v1668, %v1666
  %v2201 = vpack.c.b16 %v1669, %v1667
  %v2202 = vpack.c.b16 %v1672, %v1670
  %v2203 = vpack.c.b16 %v1673, %v1671
  %v2204 = vpack.c.b16 %v1676, %v1674
  %v2205 = vpack.c.b16 %v1677, %v1675
  %v2206 = vpack.c.b16 %v1680, %v1678
  %v2207 = vpack.c.b16 %v1681, %v1679
  %v2208 = vpack.c.b16 %v1684, %v1682
  %v2209 = vpack.c.b16 %v1685, %v1683
  %v2210 = vpack.c.b16 %v1688, %v1686
  %v2211 = vpack.c.b16 %v1689, %v1687
  %v2212 = vpack.c.b16 %v1692, %v1690
  %v2213 = vpack.c.b16 %v1693, %v1691
  %v2214 = vpack.c.b16 %v1696, %v1694
  %v2215 = vpack.c.b16 %v1697, %v1695
  %v2216 = vpack.c.b16 %v1700, %v1698
  %v2217 = vpack.c.b16 %v1701, %v1699
  %v2218 = vpack.c.b16 %v1704, %v1702
  %v2219 = vpack.c.b16 %v1705, %v1703
  %v2220 = vpack.c.b16 %v1708, %v1706
  %v2221 = vpack.c.b16 %v1709, %v1707
  %v2222 = vpack.c.b16 %v1712, %v1710
  %v2223 = vpack.c.b16 %v1713, %v1711
  %v2224 = vpack.c.b16 %v1716, %v1714
  %v2225 = vpack.c.b16 %v1717, %v1715
  %v2226 = vpack.c.b16 %v1720, %v1718
  %v2227 = vpack.c.b16 %v1721, %v1719
  %v2228 = vpack.c.b16 %v1724, %v1722
  %v2229 = vpack.c.b16 %v1725, %v1723
  %v2230 = vpack.c.b16 %v1728, %v1726
  %v2231 = vpack.c.b16 %v1729, %v1727
  %v2232 = vpack.c.b16 %v1732, %v1730
  %v2233 = vpack.c.b16 %v1733, %v1731
  %v2234 = vpack.c.b16 %v1736, %v1734
  %v2235 = vpack.c.b16 %v1737, %v1735
  %v2236 = vpack.c.b16 %v1740, %v1738
  %v2237 = vpack.c.b16 %v1741, %v1739
  %v2238 = vpack.c.b16 %v1744, %v1742
  %v2239 = vpack.c.b16 %v1745, %v1743
  %v2240 = vpack.c.b16 %v1748, %v1746
  %v2241 = vpack.c.b16 %v1749, %v1747
  %v2242 = vpack.c.b16 %v1752, %v1750
  %v2243 = vpack.c.b16 %v1753, %v1751
  %v2244 = vpack.c.b16 %v1756, %v1754
  %v2245 = vpack.c.b16 %v1757, %v1755
  %v2246 = vpack.c.b16 %v1760, %v1758
  %v2247 = vpack.c.b16 %v1761, %v1759
  %v2248 = vpack.c.b16 %v1764, %v1762
  %v2249 = vpack.c.b16 %v1765, %v1763
  %v2250 = vpack.c.b16 %v1768, %v1766
  %v2251 = vpack.c.b16 %v1769, %v1767
  %v2252 = vpack.c.b16 %v1772, %v1770
  %v2253 = vpack.c.b16 %v1773, %v1771
  %v2254 = vpack.c.b16 %v1776, %v1774
  %v2255 = vpack.c.b16 %v1777, %v1775
  %v2256 = vpack.c.b16 %v1780, %v1778
  %v2257 = vpack.c.b16 %v1781, %v1779
  %v2258 = vpack.c.b16 %v1784, %v1782
  %v2259 = vpack.c.b16 %v1785, %v1783
  %v2260 = vpack.c.b16 %v1788, %v1786
  %v2261 = vpack.c.b16 %v1789, %v1787
  %v2262 = vpack.c.b16 %v1792, %v1790
  %v2263 = vpack.c.b16 %v1793, %v1791
  %v2264 = vpack.c.b16 %v1796, %v1794
  %v2265 = vpack.c.b16 %v1797, %v1795
  %v2266 = vpack.c.b16 %v1800, %v1798
  %v2267 = vpack.c.b16 %v1801, %v1799
  %v2268 = vpack.c.b16 %v1804, %v1802
  %v2269 = vpack.c.b16 %v1805, %v1803
  %v2270 = vpack.c.b16 %v1808, %v1806
  %v2271 = vpack.c.b16 %v1809, %v1807
  %v2272 = vpack.c.b16 %v1812, %v1810
  %v2273 = vpack.c.b16 %v1813, %v1811
  %v2274 = vpack.c.b16 %v1816, %v1814
  %v2275 = vpack.c.b16 %v1817, %v1815
  %v2276 = vpack.c.b16 %v1820, %v1818
  %v2277 = vpack.c.b16 %v1821, %v1819
  %v2278 = vpack.c.b16 %v1824, %v1822
  %v2279 = vpack.c.b16 %v1825, %v1823
  %v2280 = vpack.c.b16 %v1828, %v1826
  %v2281 = vpack.c.b16 %v1829, %v1827
  %v2282 = vpack.c.b16 %v1832, %v1830
  %v2283 = vpack.c.b16 %v1833, %v1831
  %v2284 = vpack.c.b16 %v1836, %v1834
  %v2285 = vpack.c.b16 %v1837, %v1835
  %v2286 = vpack.c.b16 %v1840, %v1838
  %v2287 = vpack.c.b16 %v1841, %v1839
  %v2288 = vpack.c.b16 %v1844, %v1842
  %v2289 = vpack.c.b16 %v1845, %v1843
  %v2290 = vpack.c.b16 %v1848, %v1846
  %v2291 = vpack.c.b16 %v1849, %v1847
  %v2292 = vpack.c.b16 %v1852, %v1850
  %v2293 = vpack.c.b16 %v1853, %v1851
  %v2294 = vpack.c.b16 %v1856, %v1854
  %v2295 = vpack.c.b16 %v1857, %v1855
  %v2296 = vpack.c.b16 %v1860, %v1858
  %v2297 = vpack.c.b16 %v1861, %v1859
  %v2298 = vpack.c.b16 %v1864, %v1862
  %v2299 = vpack.c.b16 %v1865, %v1863
  %v2300 = vpack.c.b16 %v1868, %v1866
  %v2301 = vpack.c.b16 %v1869, %v1867
  %v2302 = vpack.c.b16 %v1872, %v1870
  %v2303 = vpack.c.b16 %v1873, %v1871
  %v2304 = vpack.c.b16 %v1876, %v1874
  %v2305 = vpack.c.b16 %v1877, %v1875
  %v2306 = vpack.c.b16 %v1880, %v1878
  %v2307 = vpack.c.b16 %v1881, %v1879
  %v2308 = vpack.c.b16 %v1884, %v1882
  %v2309 = vpack.c.b16 %v1885, %v1883
  %v2310 = vpack.c.b16 %v1888, %v1886
  %v2311 = vpack.c.b16 %v1889, %v1887
  %v2312 = vpack.c.b16 %v1892, %v1890
  %v2313 = vpack.c.b16 %v1893, %v1891
  %v2314 = vpack.c.b16 %v1896, %v1894
  %v2315 = vpack.c.b16 %v1897, %v1895
  %v2316 = vpack.c.b16 %v1900, %v1898
  %v2317 = vpack.c.b16 %v1901, %v1899
  %v2318 = vpack.c.b16 %v1904, %v1902
  %v2319 = vpack.c.b16 %v1905, %v1903
  %v2320 = vpack.c.b16 %v1908, %v1906
  %v2321 = vpack.c.b16 %v1909, %v1907
  %v2322 = vpack.c.b16 %v1912, %v1910
  %v2323 = vpack.c.b16 %v1913, %v1911
  %v2324 = vpack.c.b16 %v1916, %v1914
  %v2325 = vpack.c.b16 %v1917, %v1915
  %v2326 = vpack.c.b16 %v1920, %v1918
  %v2327 = vpack.c.b16 %v1921, %v1919
  %v2328 = vpack.c.b16 %v1924, %v1922
  %v2329 = vpack.c.b16 %v1925, %v1923
  %v2330 = vpack.c.b16 %v1928, %v1926
  %v2331 = vpack.c.b16 %v1929, %v1927
  %v2332 = vpack.c.b16 %v1932, %v1930
  %v2333 = vpack.c.b16 %v1933, %v1931
  %2734 = vmatprep.subr.bf16.mxu0 %v1935
  %2735 = vmatpush1.bf16.msra.mxu0 %v1934
  %2736 = vmatprep.subr.bf16.mxu0 %v1937
  %2737 = vmatpush1.bf16.msra.mxu0 %v1936
  %2738 = vmatprep.subr.bf16.mxu0 %v1939
  %2739 = vmatpush1.bf16.msra.mxu0 %v1938
  %2740 = vmatprep.subr.bf16.mxu0 %v1941
  %2741 = vmatpush1.bf16.msra.mxu0 %v1940
  %2742 = vmatprep.subr.bf16.mxu0 %v1943
  %2743 = vmatpush1.bf16.msra.mxu0 %v1942
  %2744 = vmatprep.subr.bf16.mxu0 %v1945
  %2745 = vmatpush1.bf16.msra.mxu0 %v1944
  %2746 = vmatprep.subr.bf16.mxu0 %v1947
  %2747 = vmatpush1.bf16.msra.mxu0 %v1946
  %2748 = vmatprep.subr.bf16.mxu0 %v1949
  %2749 = vmatpush1.bf16.msra.mxu0 %v1948
  %2750 = vmatprep.subr.bf16.mxu0 %v1951
  %2751 = vmatpush1.bf16.msra.mxu0 %v1950
  %2752 = vmatprep.subr.bf16.mxu0 %v1953
  %2753 = vmatpush1.bf16.msra.mxu0 %v1952
  %2754 = vmatprep.subr.bf16.mxu0 %v1955
  %2755 = vmatpush1.bf16.msra.mxu0 %v1954
  %2756 = vmatprep.subr.bf16.mxu0 %v1957
  %2757 = vmatpush1.bf16.msra.mxu0 %v1956
  %2758 = vmatprep.subr.bf16.mxu0 %v1959
  %2759 = vmatpush1.bf16.msra.mxu0 %v1958
  %2760 = vmatprep.subr.bf16.mxu0 %v1961
  %2761 = vmatpush1.bf16.msra.mxu0 %v1960
  %2762 = vmatprep.subr.bf16.mxu0 %v1963
  %2763 = vmatpush1.bf16.msra.mxu0 %v1962
  %2764 = vmatprep.subr.bf16.mxu0 %v1965
  %2765 = vmatpush1.bf16.msra.mxu0 %v1964
  %2766 = vmatprep.mubr.bf16.mxu0 %v635
  %2767 = vmatmul.mubr.bf16.gmra.mrb[0].mxu0 %v634
  %v2768 = vpop.f32.mrb[0].mxu0
  %v2769 = vadd.f32 %v475, %v2768
  %v2770 = vpop.f32.mrb[0].mxu0
  %v2771 = vadd.f32 %v479, %v2770
  %v2772 = vpop.f32.mrb[0].mxu0
  %v2773 = vadd.f32 %v475, %v2772
  %v2774 = vpop.f32.mrb[0].mxu0
  %v2775 = vadd.f32 %v479, %v2774
  %2776 = vmatprep.mubr.bf16.mxu0 %v660
  %2777 = vmatmul.mubr.bf16.gmra.mrb[0].mxu0 %v659
  %v2778 = vpop.f32.mrb[0].mxu0
  %v2779 = vadd.f32 %v475, %v2778
  %v2780 = vpop.f32.mrb[0].mxu0
  %v2781 = vadd.f32 %v479, %v2780
  %v2782 = vpop.f32.mrb[0].mxu0
  %v2783 = vadd.f32 %v475, %v2782
  %v2784 = vpop.f32.mrb[0].mxu0
  %v2785 = vadd.f32 %v479, %v2784
  %2786 = vdwg.mxu0
  %2787 = vmatprep.subr.bf16.mxu0 %v1967
  %2788 = vmatpush1.bf16.msra.mxu0 %v1966
  %2789 = vmatprep.subr.bf16.mxu0 %v1969
  %2790 = vmatpush1.bf16.msra.mxu0 %v1968
  %2791 = vmatprep.subr.bf16.mxu0 %v1971
  %2792 = vmatpush1.bf16.msra.mxu0 %v1970
  %2793 = vmatprep.subr.bf16.mxu0 %v1973
  %2794 = vmatpush1.bf16.msra.mxu0 %v1972
  %2795 = vmatprep.subr.bf16.mxu0 %v1975
  %2796 = vmatpush1.bf16.msra.mxu0 %v1974
  %2797 = vmatprep.subr.bf16.mxu0 %v1977
  %2798 = vmatpush1.bf16.msra.mxu0 %v1976
  %2799 = vmatprep.subr.bf16.mxu0 %v1979
  %2800 = vmatpush1.bf16.msra.mxu0 %v1978
  %2801 = vmatprep.subr.bf16.mxu0 %v1981
  %2802 = vmatpush1.bf16.msra.mxu0 %v1980
  %2803 = vmatprep.subr.bf16.mxu0 %v1983
  %2804 = vmatpush1.bf16.msra.mxu0 %v1982
  %2805 = vmatprep.subr.bf16.mxu0 %v1985
  %2806 = vmatpush1.bf16.msra.mxu0 %v1984
  %2807 = vmatprep.subr.bf16.mxu0 %v1987
  %2808 = vmatpush1.bf16.msra.mxu0 %v1986
  %2809 = vmatprep.subr.bf16.mxu0 %v1989
  %2810 = vmatpush1.bf16.msra.mxu0 %v1988
  %2811 = vmatprep.subr.bf16.mxu0 %v1991
  %2812 = vmatpush1.bf16.msra.mxu0 %v1990
  %2813 = vmatprep.subr.bf16.mxu0 %v1993
  %2814 = vmatpush1.bf16.msra.mxu0 %v1992
  %2815 = vmatprep.subr.bf16.mxu0 %v1995
  %2816 = vmatpush1.bf16.msra.mxu0 %v1994
  %2817 = vmatprep.subr.bf16.mxu0 %v1997
  %2818 = vmatpush1.bf16.msra.mxu0 %v1996
  %2819 = vmatprep.mubr.bf16.mxu0 %v637
  %2820 = vmatmul.mubr.bf16.gmra.mrb[0].mxu0 %v636
  %v2821 = vpop.f32.mrb[0].mxu0
  %v2822 = vadd.f32 %v2769, %v2821
  %v2823 = vpop.f32.mrb[0].mxu0
  %v2824 = vadd.f32 %v2771, %v2823
  %v2825 = vpop.f32.mrb[0].mxu0
  %v2826 = vadd.f32 %v2773, %v2825
  %v2827 = vpop.f32.mrb[0].mxu0
  %v2828 = vadd.f32 %v2775, %v2827
  %2829 = vmatprep.mubr.bf16.mxu0 %v662
  %2830 = vmatmul.mubr.bf16.gmra.mrb[0].mxu0 %v661
  %v2831 = vpop.f32.mrb[0].mxu0
  %v2832 = vadd.f32 %v2779, %v2831
  %v2833 = vpop.f32.mrb[0].mxu0
  %v2834 = vadd.f32 %v2781, %v2833
  %v2835 = vpop.f32.mrb[0].mxu0
  %v2836 = vadd.f32 %v2783, %v2835
  %v2837 = vpop.f32.mrb[0].mxu0
  %v2838 = vadd.f32 %v2785, %v2837
  %2839 = vdwg.mxu0
  %2840 = vmatprep.subr.bf16.mxu0 %v1999
  %2841 = vmatpush1.bf16.msra.mxu0 %v1998
  %2842 = vmatprep.subr.bf16.mxu0 %v2001
  %2843 = vmatpush1.bf16.msra.mxu0 %v2000
  %2844 = vmatprep.subr.bf16.mxu0 %v2003
  %2845 = vmatpush1.bf16.msra.mxu0 %v2002
  %2846 = vmatprep.subr.bf16.mxu0 %v2005
  %2847 = vmatpush1.bf16.msra.mxu0 %v2004
  %2848 = vmatprep.subr.bf16.mxu0 %v2007
  %2849 = vmatpush1.bf16.msra.mxu0 %v2006
  %2850 = vmatprep.subr.bf16.mxu0 %v2009
  %2851 = vmatpush1.bf16.msra.mxu0 %v2008
  %2852 = vmatprep.subr.bf16.mxu0 %v2011
  %2853 = vmatpush1.bf16.msra.mxu0 %v2010
  %2854 = vmatprep.subr.bf16.mxu0 %v2013
  %2855 = vmatpush1.bf16.msra.mxu0 %v2012
  %2856 = vmatprep.subr.bf16.mxu0 %v2015
  %2857 = vmatpush1.bf16.msra.mxu0 %v2014
  %2858 = vmatprep.subr.bf16.mxu0 %v2017
  %2859 = vmatpush1.bf16.msra.mxu0 %v2016
  %2860 = vmatprep.subr.bf16.mxu0 %v2019
  %2861 = vmatpush1.bf16.msra.mxu0 %v2018
  %2862 = vmatprep.subr.bf16.mxu0 %v2021
  %2863 = vmatpush1.bf16.msra.mxu0 %v2020
  %2864 = vmatprep.subr.bf16.mxu0 %v2023
  %2865 = vmatpush1.bf16.msra.mxu0 %v2022
  %2866 = vmatprep.subr.bf16.mxu0 %v2025
  %2867 = vmatpush1.bf16.msra.mxu0 %v2024
  %2868 = vmatprep.subr.bf16.mxu0 %v2027
  %2869 = vmatpush1.bf16.msra.mxu0 %v2026
  %2870 = vmatprep.subr.bf16.mxu0 %v2029
  %2871 = vmatpush1.bf16.msra.mxu0 %v2028
  %2872 = vmatprep.mubr.bf16.mxu0 %v639
  %2873 = vmatmul.mubr.bf16.gmra.mrb[0].mxu0 %v638
  %v2874 = vpop.f32.mrb[0].mxu0
  %v2875 = vadd.f32 %v2822, %v2874
  %v2876 = vpop.f32.mrb[0].mxu0
  %v2877 = vadd.f32 %v2824, %v2876
  %v2878 = vpop.f32.mrb[0].mxu0
  %v2879 = vadd.f32 %v2826, %v2878
  %v2880 = vpop.f32.mrb[0].mxu0
  %v2881 = vadd.f32 %v2828, %v2880
  %2882 = vmatprep.mubr.bf16.mxu0 %v664
  %2883 = vmatmul.mubr.bf16.gmra.mrb[0].mxu0 %v663
  %v2884 = vpop.f32.mrb[0].mxu0
  %v2885 = vadd.f32 %v2832, %v2884
  %v2886 = vpop.f32.mrb[0].mxu0
  %v2887 = vadd.f32 %v2834, %v2886
  %v2888 = vpop.f32.mrb[0].mxu0
  %v2889 = vadd.f32 %v2836, %v2888
  %v2890 = vpop.f32.mrb[0].mxu0
  %v2891 = vadd.f32 %v2838, %v2890
  %2892 = vdwg.mxu0
  %2893 = vmatprep.subr.bf16.mxu0 %v2031
  %2894 = vmatpush1.bf16.msra.mxu0 %v2030
  %2895 = vmatprep.subr.bf16.mxu0 %v2033
  %2896 = vmatpush1.bf16.msra.mxu0 %v2032
  %2897 = vmatprep.subr.bf16.mxu0 %v2035
  %2898 = vmatpush1.bf16.msra.mxu0 %v2034
  %2899 = vmatprep.subr.bf16.mxu0 %v2037
  %2900 = vmatpush1.bf16.msra.mxu0 %v2036
  %2901 = vmatprep.subr.bf16.mxu0 %v2039
  %2902 = vmatpush1.bf16.msra.mxu0 %v2038
  %2903 = vmatprep.subr.bf16.mxu0 %v2041
  %2904 = vmatpush1.bf16.msra.mxu0 %v2040
  %2905 = vmatprep.subr.bf16.mxu0 %v2043
  %2906 = vmatpush1.bf16.msra.mxu0 %v2042
  %2907 = vmatprep.subr.bf16.mxu0 %v2045
  %2908 = vmatpush1.bf16.msra.mxu0 %v2044
  %2909 = vmatprep.subr.bf16.mxu0 %v2047
  %2910 = vmatpush1.bf16.msra.mxu0 %v2046
  %2911 = vmatprep.subr.bf16.mxu0 %v2049
  %2912 = vmatpush1.bf16.msra.mxu0 %v2048
  %2913 = vmatprep.subr.bf16.mxu0 %v2051
  %2914 = vmatpush1.bf16.msra.mxu0 %v2050
  %2915 = vmatprep.subr.bf16.mxu0 %v2053
  %2916 = vmatpush1.bf16.msra.mxu0 %v2052
  %2917 = vmatprep.subr.bf16.mxu0 %v2055
  %2918 = vmatpush1.bf16.msra.mxu0 %v2054
  %2919 = vmatprep.subr.bf16.mxu0 %v2057
  %2920 = vmatpush1.bf16.msra.mxu0 %v2056
  %2921 = vmatprep.subr.bf16.mxu0 %v2059
  %2922 = vmatpush1.bf16.msra.mxu0 %v2058
  %2923 = vmatprep.subr.bf16.mxu0 %v2061
  %2924 = vmatpush1.bf16.msra.mxu0 %v2060
  %2925 = vmatprep.mubr.bf16.mxu0 %v641
  %2926 = vmatmul.mubr.bf16.gmra.mrb[0].mxu0 %v640
  %v2927 = vpop.f32.mrb[0].mxu0
  %v2928 = vadd.f32 %v2875, %v2927
  %v2929 = vpop.f32.mrb[0].mxu0
  %v2930 = vadd.f32 %v2877, %v2929
  %v2931 = vpop.f32.mrb[0].mxu0
  %v2932 = vadd.f32 %v2879, %v2931
  %v2933 = vpop.f32.mrb[0].mxu0
  %v2934 = vadd.f32 %v2881, %v2933
  %2935 = vmatprep.mubr.bf16.mxu0 %v666
  %2936 = vmatmul.mubr.bf16.gmra.mrb[0].mxu0 %v665
  %v2937 = vpop.f32.mrb[0].mxu0
  %v2938 = vadd.f32 %v2885, %v2937
  %v2939 = vpop.f32.mrb[0].mxu0
  %v2940 = vadd.f32 %v2887, %v2939
  %v2941 = vpop.f32.mrb[0].mxu0
  %v2942 = vadd.f32 %v2889, %v2941
  %v2943 = vpop.f32.mrb[0].mxu0
  %v2944 = vadd.f32 %v2891, %v2943
  %2945 = vdwg.mxu0
  %2946 = vmatprep.subr.bf16.mxu0 %v2063
  %2947 = vmatpush1.bf16.msra.mxu0 %v2062
  %2948 = vmatprep.subr.bf16.mxu0 %v2065
  %2949 = vmatpush1.bf16.msra.mxu0 %v2064
  %2950 = vmatprep.subr.bf16.mxu0 %v2067
  %2951 = vmatpush1.bf16.msra.mxu0 %v2066
  %2952 = vmatprep.subr.bf16.mxu0 %v2069
  %2953 = vmatpush1.bf16.msra.mxu0 %v2068
  %2954 = vmatprep.subr.bf16.mxu0 %v2071
  %2955 = vmatpush1.bf16.msra.mxu0 %v2070
  %2956 = vmatprep.subr.bf16.mxu0 %v2073
  %2957 = vmatpush1.bf16.msra.mxu0 %v2072
  %2958 = vmatprep.subr.bf16.mxu0 %v2075
  %2959 = vmatpush1.bf16.msra.mxu0 %v2074
  %2960 = vmatprep.subr.bf16.mxu0 %v2077
  %2961 = vmatpush1.bf16.msra.mxu0 %v2076
  %2962 = vmatprep.subr.bf16.mxu0 %v2079
  %2963 = vmatpush1.bf16.msra.mxu0 %v2078
  %2964 = vmatprep.subr.bf16.mxu0 %v2081
  %2965 = vmatpush1.bf16.msra.mxu0 %v2080
  %2966 = vmatprep.subr.bf16.mxu0 %v2083
  %2967 = vmatpush1.bf16.msra.mxu0 %v2082
  %2968 = vmatprep.subr.bf16.mxu0 %v2085
  %2969 = vmatpush1.bf16.msra.mxu0 %v2084
  %2970 = vmatprep.subr.bf16.mxu0 %v2087
  %2971 = vmatpush1.bf16.msra.mxu0 %v2086
  %2972 = vmatprep.subr.bf16.mxu0 %v2089
  %2973 = vmatpush1.bf16.msra.mxu0 %v2088
  %2974 = vmatprep.subr.bf16.mxu0 %v2091
  %2975 = vmatpush1.bf16.msra.mxu0 %v2090
  %2976 = vmatprep.subr.bf16.mxu0 %v2093
  %2977 = vmatpush1.bf16.msra.mxu0 %v2092
  %2978 = vmatprep.mubr.bf16.mxu0 %v643
  %2979 = vmatmul.mubr.bf16.gmra.mrb[0].mxu0 %v642
  %v2980 = vpop.f32.mrb[0].mxu0
  %v2981 = vadd.f32 %v2928, %v2980
  %v2982 = vpop.f32.mrb[0].mxu0
  %v2983 = vadd.f32 %v2930, %v2982
  %v2984 = vpop.f32.mrb[0].mxu0
  %v2985 = vadd.f32 %v2932, %v2984
  %v2986 = vpop.f32.mrb[0].mxu0
  %v2987 = vadd.f32 %v2934, %v2986
  %2988 = vmatprep.mubr.bf16.mxu0 %v668
  %2989 = vmatmul.mubr.bf16.gmra.mrb[0].mxu0 %v667
  %v2990 = vpop.f32.mrb[0].mxu0
  %v2991 = vadd.f32 %v2938, %v2990
  %v2992 = vpop.f32.mrb[0].mxu0
  %v2993 = vadd.f32 %v2940, %v2992
  %v2994 = vpop.f32.mrb[0].mxu0
  %v2995 = vadd.f32 %v2942, %v2994
  %v2996 = vpop.f32.mrb[0].mxu0
  %v2997 = vadd.f32 %v2944, %v2996
  %2998 = vdwg.mxu0
  %2999 = vmatprep.subr.bf16.mxu0 %v2095
  %3000 = vmatpush1.bf16.msra.mxu0 %v2094
  %3001 = vmatprep.subr.bf16.mxu0 %v2097
  %3002 = vmatpush1.bf16.msra.mxu0 %v2096
  %3003 = vmatprep.subr.bf16.mxu0 %v2099
  %3004 = vmatpush1.bf16.msra.mxu0 %v2098
  %3005 = vmatprep.subr.bf16.mxu0 %v2101
  %3006 = vmatpush1.bf16.msra.mxu0 %v2100
  %3007 = vmatprep.subr.bf16.mxu0 %v2103
  %3008 = vmatpush1.bf16.msra.mxu0 %v2102
  %3009 = vmatprep.subr.bf16.mxu0 %v2105
  %3010 = vmatpush1.bf16.msra.mxu0 %v2104
  %3011 = vmatprep.subr.bf16.mxu0 %v2107
  %3012 = vmatpush1.bf16.msra.mxu0 %v2106
  %3013 = vmatprep.subr.bf16.mxu0 %v2109
  %3014 = vmatpush1.bf16.msra.mxu0 %v2108
  %3015 = vmatprep.subr.bf16.mxu0 %v2111
  %3016 = vmatpush1.bf16.msra.mxu0 %v2110
  %3017 = vmatprep.subr.bf16.mxu0 %v2113
  %3018 = vmatpush1.bf16.msra.mxu0 %v2112
  %3019 = vmatprep.subr.bf16.mxu0 %v2115
  %3020 = vmatpush1.bf16.msra.mxu0 %v2114
  %3021 = vmatprep.subr.bf16.mxu0 %v2117
  %3022 = vmatpush1.bf16.msra.mxu0 %v2116
  %3023 = vmatprep.subr.bf16.mxu0 %v2119
  %3024 = vmatpush1.bf16.msra.mxu0 %v2118
  %3025 = vmatprep.subr.bf16.mxu0 %v2121
  %3026 = vmatpush1.bf16.msra.mxu0 %v2120
  %3027 = vmatprep.subr.bf16.mxu0 %v2123
  %3028 = vmatpush1.bf16.msra.mxu0 %v2122
  %3029 = vmatprep.subr.bf16.mxu0 %v2125
  %3030 = vmatpush1.bf16.msra.mxu0 %v2124
  %3031 = vmatprep.mubr.bf16.mxu0 %v645
  %3032 = vmatmul.mubr.bf16.gmra.mrb[0].mxu0 %v644
  %v3033 = vpop.f32.mrb[0].mxu0
  %v3034 = vadd.f32 %v2981, %v3033
  %v3035 = vpop.f32.mrb[0].mxu0
  %v3036 = vadd.f32 %v2983, %v3035
  %v3037 = vpop.f32.mrb[0].mxu0
  %v3038 = vadd.f32 %v2985, %v3037
  %v3039 = vpop.f32.mrb[0].mxu0
  %v3040 = vadd.f32 %v2987, %v3039
  %3041 = vmatprep.mubr.bf16.mxu0 %v670
  %3042 = vmatmul.mubr.bf16.gmra.mrb[0].mxu0 %v669
  %v3043 = vpop.f32.mrb[0].mxu0
  %v3044 = vadd.f32 %v2991, %v3043
  %v3045 = vpop.f32.mrb[0].mxu0
  %v3046 = vadd.f32 %v2993, %v3045
  %v3047 = vpop.f32.mrb[0].mxu0
  %v3048 = vadd.f32 %v2995, %v3047
  %v3049 = vpop.f32.mrb[0].mxu0
  %v3050 = vadd.f32 %v2997, %v3049
  %3051 = vdwg.mxu0
  %3052 = vmatprep.subr.bf16.mxu0 %v2127
  %3053 = vmatpush1.bf16.msra.mxu0 %v2126
  %3054 = vmatprep.subr.bf16.mxu0 %v2129
  %3055 = vmatpush1.bf16.msra.mxu0 %v2128
  %3056 = vmatprep.subr.bf16.mxu0 %v2131
  %3057 = vmatpush1.bf16.msra.mxu0 %v2130
  %3058 = vmatprep.subr.bf16.mxu0 %v2133
  %3059 = vmatpush1.bf16.msra.mxu0 %v2132
  %3060 = vmatprep.subr.bf16.mxu0 %v2135
  %3061 = vmatpush1.bf16.msra.mxu0 %v2134
  %3062 = vmatprep.subr.bf16.mxu0 %v2137
  %3063 = vmatpush1.bf16.msra.mxu0 %v2136
  %3064 = vmatprep.subr.bf16.mxu0 %v2139
  %3065 = vmatpush1.bf16.msra.mxu0 %v2138
  %3066 = vmatprep.subr.bf16.mxu0 %v2141
  %3067 = vmatpush1.bf16.msra.mxu0 %v2140
  %3068 = vmatprep.subr.bf16.mxu0 %v2143
  %3069 = vmatpush1.bf16.msra.mxu0 %v2142
  %3070 = vmatprep.subr.bf16.mxu0 %v2145
  %3071 = vmatpush1.bf16.msra.mxu0 %v2144
  %3072 = vmatprep.subr.bf16.mxu0 %v2147
  %3073 = vmatpush1.bf16.msra.mxu0 %v2146
  %3074 = vmatprep.subr.bf16.mxu0 %v2149
  %3075 = vmatpush1.bf16.msra.mxu0 %v2148
  %3076 = vmatprep.subr.bf16.mxu0 %v2151
  %3077 = vmatpush1.bf16.msra.mxu0 %v2150
  %3078 = vmatprep.subr.bf16.mxu0 %v2153
  %3079 = vmatpush1.bf16.msra.mxu0 %v2152
  %3080 = vmatprep.subr.bf16.mxu0 %v2155
  %3081 = vmatpush1.bf16.msra.mxu0 %v2154
  %3082 = vmatprep.subr.bf16.mxu0 %v2157
  %3083 = vmatpush1.bf16.msra.mxu0 %v2156
  %3084 = vmatprep.mubr.bf16.mxu0 %v647
  %3085 = vmatmul.mubr.bf16.gmra.mrb[0].mxu0 %v646
  %v3086 = vpop.f32.mrb[0].mxu0
  %v3087 = vadd.f32 %v3034, %v3086
  %v3088 = vpop.f32.mrb[0].mxu0
  %v3089 = vadd.f32 %v3036, %v3088
  %v3090 = vpop.f32.mrb[0].mxu0
  %v3091 = vadd.f32 %v3038, %v3090
  %v3092 = vpop.f32.mrb[0].mxu0
  %v3093 = vadd.f32 %v3040, %v3092
  %3094 = vmatprep.mubr.bf16.mxu0 %v672
  %3095 = vmatmul.mubr.bf16.gmra.mrb[0].mxu0 %v671
  %v3096 = vpop.f32.mrb[0].mxu0
  %v3097 = vadd.f32 %v3044, %v3096
  %v3098 = vpop.f32.mrb[0].mxu0
  %v3099 = vadd.f32 %v3046, %v3098
  %v3100 = vpop.f32.mrb[0].mxu0
  %v3101 = vadd.f32 %v3048, %v3100
  %v3102 = vpop.f32.mrb[0].mxu0
  %v3103 = vadd.f32 %v3050, %v3102
  %3104 = vdwg.mxu0
  %3105 = vmatprep.subr.bf16.mxu0 %v2159
  %3106 = vmatpush1.bf16.msra.mxu0 %v2158
  %3107 = vmatprep.subr.bf16.mxu0 %v2161
  %3108 = vmatpush1.bf16.msra.mxu0 %v2160
  %3109 = vmatprep.subr.bf16.mxu0 %v2163
  %3110 = vmatpush1.bf16.msra.mxu0 %v2162
  %3111 = vmatprep.subr.bf16.mxu0 %v2165
  %3112 = vmatpush1.bf16.msra.mxu0 %v2164
  %3113 = vmatprep.subr.bf16.mxu0 %v2167
  %3114 = vmatpush1.bf16.msra.mxu0 %v2166
  %3115 = vmatprep.subr.bf16.mxu0 %v2169
  %3116 = vmatpush1.bf16.msra.mxu0 %v2168
  %3117 = vmatprep.subr.bf16.mxu0 %v2171
  %3118 = vmatpush1.bf16.msra.mxu0 %v2170
  %3119 = vmatprep.subr.bf16.mxu0 %v2173
  %3120 = vmatpush1.bf16.msra.mxu0 %v2172
  %3121 = vmatprep.subr.bf16.mxu0 %v2175
  %3122 = vmatpush1.bf16.msra.mxu0 %v2174
  %3123 = vmatprep.subr.bf16.mxu0 %v2177
  %3124 = vmatpush1.bf16.msra.mxu0 %v2176
  %3125 = vmatprep.subr.bf16.mxu0 %v2179
  %3126 = vmatpush1.bf16.msra.mxu0 %v2178
  %3127 = vmatprep.subr.bf16.mxu0 %v2181
  %3128 = vmatpush1.bf16.msra.mxu0 %v2180
  %3129 = vmatprep.subr.bf16.mxu0 %v2183
  %3130 = vmatpush1.bf16.msra.mxu0 %v2182
  %3131 = vmatprep.subr.bf16.mxu0 %v2185
  %3132 = vmatpush1.bf16.msra.mxu0 %v2184
  %3133 = vmatprep.subr.bf16.mxu0 %v2187
  %3134 = vmatpush1.bf16.msra.mxu0 %v2186
  %3135 = vmatprep.subr.bf16.mxu0 %v2189
  %3136 = vmatpush1.bf16.msra.mxu0 %v2188
  %3137 = vmatprep.mubr.bf16.mxu0 %v649
  %3138 = vmatmul.mubr.bf16.gmra.mrb[0].mxu0 %v648
  %v3139 = vpop.f32.mrb[0].mxu0
  %v3140 = vadd.f32 %v3087, %v3139
  %v3141 = vpop.f32.mrb[0].mxu0
  %v3142 = vadd.f32 %v3089, %v3141
  %v3143 = vpop.f32.mrb[0].mxu0
  %v3144 = vadd.f32 %v3091, %v3143
  %v3145 = vpop.f32.mrb[0].mxu0
  %v3146 = vadd.f32 %v3093, %v3145
  %3147 = vmatprep.mubr.bf16.mxu0 %v674
  %3148 = vmatmul.mubr.bf16.gmra.mrb[0].mxu0 %v673
  %v3149 = vpop.f32.mrb[0].mxu0
  %v3150 = vadd.f32 %v3097, %v3149
  %v3151 = vpop.f32.mrb[0].mxu0
  %v3152 = vadd.f32 %v3099, %v3151
  %v3153 = vpop.f32.mrb[0].mxu0
  %v3154 = vadd.f32 %v3101, %v3153
  %v3155 = vpop.f32.mrb[0].mxu0
  %v3156 = vadd.f32 %v3103, %v3155
  %3157 = vdwg.mxu0
  %3158 = vmatprep.subr.bf16.mxu0 %v2191
  %3159 = vmatpush1.bf16.msra.mxu0 %v2190
  %3160 = vmatprep.subr.bf16.mxu0 %v2193
  %3161 = vmatpush1.bf16.msra.mxu0 %v2192
  %3162 = vmatprep.subr.bf16.mxu0 %v2195
  %3163 = vmatpush1.bf16.msra.mxu0 %v2194
  %3164 = vmatprep.subr.bf16.mxu0 %v2197
  %3165 = vmatpush1.bf16.msra.mxu0 %v2196
  %3166 = vmatprep.subr.bf16.mxu0 %v2199
  %3167 = vmatpush1.bf16.msra.mxu0 %v2198
  %3168 = vmatprep.subr.bf16.mxu0 %v2201
  %3169 = vmatpush1.bf16.msra.mxu0 %v2200
  %3170 = vmatprep.subr.bf16.mxu0 %v2203
  %3171 = vmatpush1.bf16.msra.mxu0 %v2202
  %3172 = vmatprep.subr.bf16.mxu0 %v2205
  %3173 = vmatpush1.bf16.msra.mxu0 %v2204
  %3174 = vmatprep.subr.bf16.mxu0 %v2207
  %3175 = vmatpush1.bf16.msra.mxu0 %v2206
  %3176 = vmatprep.subr.bf16.mxu0 %v2209
  %3177 = vmatpush1.bf16.msra.mxu0 %v2208
  %3178 = vmatprep.subr.bf16.mxu0 %v2211
  %3179 = vmatpush1.bf16.msra.mxu0 %v2210
  %3180 = vmatprep.subr.bf16.mxu0 %v2213
  %3181 = vmatpush1.bf16.msra.mxu0 %v2212
  %3182 = vmatprep.subr.bf16.mxu0 %v2215
  %3183 = vmatpush1.bf16.msra.mxu0 %v2214
  %3184 = vmatprep.subr.bf16.mxu0 %v2217
  %3185 = vmatpush1.bf16.msra.mxu0 %v2216
  %3186 = vmatprep.subr.bf16.mxu0 %v2219
  %3187 = vmatpush1.bf16.msra.mxu0 %v2218
  %3188 = vmatprep.subr.bf16.mxu0 %v2221
  %3189 = vmatpush1.bf16.msra.mxu0 %v2220
  %3190 = vmatprep.mubr.bf16.mxu0 %v651
  %3191 = vmatmul.mubr.bf16.gmra.mrb[0].mxu0 %v650
  %v3192 = vpop.f32.mrb[0].mxu0
  %v3193 = vadd.f32 %v3140, %v3192
  %v3194 = vpop.f32.mrb[0].mxu0
  %v3195 = vadd.f32 %v3142, %v3194
  %v3196 = vpop.f32.mrb[0].mxu0
  %v3197 = vadd.f32 %v3144, %v3196
  %v3198 = vpop.f32.mrb[0].mxu0
  %v3199 = vadd.f32 %v3146, %v3198
  %3200 = vmatprep.mubr.bf16.mxu0 %v676
  %3201 = vmatmul.mubr.bf16.gmra.mrb[0].mxu0 %v675
  %v3202 = vpop.f32.mrb[0].mxu0
  %v3203 = vadd.f32 %v3150, %v3202
  %v3204 = vpop.f32.mrb[0].mxu0
  %v3205 = vadd.f32 %v3152, %v3204
  %v3206 = vpop.f32.mrb[0].mxu0
  %v3207 = vadd.f32 %v3154, %v3206
  %v3208 = vpop.f32.mrb[0].mxu0
  %v3209 = vadd.f32 %v3156, %v3208
  %3210 = vdwg.mxu0
  %3211 = vmatprep.subr.bf16.mxu0 %v2223
  %3212 = vmatpush1.bf16.msra.mxu0 %v2222
  %3213 = vmatprep.subr.bf16.mxu0 %v2225
  %3214 = vmatpush1.bf16.msra.mxu0 %v2224
  %3215 = vmatprep.subr.bf16.mxu0 %v2227
  %3216 = vmatpush1.bf16.msra.mxu0 %v2226
  %3217 = vmatprep.subr.bf16.mxu0 %v2229
  %3218 = vmatpush1.bf16.msra.mxu0 %v2228
  %3219 = vmatprep.subr.bf16.mxu0 %v2231
  %3220 = vmatpush1.bf16.msra.mxu0 %v2230
  %3221 = vmatprep.subr.bf16.mxu0 %v2233
  %3222 = vmatpush1.bf16.msra.mxu0 %v2232
  %3223 = vmatprep.subr.bf16.mxu0 %v2235
  %3224 = vmatpush1.bf16.msra.mxu0 %v2234
  %3225 = vmatprep.subr.bf16.mxu0 %v2237
  %3226 = vmatpush1.bf16.msra.mxu0 %v2236
  %3227 = vmatprep.subr.bf16.mxu0 %v2239
  %3228 = vmatpush1.bf16.msra.mxu0 %v2238
  %3229 = vmatprep.subr.bf16.mxu0 %v2241
  %3230 = vmatpush1.bf16.msra.mxu0 %v2240
  %3231 = vmatprep.subr.bf16.mxu0 %v2243
  %3232 = vmatpush1.bf16.msra.mxu0 %v2242
  %3233 = vmatprep.subr.bf16.mxu0 %v2245
  %3234 = vmatpush1.bf16.msra.mxu0 %v2244
  %3235 = vmatprep.subr.bf16.mxu0 %v2247
  %3236 = vmatpush1.bf16.msra.mxu0 %v2246
  %3237 = vmatprep.subr.bf16.mxu0 %v2249
  %3238 = vmatpush1.bf16.msra.mxu0 %v2248
  %3239 = vmatprep.subr.bf16.mxu0 %v2251
  %3240 = vmatpush1.bf16.msra.mxu0 %v2250
  %3241 = vmatprep.subr.bf16.mxu0 %v2253
  %3242 = vmatpush1.bf16.msra.mxu0 %v2252
  %3243 = vmatprep.mubr.bf16.mxu0 %v653
  %3244 = vmatmul.mubr.bf16.gmra.mrb[0].mxu0 %v652
  %v3245 = vpop.f32.mrb[0].mxu0
  %v3246 = vadd.f32 %v3193, %v3245
  %v3247 = vpop.f32.mrb[0].mxu0
  %v3248 = vadd.f32 %v3195, %v3247
  %v3249 = vpop.f32.mrb[0].mxu0
  %v3250 = vadd.f32 %v3197, %v3249
  %v3251 = vpop.f32.mrb[0].mxu0
  %v3252 = vadd.f32 %v3199, %v3251
  %3253 = vmatprep.mubr.bf16.mxu0 %v678
  %3254 = vmatmul.mubr.bf16.gmra.mrb[0].mxu0 %v677
  %v3255 = vpop.f32.mrb[0].mxu0
  %v3256 = vadd.f32 %v3203, %v3255
  %v3257 = vpop.f32.mrb[0].mxu0
  %v3258 = vadd.f32 %v3205, %v3257
  %v3259 = vpop.f32.mrb[0].mxu0
  %v3260 = vadd.f32 %v3207, %v3259
  %v3261 = vpop.f32.mrb[0].mxu0
  %v3262 = vadd.f32 %v3209, %v3261
  %3263 = vdwg.mxu0
  %3264 = vmatprep.subr.bf16.mxu0 %v2255
  %3265 = vmatpush1.bf16.msra.mxu0 %v2254
  %3266 = vmatprep.subr.bf16.mxu0 %v2257
  %3267 = vmatpush1.bf16.msra.mxu0 %v2256
  %3268 = vmatprep.subr.bf16.mxu0 %v2259
  %3269 = vmatpush1.bf16.msra.mxu0 %v2258
  %3270 = vmatprep.subr.bf16.mxu0 %v2261
  %3271 = vmatpush1.bf16.msra.mxu0 %v2260
  %3272 = vmatprep.subr.bf16.mxu0 %v2263
  %3273 = vmatpush1.bf16.msra.mxu0 %v2262
  %3274 = vmatprep.subr.bf16.mxu0 %v2265
  %3275 = vmatpush1.bf16.msra.mxu0 %v2264
  %3276 = vmatprep.subr.bf16.mxu0 %v2267
  %3277 = vmatpush1.bf16.msra.mxu0 %v2266
  %3278 = vmatprep.subr.bf16.mxu0 %v2269
  %3279 = vmatpush1.bf16.msra.mxu0 %v2268
  %3280 = vmatprep.subr.bf16.mxu0 %v2271
  %3281 = vmatpush1.bf16.msra.mxu0 %v2270
  %3282 = vmatprep.subr.bf16.mxu0 %v2273
  %3283 = vmatpush1.bf16.msra.mxu0 %v2272
  %3284 = vmatprep.subr.bf16.mxu0 %v2275
  %3285 = vmatpush1.bf16.msra.mxu0 %v2274
  %3286 = vmatprep.subr.bf16.mxu0 %v2277
  %3287 = vmatpush1.bf16.msra.mxu0 %v2276
  %3288 = vmatprep.subr.bf16.mxu0 %v2279
  %3289 = vmatpush1.bf16.msra.mxu0 %v2278
  %3290 = vmatprep.subr.bf16.mxu0 %v2281
  %3291 = vmatpush1.bf16.msra.mxu0 %v2280
  %3292 = vmatprep.subr.bf16.mxu0 %v2283
  %3293 = vmatpush1.bf16.msra.mxu0 %v2282
  %3294 = vmatprep.subr.bf16.mxu0 %v2285
  %3295 = vmatpush1.bf16.msra.mxu0 %v2284
  %3296 = vmatprep.mubr.bf16.mxu0 %v655
  %3297 = vmatmul.mubr.bf16.gmra.mrb[0].mxu0 %v654
  %v3298 = vpop.f32.mrb[0].mxu0
  %v3299 = vadd.f32 %v3246, %v3298
  %v3300 = vpop.f32.mrb[0].mxu0
  %v3301 = vadd.f32 %v3248, %v3300
  %v3302 = vpop.f32.mrb[0].mxu0
  %v3303 = vadd.f32 %v3250, %v3302
  %v3304 = vpop.f32.mrb[0].mxu0
  %v3305 = vadd.f32 %v3252, %v3304
  %3306 = vmatprep.mubr.bf16.mxu0 %v680
  %3307 = vmatmul.mubr.bf16.gmra.mrb[0].mxu0 %v679
  %v3308 = vpop.f32.mrb[0].mxu0
  %v3309 = vadd.f32 %v3256, %v3308
  %v3310 = vpop.f32.mrb[0].mxu0
  %v3311 = vadd.f32 %v3258, %v3310
  %v3312 = vpop.f32.mrb[0].mxu0
  %v3313 = vadd.f32 %v3260, %v3312
  %v3314 = vpop.f32.mrb[0].mxu0
  %v3315 = vadd.f32 %v3262, %v3314
  %3316 = vdwg.mxu0
  %3317 = vmatprep.subr.bf16.mxu0 %v2287
  %3318 = vmatpush1.bf16.msra.mxu0 %v2286
  %3319 = vmatprep.subr.bf16.mxu0 %v2289
  %3320 = vmatpush1.bf16.msra.mxu0 %v2288
  %3321 = vmatprep.subr.bf16.mxu0 %v2291
  %3322 = vmatpush1.bf16.msra.mxu0 %v2290
  %3323 = vmatprep.subr.bf16.mxu0 %v2293
  %3324 = vmatpush1.bf16.msra.mxu0 %v2292
  %3325 = vmatprep.subr.bf16.mxu0 %v2295
  %3326 = vmatpush1.bf16.msra.mxu0 %v2294
  %3327 = vmatprep.subr.bf16.mxu0 %v2297
  %3328 = vmatpush1.bf16.msra.mxu0 %v2296
  %3329 = vmatprep.subr.bf16.mxu0 %v2299
  %3330 = vmatpush1.bf16.msra.mxu0 %v2298
  %3331 = vmatprep.subr.bf16.mxu0 %v2301
  %3332 = vmatpush1.bf16.msra.mxu0 %v2300
  %3333 = vmatprep.subr.bf16.mxu0 %v2303
  %3334 = vmatpush1.bf16.msra.mxu0 %v2302
  %3335 = vmatprep.subr.bf16.mxu0 %v2305
  %3336 = vmatpush1.bf16.msra.mxu0 %v2304
  %3337 = vmatprep.subr.bf16.mxu0 %v2307
  %3338 = vmatpush1.bf16.msra.mxu0 %v2306
  %3339 = vmatprep.subr.bf16.mxu0 %v2309
  %3340 = vmatpush1.bf16.msra.mxu0 %v2308
  %3341 = vmatprep.subr.bf16.mxu0 %v2311
  %3342 = vmatpush1.bf16.msra.mxu0 %v2310
  %3343 = vmatprep.subr.bf16.mxu0 %v2313
  %3344 = vmatpush1.bf16.msra.mxu0 %v2312
  %3345 = vmatprep.subr.bf16.mxu0 %v2315
  %3346 = vmatpush1.bf16.msra.mxu0 %v2314
  %3347 = vmatprep.subr.bf16.mxu0 %v2317
  %3348 = vmatpush1.bf16.msra.mxu0 %v2316
  %3349 = vmatprep.mubr.bf16.mxu0 %v657
  %3350 = vmatmul.mubr.bf16.gmra.mrb[0].mxu0 %v656
  %v3351 = vpop.f32.mrb[0].mxu0
  %v3352 = vadd.f32 %v3299, %v3351
  %v3353 = vpop.f32.mrb[0].mxu0
  %v3354 = vadd.f32 %v3301, %v3353
  %v3355 = vpop.f32.mrb[0].mxu0
  %v3356 = vadd.f32 %v3303, %v3355
  %v3357 = vpop.f32.mrb[0].mxu0
  %v3358 = vadd.f32 %v3305, %v3357
  %3359 = vmatprep.mubr.bf16.mxu0 %v682
  %3360 = vmatmul.mubr.bf16.gmra.mrb[0].mxu0 %v681
  %v3361 = vpop.f32.mrb[0].mxu0
  %v3362 = vadd.f32 %v3309, %v3361
  %v3363 = vpop.f32.mrb[0].mxu0
  %v3364 = vadd.f32 %v3311, %v3363
  %v3365 = vpop.f32.mrb[0].mxu0
  %v3366 = vadd.f32 %v3313, %v3365
  %v3367 = vpop.f32.mrb[0].mxu0
  %v3368 = vadd.f32 %v3315, %v3367
  %3369 = vdwg.mxu0
  %3370 = vmatprep.subr.bf16.mxu0 %v2319
  %3371 = vmatpush1.bf16.msra.mxu0 %v2318
  %3372 = vmatprep.subr.bf16.mxu0 %v2321
  %3373 = vmatpush1.bf16.msra.mxu0 %v2320
  %3374 = vmatprep.subr.bf16.mxu0 %v2323
  %3375 = vmatpush1.bf16.msra.mxu0 %v2322
  %3376 = vmatprep.subr.bf16.mxu0 %v2325
  %3377 = vmatpush1.bf16.msra.mxu0 %v2324
  %3378 = vmatprep.subr.bf16.mxu0 %v2327
  %3379 = vmatpush1.bf16.msra.mxu0 %v2326
  %3380 = vmatprep.subr.bf16.mxu0 %v2329
  %3381 = vmatpush1.bf16.msra.mxu0 %v2328
  %3382 = vmatprep.subr.bf16.mxu0 %v2331
  %3383 = vmatpush1.bf16.msra.mxu0 %v2330
  %3384 = vmatprep.subr.bf16.mxu0 %v2333
  %3385 = vmatpush1.bf16.msra.mxu0 %v2332
  %3386 = vmatprep.subr.bf16.mxu0 0
  %3387 = vmatpush1.bf16.msra.mxu0 0
  %3388 = vmatprep.subr.bf16.mxu0 0
  %3389 = vmatpush1.bf16.msra.mxu0 0
  %3390 = vmatprep.subr.bf16.mxu0 0
  %3391 = vmatpush1.bf16.msra.mxu0 0
  %3392 = vmatprep.subr.bf16.mxu0 0
  %3393 = vmatpush1.bf16.msra.mxu0 0
  %3394 = vmatprep.subr.bf16.mxu0 0
  %3395 = vmatpush1.bf16.msra.mxu0 0
  %3396 = vmatprep.subr.bf16.mxu0 0
  %3397 = vmatpush1.bf16.msra.mxu0 0
  %3398 = vmatprep.subr.bf16.mxu0 0
  %3399 = vmatpush1.bf16.msra.mxu0 0
  %3400 = vmatprep.subr.bf16.mxu0 0
  %3401 = vmatpush1.bf16.msra.mxu0 0
  %3402 = vmatprep.mubr.bf16.mxu0 0
  %3403 = vmatmul.mubr.bf16.gmra.mrb[0].mxu0 %v658
  %v3404 = vpop.f32.mrb[0].mxu0
  %v3405 = vadd.f32 %v3352, %v3404
  %v3406 = vpop.f32.mrb[0].mxu0
  %v3407 = vadd.f32 %v3354, %v3406
  %v3408 = vpop.f32.mrb[0].mxu0
  %v3409 = vadd.f32 %v3356, %v3408
  %v3410 = vpop.f32.mrb[0].mxu0
  %v3411 = vadd.f32 %v3358, %v3410
  %3412 = vmatprep.mubr.bf16.mxu0 0
  %3413 = vmatmul.mubr.bf16.gmra.mrb[0].mxu0 %v683
  %v3414 = vpop.f32.mrb[0].mxu0
  %v3415 = vadd.f32 %v3362, %v3414
  %v3416 = vpop.f32.mrb[0].mxu0
  %v3417 = vadd.f32 %v3364, %v3416
  %v3418 = vpop.f32.mrb[0].mxu0
  %v3419 = vadd.f32 %v3366, %v3418
  %v3420 = vpop.f32.mrb[0].mxu0
  %v3421 = vadd.f32 %v3368, %v3420
  %3422 = vdwg.mxu0
  %3423 = vst [vmem:[%s3] sm:$0xff] %v3405
  %3424 = vst [vmem:[%s3 + $0x8] sm:$0xff] %v3407
  %3425 = vst [vmem:[%s3 + $0x10] sm:$0xff] %v3409
  %3426 = vst [vmem:[%s3 + $0x18] sm:$0xff] %v3411
  %3427 = vst [vmem:[%s3 + $0x20] sm:$0xff] %v3415
  %3428 = vst [vmem:[%s3 + $0x28] sm:$0xff] %v3417
  %3429 = vst [vmem:[%s3 + $0x30] sm:$0xff] %v3419
  %3430 = vst [vmem:[%s3 + $0x38] sm:$0xff] %v3421
  %p3431 = scmp.eq.s32.totalorder 0, 0
  // Predicated region
  $region14: #{d_forward.8} parent=0 // pred_check
    %p3432 = pneg %p3431
  $region15: #{d_forward.8} parent=0 // pred_check_branch
    %3434 = sbr.rel (%p3432) target = $region17
  $region16: #{d_forward.8} parent=0 // pred_region
    %v3435 = vlaneseq
    %vm3436 = vcmp.ge.s32.totalorder %v3435, 0
    %vm3437 = vcmp.lt.s32.totalorder %v3435, 256
    %vm3438 = vmand %vm3436, %vm3437
    %3439 = vst.msk [vmem:[%s4] sm:$0x3] %vm3438, 0.0
    %3440 = vst.msk [vmem:[%s5] sm:$0x3] %vm3438, 0.0
  $region17: #{d_forward.8} parent=0 // pred_fallthru
    _
  %v3441 = vld [vmem:[%s4] sm:$0x3]
  %v3442 = vadd.f32 %v3405, %v3409
  %v3443 = vadd.f32 %v3442, %v3415
  %v3444 = vadd.f32 %v3443, %v3419
  %v3445 = vrot.slane %v3444, 4
  %v3446 = vadd.f32 %v3444, %v3445
  %v3447 = vrot.slane %v3446, 2
  %v3448 = vadd.f32 %v3446, %v3447
  %v3449 = vrot.slane %v3448, 1
  %v3450 = vadd.f32 %v3448, %v3449
  %v3451 = vadd.f32 %v3407, %v3411
  %v3452 = vadd.f32 %v3451, %v3417
  %v3453 = vadd.f32 %v3452, %v3421
  %v3454 = vrot.slane %v3453, 4
  %v3455 = vadd.f32 %v3453, %v3454
  %v3456 = vrot.slane %v3455, 2
  %v3457 = vadd.f32 %v3455, %v3456
  %v3458 = vrot.slane %v3457, 1
  %v3459 = vadd.f32 %v3457, %v3458
  %v3462 = vcombine.low %v3450, %v3459
  %v3464 = vunpack.c.l.s4 1966171168
  %v3465 = vunpack.c.0.s8 %v3464
  %v3466 = vlaneseq
  %v3467 = vshrl.u32 %v3466, 7
  %v3468 = vsub.s32 %v3465, %v3467
  %v3469 = vrot.slane %v3462, %v3468
  %v3471 = vunpack.c.l.s4 1966171168
  %v3472 = vunpack.c.0.s8 %v3471
  %v3473 = vlaneseq
  %v3474 = vshrl.u32 %v3473, 7
  %v3475 = vsub.s32 %v3472, %v3474
  %v3476 = vrot.slane %v3469, %v3475
  %v3478 = vadd.f32 %v3441, %v3476
  %v3479 = vlaneseq
  %vm3480 = vcmp.ge.s32.totalorder %v3479, 0
  %vm3481 = vcmp.lt.s32.totalorder %v3479, 256
  %vm3482 = vmand %vm3480, %vm3481
  %3483 = vst.msk [vmem:[%s4] sm:$0x3] %vm3482, %v3478
  %v3484 = vld [vmem:[%s5] sm:$0x3]
  %v3485 = vmul.f32 %v3405, %v3405
  %v3486 = vmul.f32 %v3407, %v3407
  %v3487 = vmul.f32 %v3409, %v3409
  %v3488 = vmul.f32 %v3411, %v3411
  %v3489 = vmul.f32 %v3415, %v3415
  %v3490 = vmul.f32 %v3417, %v3417
  %v3491 = vmul.f32 %v3419, %v3419
  %v3492 = vmul.f32 %v3421, %v3421
  %v3493 = vadd.f32 %v3485, %v3487
  %v3494 = vadd.f32 %v3493, %v3489
  %v3495 = vadd.f32 %v3494, %v3491
  %v3496 = vrot.slane %v3495, 4
  %v3497 = vadd.f32 %v3495, %v3496
  %v3498 = vrot.slane %v3497, 2
  %v3499 = vadd.f32 %v3497, %v3498
  %v3500 = vrot.slane %v3499, 1
  %v3501 = vadd.f32 %v3499, %v3500
  %v3502 = vadd.f32 %v3486, %v3488
  %v3503 = vadd.f32 %v3502, %v3490
  %v3504 = vadd.f32 %v3503, %v3492
  %v3505 = vrot.slane %v3504, 4
  %v3506 = vadd.f32 %v3504, %v3505
  %v3507 = vrot.slane %v3506, 2
  %v3508 = vadd.f32 %v3506, %v3507
  %v3509 = vrot.slane %v3508, 1
  %v3510 = vadd.f32 %v3508, %v3509
  %v3513 = vcombine.low %v3501, %v3510
  %v3515 = vunpack.c.l.s4 1966171168
  %v3516 = vunpack.c.0.s8 %v3515
  %v3517 = vlaneseq
  %v3518 = vshrl.u32 %v3517, 7
  %v3519 = vsub.s32 %v3516, %v3518
  %v3520 = vrot.slane %v3513, %v3519
  %v3522 = vunpack.c.l.s4 1966171168
  %v3523 = vunpack.c.0.s8 %v3522
  %v3524 = vlaneseq
  %v3525 = vshrl.u32 %v3524, 7
  %v3526 = vsub.s32 %v3523, %v3525
  %v3527 = vrot.slane %v3520, %v3526
  %v3529 = vadd.f32 %v3484, %v3527
  %3530 = vst.msk [vmem:[%s5] sm:$0x3] %vm3482, %v3529
  // Predicated region
  $region18: #{d_forward.8} parent=0 // pred_check
    _
  $region19: #{d_forward.8} parent=0 // pred_check_branch
    %3532 = sbr.rel (0) target = $region21
  $region20: #{d_forward.8} parent=0 // pred_region
    _
  $region21: #{d_forward.8} parent=0 // pred_fallthru
    _
  // Predicated region
  $region22: #{d_forward.8} parent=0 // pred_check
    _
  $region23: #{d_forward.8} parent=0 // pred_check_branch
    %3534 = sbr.rel (0) target = $region25
  $region24: #{d_forward.8} parent=0 // pred_region
    _
  $region25: #{d_forward.8} parent=0 // pred_fallthru
    _
  // Predicated region
  $region26: #{d_forward.8} parent=0 // pred_check
    _
  $region27: #{d_forward.8} parent=0 // pred_check_branch
    %3536 = sbr.rel (0) target = $region29
  $region28: #{d_forward.8} parent=0 // pred_region
    _
  $region29: #{d_forward.8} parent=0 // pred_fallthru
    _
  // Predicated region
  $region30: #{d_forward.8} parent=0 // pred_check
    _
  $region31: #{d_forward.8} parent=0 // pred_check_branch
    %3538 = sbr.rel (0) target = $region33
  $region32: #{d_forward.8} parent=0 // pred_region
    _
  $region33: #{d_forward.8} parent=0 // pred_fallthru
    _
  // Predicated region
  $region34: #{d_forward.8} parent=0 // pred_check
    _
  $region35: #{d_forward.8} parent=0 // pred_check_branch
    %3540 = sbr.rel (0) target = $region37
  $region36: #{d_forward.8} parent=0 // pred_region
    _
  $region37: #{d_forward.8} parent=0 // pred_fallthru
    _
  // Predicated region
  $region38: #{d_forward.8} parent=0 // pred_check
    _
  $region39: #{d_forward.8} parent=0 // pred_check_branch
    %3542 = sbr.rel (0) target = $region41
  $region40: #{d_forward.8} parent=0 // pred_region
    _
  $region41: #{d_forward.8} parent=0 // pred_fallthru
    _

</llo_original>
